<compile_context>
chip_gen: v7x
topology: tpu7x:2x2x1
jax: 0.10.0
libtpu: 0.0.40
codegen_flags: <defaults>
</compile_context>

<pallas_src>
import jax
import jax.numpy as jnp
from jax import lax
from jax.experimental import pallas as pl
from jax.experimental.pallas import tpu as pltpu

EMB = 128
NHEADS = 8
HEAD_DIM = EMB // NHEADS
LN_EPS = 1e-5
BN_EPS = 1e-5

TILE_LQ = 256          # patients (query rows) per grid step; >=256 fills v6e/v7x MXU

# Column offsets inside the (128, 512) weight slab: [w2 | wq | wo | wf].
_W2, _WQ, _WO, _WF = (i * EMB for i in range(4))
# Row offsets inside the (16, 128) parameter slab.
_W1_LO, _W1_HI = 0, 5                      # (5,128) Linear(5,64) weight, 0-padded
_B1, _B2, _BQ, _BO, _LN1G, _LN1B, _BF, _LN2G, _LN2B = range(5, 14)


def _layernorm(x, gamma, beta):
    mu = jnp.mean(x, axis=-1, keepdims=True)
    xc = x - mu
    var = jnp.mean(xc * xc, axis=-1, keepdims=True)
    return xc * lax.rsqrt(var + LN_EPS) * gamma + beta


def patient_kernel(ps_ref, kbd_ref, vbd_ref, seg_ref, w_ref, p_ref, out_ref):
    # ---- hoist all (1,128) row parameters once (avoid repeated vlds) -------
    b1 = p_ref[_B1:_B1 + 1, :]
    b2 = p_ref[_B2:_B2 + 1, :]
    bq = p_ref[_BQ:_BQ + 1, :]
    bo = p_ref[_BO:_BO + 1, :]
    ln1g = p_ref[_LN1G:_LN1G + 1, :]
    ln1b = p_ref[_LN1B:_LN1B + 1, :]
    bf = p_ref[_BF:_BF + 1, :]
    ln2g = p_ref[_LN2G:_LN2G + 1, :]
    ln2b = p_ref[_LN2B:_LN2B + 1, :]

    ps = ps_ref[...]                                             # (T, 5)

    # ---- linear_embedding (eval BN + bias folded, 0-padded to 128 lanes) ---
    w1 = p_ref[_W1_LO:_W1_HI, :]                                 # (5, 128)
    h = jnp.dot(ps, w1, preferred_element_type=jnp.float32) + b1
    h = jnp.maximum(h, 0.0)                                      # padded lanes stay 0
    emb = jnp.dot(h, w_ref[:, _W2:_W2 + EMB],
                  preferred_element_type=jnp.float32) + b2
    emb = jnp.maximum(emb, 0.0)                                  # (T, 128)

    # ---- packed multi-head cross attention ---------------------------------
    # q has the 1/sqrt(head_dim) scale pre-folded into wq/bq.
    q = jnp.dot(emb, w_ref[:, _WQ:_WQ + EMB],
                preferred_element_type=jnp.float32) + bq         # (T, 128)

    # Block-diagonal K_bd gives all per-head score blocks in one lane-dense
    # (T, NHEADS*Lkv) tile: columns [h*Lkv, (h+1)*Lkv) hold q_h @ k_h^T.
    s = jnp.dot(q, kbd_ref[...], preferred_element_type=jnp.float32)
    # One shared per-row max (softmax is invariant to a per-row constant).
    s = s - jnp.max(s, axis=-1, keepdims=True)
    e = jnp.exp(s)                                               # one full-tile EUP pass
    # Per-head denominators broadcast back over each head's Lkv columns via
    # one matmul against the 0/1 segment-sum matrix.
    den = jnp.dot(e, seg_ref[...], preferred_element_type=jnp.float32)
    prob = e * pl.reciprocal(den, approx=True)                   # EUP slot, ~free
    # Block-diagonal V_bd yields the 8 head outputs already concatenated
    # along lanes -> single output projection matmul.
    heads = jnp.dot(prob, vbd_ref[...], preferred_element_type=jnp.float32)
    attn = jnp.dot(heads, w_ref[:, _WO:_WO + EMB],
                   preferred_element_type=jnp.float32) + bo

    # ---- dropout1 (identity) + residual + layer_norm1 ----------------------
    r1 = _layernorm(emb + attn, ln1g, ln1b)

    # ---- fc1 -> ReLU -> dropout2 (identity) -> layer_norm2 -> + residual ---
    f = jnp.dot(r1, w_ref[:, _WF:_WF + EMB],
                preferred_element_type=jnp.float32) + bf
    f = jnp.maximum(f, 0.0)
    out_ref[...] = _layernorm(f, ln2g, ln2b) + r1


def patient_processing_forward(patient_stats, z_image, packed, *, tile=TILE_LQ):
    """patient_stats: (N,5) f32, z_image: (Lkv,128) f32 -> (N,128) f32."""
    n, feat = patient_stats.shape
    lkv = z_image.shape[0]
    s_dim = NHEADS * lkv

    # ---- review-sanctioned wrapper prebuild of the attention constants -----
    # k/v projections of z_image are shared by every patient row, so they are
    # computed once here and laid out block-diagonally for the kernel.
    k = z_image @ packed["wk"] + packed["bk"]                    # (Lkv, 128)
    v = z_image @ packed["wv"] + packed["bv"]                    # (Lkv, 128)
    k_blocks = jnp.transpose(k.reshape(lkv, NHEADS, HEAD_DIM), (1, 2, 0))  # (H,hd,Lkv)
    v_blocks = jnp.transpose(v.reshape(lkv, NHEADS, HEAD_DIM), (1, 0, 2))  # (H,Lkv,hd)
    kbd = jax.scipy.linalg.block_diag(*k_blocks)                 # (EMB, S)
    vbd = jax.scipy.linalg.block_diag(*v_blocks)                 # (S, EMB)
    seg = jax.scipy.linalg.block_diag(
        *([jnp.ones((lkv, lkv), jnp.float32)] * NHEADS))         # (S, S)

    # ---- pad patients to a multiple of the tile and launch the grid --------
    n_pad = -(-n // tile) * tile
    ps_p = jnp.zeros((n_pad, feat), jnp.float32).at[:n, :].set(patient_stats)

    ps_spec = pl.BlockSpec((tile, feat), lambda i: (i, 0))
    out_spec = pl.BlockSpec((tile, EMB), lambda i: (i, 0))
    # Constant index_maps: DMA'd once, VMEM-resident across all grid steps
    # (no extra multi-buffering requested on the slabs).
    kbd_spec = pl.BlockSpec((EMB, s_dim), lambda i: (0, 0))
    vbd_spec = pl.BlockSpec((s_dim, EMB), lambda i: (0, 0))
    seg_spec = pl.BlockSpec((s_dim, s_dim), lambda i: (0, 0))
    w_spec = pl.BlockSpec(packed["wslab"].shape, lambda i: (0, 0))
    p_spec = pl.BlockSpec(packed["pslab"].shape, lambda i: (0, 0))

    # TODO(synk): optionally store wslab/kbd/vbd in bf16 (f32 accumulation) to
    # halve the resident weight DMA and double MXU throughput on v6e/v7x.
    out = pl.pallas_call(
        patient_kernel,
        out_shape=jax.ShapeDtypeStruct((n_pad, EMB), jnp.float32),
        grid=(n_pad // tile,),
        in_specs=[ps_spec, kbd_spec, vbd_spec, seg_spec, w_spec, p_spec],
        out_specs=out_spec,
        compiler_params=pltpu.CompilerParams(
            dimension_semantics=("parallel",)),   # engages both v7x TensorCores
    )(ps_p, kbd, vbd, seg, packed["wslab"], packed["pslab"])
    return out[:n]


# ----------------------------- parameters -----------------------------------
def init_raw_params(key):
    ks = list(jax.random.split(key, 22))
    f32 = jnp.float32

    def w(k, shape, s=0.05):
        return jax.random.normal(k, shape, f32) * s

    def bn(kg, kb, dim):
        gamma = 1.0 + 0.1 * jax.random.normal(kg, (1, dim), f32)
        beta = 0.1 * jax.random.normal(kb, (1, dim), f32)
        run_mean = 0.05 * jax.random.normal(jax.random.fold_in(kg, 1), (1, dim), f32)
        run_var = 1.0 + 0.1 * jnp.abs(
            jax.random.normal(jax.random.fold_in(kb, 1), (1, dim), f32))
        scale = gamma / jnp.sqrt(run_var + BN_EPS)
        shift = beta - run_mean * scale
        return scale, shift

    w1 = w(ks[0], (5, 64));   b1 = w(ks[1], (1, 64))
    bn1s, bn1b = bn(ks[2], ks[3], 64)
    w2 = w(ks[4], (64, EMB)); b2 = w(ks[5], (1, EMB))
    bn2s, bn2b = bn(ks[6], ks[7], EMB)
    wq = w(ks[8], (EMB, EMB));  bq = w(ks[9], (1, EMB))
    wk = w(ks[10], (EMB, EMB)); bk = w(ks[11], (1, EMB))
    wv = w(ks[12], (EMB, EMB)); bv = w(ks[13], (1, EMB))
    wo = w(ks[14], (EMB, EMB)); bo = w(ks[15], (1, EMB))
    ln1g = 1.0 + 0.1 * jax.random.normal(ks[16], (1, EMB), jnp.float32)
    ln1b = 0.1 * jax.random.normal(ks[17], (1, EMB), jnp.float32)
    wf = w(ks[18], (EMB, EMB)); bf = w(ks[19], (1, EMB))
    ln2g = 1.0 + 0.1 * jax.random.normal(ks[20], (1, EMB), jnp.float32)
    ln2b = 0.1 * jax.random.normal(ks[21], (1, EMB), jnp.float32)

    return dict(w1=w1, b1=b1, bn1s=bn1s, bn1b=bn1b, w2=w2, b2=b2, bn2s=bn2s,
                bn2b=bn2b, wq=wq, bq=bq, wk=wk, bk=bk, wv=wv, bv=bv, wo=wo,
                bo=bo, ln1g=ln1g, ln1b=ln1b, wf=wf, bf=bf, ln2g=ln2g, ln2b=ln2b)


def pack_params(p):
    """Fold eval-mode BN + attention scale into the weights; pack into slabs."""
    w1f = p["w1"] * p["bn1s"]                       # (5,64)  column-wise scale
    b1f = p["b1"] * p["bn1s"] + p["bn1b"]
    w2f = p["w2"] * p["bn2s"]                       # (64,128)
    b2f = p["b2"] * p["bn2s"] + p["bn2b"]
    scale = 1.0 / (HEAD_DIM ** 0.5)
    wqf = p["wq"] * scale
    bqf = p["bq"] * scale

    # Zero-pad the 64-wide first layer to 128 lanes so every kernel tensor is
    # lane-dense; the matching rows of w2 are zero, so the math is unchanged.
    w1p = jnp.zeros((5, EMB), jnp.float32).at[:, :64].set(w1f)
    b1p = jnp.zeros((1, EMB), jnp.float32).at[:, :64].set(b1f)
    w2p = jnp.zeros((EMB, EMB), jnp.float32).at[:64, :].set(w2f)

    wslab = jnp.concatenate([w2p, wqf, p["wo"], p["wf"]], axis=1)   # (128, 512)
    rows = [w1p, b1p, b2f, bqf, p["bo"], p["ln1g"], p["ln1b"],
            p["bf"], p["ln2g"], p["ln2b"]]
    pslab = jnp.concatenate(
        rows + [jnp.zeros((2, EMB), jnp.float32)], axis=0)          # (16, 128)

    return dict(wslab=wslab, pslab=pslab,
                wk=p["wk"], bk=p["bk"], wv=p["wv"], bv=p["bv"])


# --------------------------- pure-JAX reference ------------------------------
def reference_forward(ps, z, p):
    h = jnp.maximum((ps @ p["w1"] + p["b1"]) * p["bn1s"] + p["bn1b"], 0.0)
    emb = jnp.maximum((h @ p["w2"] + p["b2"]) * p["bn2s"] + p["bn2b"], 0.0)
    q = emb @ p["wq"] + p["bq"]
    k = z @ p["wk"] + p["bk"]
    v = z @ p["wv"] + p["bv"]
    scale = 1.0 / (HEAD_DIM ** 0.5)
    outs = []
    for hd in range(NHEADS):
        sl = slice(hd * HEAD_DIM, (hd + 1) * HEAD_DIM)
        s = (q[:, sl] * scale) @ k[:, sl].T
        outs.append(jax.nn.softmax(s, axis=-1) @ v[:, sl])
    attn = jnp.concatenate(outs, axis=-1) @ p["wo"] + p["bo"]
    r1 = _layernorm(emb + attn, p["ln1g"], p["ln1b"])
    f = jnp.maximum(r1 @ p["wf"] + p["bf"], 0.0)
    return _layernorm(f, p["ln2g"], p["ln2b"]) + r1


if __name__ == "__main__":
    key = jax.random.PRNGKey(0)
    k_ps, k_z, k_par = jax.random.split(key, 3)

    N_PATIENTS, LKV = 600, 16          # 600 patients -> pads to 768 -> grid of 3
    patient_stats = jax.random.normal(k_ps, (N_PATIENTS, 5), jnp.float32)
    z_image = jax.random.normal(k_z, (LKV, EMB), jnp.float32)

    raw = init_raw_params(k_par)
    packed = pack_params(raw)

    out = patient_processing_forward(patient_stats, z_image, packed)
    out = jax.block_until_ready(out)
    assert out.shape == (N_PATIENTS, EMB) and out.dtype == jnp.float32

    ref = reference_forward(patient_stats, z_image, raw)
    max_err = float(jnp.max(jnp.abs(out - ref)))
    assert max_err < 5e-2, f"kernel mismatch vs pure-JAX reference: {max_err}"
    print("KERNEL_OK")
</pallas_src>

<mosaic_0001>
module attributes {stable_mosaic.version = 11 : i64} {
  func.func @patient_kernel(%arg0: i32, %arg1: memref<256x5xf32, #tpu.memory_space<vmem>>, %arg2: memref<128x128xf32, #tpu.memory_space<vmem>>, %arg3: memref<128x128xf32, #tpu.memory_space<vmem>>, %arg4: memref<128x128xf32, #tpu.memory_space<vmem>>, %arg5: memref<128x512xf32, #tpu.memory_space<vmem>>, %arg6: memref<16x128xf32, #tpu.memory_space<vmem>>, %arg7: memref<256x128xf32, #tpu.memory_space<vmem>>) attributes {dimension_semantics = [#tpu.dimension_semantics<parallel>], iteration_bounds = array<i64: 3>, scalar_prefetch = 0 : i64, scratch_operands = 0 : i64, tpu.core_type = #tpu.core_type<tc>, window_params = [{transform_indices = @transform_0, window_bounds = array<i64: 256, 5>}, {pipeline_mode = #tpu.pipeline_mode<synchronous>, transform_indices = @transform_1, window_bounds = array<i64: 128, 128>}, {pipeline_mode = #tpu.pipeline_mode<synchronous>, transform_indices = @transform_2, window_bounds = array<i64: 128, 128>}, {pipeline_mode = #tpu.pipeline_mode<synchronous>, transform_indices = @transform_3, window_bounds = array<i64: 128, 128>}, {pipeline_mode = #tpu.pipeline_mode<synchronous>, transform_indices = @transform_4, window_bounds = array<i64: 128, 512>}, {pipeline_mode = #tpu.pipeline_mode<synchronous>, transform_indices = @transform_5, window_bounds = array<i64: 16, 128>}, {transform_indices = @transform_6, window_bounds = array<i64: 256, 128>}]} {
    %c5 = arith.constant 5 : index
    %c0 = arith.constant 0 : index
    %0 = vector.load %arg6[%c5, %c0] : memref<16x128xf32, #tpu.memory_space<vmem>>, vector<1x128xf32>
    %c6 = arith.constant 6 : index
    %c0_0 = arith.constant 0 : index
    %1 = vector.load %arg6[%c6, %c0_0] : memref<16x128xf32, #tpu.memory_space<vmem>>, vector<1x128xf32>
    %c7 = arith.constant 7 : index
    %c0_1 = arith.constant 0 : index
    %2 = vector.load %arg6[%c7, %c0_1] : memref<16x128xf32, #tpu.memory_space<vmem>>, vector<1x128xf32>
    %c8 = arith.constant 8 : index
    %c0_2 = arith.constant 0 : index
    %3 = vector.load %arg6[%c8, %c0_2] : memref<16x128xf32, #tpu.memory_space<vmem>>, vector<1x128xf32>
    %c9 = arith.constant 9 : index
    %c0_3 = arith.constant 0 : index
    %4 = vector.load %arg6[%c9, %c0_3] : memref<16x128xf32, #tpu.memory_space<vmem>>, vector<1x128xf32>
    %c10 = arith.constant 10 : index
    %c0_4 = arith.constant 0 : index
    %5 = vector.load %arg6[%c10, %c0_4] : memref<16x128xf32, #tpu.memory_space<vmem>>, vector<1x128xf32>
    %c11 = arith.constant 11 : index
    %c0_5 = arith.constant 0 : index
    %6 = vector.load %arg6[%c11, %c0_5] : memref<16x128xf32, #tpu.memory_space<vmem>>, vector<1x128xf32>
    %c12 = arith.constant 12 : index
    %c0_6 = arith.constant 0 : index
    %7 = vector.load %arg6[%c12, %c0_6] : memref<16x128xf32, #tpu.memory_space<vmem>>, vector<1x128xf32>
    %c13 = arith.constant 13 : index
    %c0_7 = arith.constant 0 : index
    %8 = vector.load %arg6[%c13, %c0_7] : memref<16x128xf32, #tpu.memory_space<vmem>>, vector<1x128xf32>
    %c0_8 = arith.constant 0 : index
    %c0_9 = arith.constant 0 : index
    %9 = vector.load %arg1[%c0_8, %c0_9] : memref<256x5xf32, #tpu.memory_space<vmem>>, vector<256x5xf32>
    %c0_10 = arith.constant 0 : index
    %c0_11 = arith.constant 0 : index
    %10 = vector.load %arg6[%c0_10, %c0_11] : memref<16x128xf32, #tpu.memory_space<vmem>>, vector<5x128xf32>
    %cst = arith.constant dense<0.000000e+00> : vector<256x128xf32>
    %11 = tpu.matmul %9, %10, %cst {dimension_numbers = #tpu.dot_dimension_numbers<[1], [0], [0], [1], [0, 0, 1, 1], [], []>} : vector<256x5xf32>, vector<5x128xf32>, vector<256x128xf32> -> vector<256x128xf32>
    %12 = vector.broadcast %0 : vector<1x128xf32> to vector<256x128xf32>
    %13 = arith.addf %11, %12 : vector<256x128xf32>
    %cst_12 = arith.constant 0.000000e+00 : f32
    %14 = vector.broadcast %cst_12 : f32 to vector<256x128xf32>
    %15 = arith.maximumf %13, %14 : vector<256x128xf32>
    %c0_13 = arith.constant 0 : index
    %c0_14 = arith.constant 0 : index
    %16 = vector.load %arg5[%c0_13, %c0_14] : memref<128x512xf32, #tpu.memory_space<vmem>>, vector<128x128xf32>
    %cst_15 = arith.constant dense<0.000000e+00> : vector<256x128xf32>
    %17 = tpu.matmul %15, %16, %cst_15 {dimension_numbers = #tpu.dot_dimension_numbers<[1], [0], [0], [1], [0, 0, 1, 1], [], []>} : vector<256x128xf32>, vector<128x128xf32>, vector<256x128xf32> -> vector<256x128xf32>
    %18 = vector.broadcast %1 : vector<1x128xf32> to vector<256x128xf32>
    %19 = arith.addf %17, %18 : vector<256x128xf32>
    %cst_16 = arith.constant 0.000000e+00 : f32
    %20 = vector.broadcast %cst_16 : f32 to vector<256x128xf32>
    %21 = arith.maximumf %19, %20 : vector<256x128xf32>
    %c0_17 = arith.constant 0 : index
    %c128 = arith.constant 128 : index
    %22 = vector.load %arg5[%c0_17, %c128] : memref<128x512xf32, #tpu.memory_space<vmem>>, vector<128x128xf32>
    %cst_18 = arith.constant dense<0.000000e+00> : vector<256x128xf32>
    %23 = tpu.matmul %21, %22, %cst_18 {dimension_numbers = #tpu.dot_dimension_numbers<[1], [0], [0], [1], [0, 0, 1, 1], [], []>} : vector<256x128xf32>, vector<128x128xf32>, vector<256x128xf32> -> vector<256x128xf32>
    %24 = vector.broadcast %2 : vector<1x128xf32> to vector<256x128xf32>
    %25 = arith.addf %23, %24 : vector<256x128xf32>
    %c0_19 = arith.constant 0 : index
    %c0_20 = arith.constant 0 : index
    %26 = vector.load %arg2[%c0_19, %c0_20] : memref<128x128xf32, #tpu.memory_space<vmem>>, vector<128x128xf32>
    %cst_21 = arith.constant dense<0.000000e+00> : vector<256x128xf32>
    %27 = tpu.matmul %25, %26, %cst_21 {dimension_numbers = #tpu.dot_dimension_numbers<[1], [0], [0], [1], [0, 0, 1, 1], [], []>} : vector<256x128xf32>, vector<128x128xf32>, vector<256x128xf32> -> vector<256x128xf32>
    %cst_22 = arith.constant dense<0xFF800000> : vector<256xf32>
    %28 = vector.multi_reduction <maximumf>, %27, %cst_22 [1] : vector<256x128xf32> to vector<256xf32>
    %29 = vector.shape_cast %28 : vector<256xf32> to vector<256x1xf32>
    %30 = vector.broadcast %29 : vector<256x1xf32> to vector<256x128xf32>
    %31 = arith.subf %27, %30 : vector<256x128xf32>
    %32 = math.exp %31 : vector<256x128xf32>
    %c0_23 = arith.constant 0 : index
    %c0_24 = arith.constant 0 : index
    %33 = vector.load %arg4[%c0_23, %c0_24] : memref<128x128xf32, #tpu.memory_space<vmem>>, vector<128x128xf32>
    %cst_25 = arith.constant dense<0.000000e+00> : vector<256x128xf32>
    %34 = tpu.matmul %32, %33, %cst_25 {dimension_numbers = #tpu.dot_dimension_numbers<[1], [0], [0], [1], [0, 0, 1, 1], [], []>} : vector<256x128xf32>, vector<128x128xf32>, vector<256x128xf32> -> vector<256x128xf32>
    %35 = tpu.reciprocal %34 {approx = true} : vector<256x128xf32> -> vector<256x128xf32>
    %36 = arith.mulf %32, %35 : vector<256x128xf32>
    %c0_26 = arith.constant 0 : index
    %c0_27 = arith.constant 0 : index
    %37 = vector.load %arg3[%c0_26, %c0_27] : memref<128x128xf32, #tpu.memory_space<vmem>>, vector<128x128xf32>
    %cst_28 = arith.constant dense<0.000000e+00> : vector<256x128xf32>
    %38 = tpu.matmul %36, %37, %cst_28 {dimension_numbers = #tpu.dot_dimension_numbers<[1], [0], [0], [1], [0, 0, 1, 1], [], []>} : vector<256x128xf32>, vector<128x128xf32>, vector<256x128xf32> -> vector<256x128xf32>
    %c0_29 = arith.constant 0 : index
    %c256 = arith.constant 256 : index
    %39 = vector.load %arg5[%c0_29, %c256] : memref<128x512xf32, #tpu.memory_space<vmem>>, vector<128x128xf32>
    %cst_30 = arith.constant dense<0.000000e+00> : vector<256x128xf32>
    %40 = tpu.matmul %38, %39, %cst_30 {dimension_numbers = #tpu.dot_dimension_numbers<[1], [0], [0], [1], [0, 0, 1, 1], [], []>} : vector<256x128xf32>, vector<128x128xf32>, vector<256x128xf32> -> vector<256x128xf32>
    %41 = vector.broadcast %3 : vector<1x128xf32> to vector<256x128xf32>
    %42 = arith.addf %40, %41 : vector<256x128xf32>
    %43 = arith.addf %21, %42 : vector<256x128xf32>
    %cst_31 = arith.constant dense<0.000000e+00> : vector<256xf32>
    %44 = vector.multi_reduction <add>, %43, %cst_31 [1] : vector<256x128xf32> to vector<256xf32>
    %45 = vector.shape_cast %44 : vector<256xf32> to vector<256x1xf32>
    %cst_32 = arith.constant 1.280000e+02 : f32
    %46 = vector.broadcast %cst_32 : f32 to vector<256x1xf32>
    %47 = arith.divf %45, %46 : vector<256x1xf32>
    %48 = vector.broadcast %47 : vector<256x1xf32> to vector<256x128xf32>
    %49 = arith.subf %43, %48 : vector<256x128xf32>
    %50 = arith.mulf %49, %49 : vector<256x128xf32>
    %cst_33 = arith.constant dense<0.000000e+00> : vector<256xf32>
    %51 = vector.multi_reduction <add>, %50, %cst_33 [1] : vector<256x128xf32> to vector<256xf32>
    %52 = vector.shape_cast %51 : vector<256xf32> to vector<256x1xf32>
    %cst_34 = arith.constant 1.280000e+02 : f32
    %53 = vector.broadcast %cst_34 : f32 to vector<256x1xf32>
    %54 = arith.divf %52, %53 : vector<256x1xf32>
    %cst_35 = arith.constant 9.99999974E-6 : f32
    %55 = vector.broadcast %cst_35 : f32 to vector<256x1xf32>
    %56 = arith.addf %54, %55 : vector<256x1xf32>
    %57 = math.rsqrt %56 : vector<256x1xf32>
    %58 = vector.broadcast %57 : vector<256x1xf32> to vector<256x128xf32>
    %59 = arith.mulf %49, %58 : vector<256x128xf32>
    %60 = vector.broadcast %4 : vector<1x128xf32> to vector<256x128xf32>
    %61 = arith.mulf %59, %60 : vector<256x128xf32>
    %62 = vector.broadcast %5 : vector<1x128xf32> to vector<256x128xf32>
    %63 = arith.addf %61, %62 : vector<256x128xf32>
    %c0_36 = arith.constant 0 : index
    %c384 = arith.constant 384 : index
    %64 = vector.load %arg5[%c0_36, %c384] : memref<128x512xf32, #tpu.memory_space<vmem>>, vector<128x128xf32>
    %cst_37 = arith.constant dense<0.000000e+00> : vector<256x128xf32>
    %65 = tpu.matmul %63, %64, %cst_37 {dimension_numbers = #tpu.dot_dimension_numbers<[1], [0], [0], [1], [0, 0, 1, 1], [], []>} : vector<256x128xf32>, vector<128x128xf32>, vector<256x128xf32> -> vector<256x128xf32>
    %66 = vector.broadcast %6 : vector<1x128xf32> to vector<256x128xf32>
    %67 = arith.addf %65, %66 : vector<256x128xf32>
    %cst_38 = arith.constant 0.000000e+00 : f32
    %68 = vector.broadcast %cst_38 : f32 to vector<256x128xf32>
    %69 = arith.maximumf %67, %68 : vector<256x128xf32>
    %cst_39 = arith.constant dense<0.000000e+00> : vector<256xf32>
    %70 = vector.multi_reduction <add>, %69, %cst_39 [1] : vector<256x128xf32> to vector<256xf32>
    %71 = vector.shape_cast %70 : vector<256xf32> to vector<256x1xf32>
    %cst_40 = arith.constant 1.280000e+02 : f32
    %72 = vector.broadcast %cst_40 : f32 to vector<256x1xf32>
    %73 = arith.divf %71, %72 : vector<256x1xf32>
    %74 = vector.broadcast %73 : vector<256x1xf32> to vector<256x128xf32>
    %75 = arith.subf %69, %74 : vector<256x128xf32>
    %76 = arith.mulf %75, %75 : vector<256x128xf32>
    %cst_41 = arith.constant dense<0.000000e+00> : vector<256xf32>
    %77 = vector.multi_reduction <add>, %76, %cst_41 [1] : vector<256x128xf32> to vector<256xf32>
    %78 = vector.shape_cast %77 : vector<256xf32> to vector<256x1xf32>
    %cst_42 = arith.constant 1.280000e+02 : f32
    %79 = vector.broadcast %cst_42 : f32 to vector<256x1xf32>
    %80 = arith.divf %78, %79 : vector<256x1xf32>
    %cst_43 = arith.constant 9.99999974E-6 : f32
    %81 = vector.broadcast %cst_43 : f32 to vector<256x1xf32>
    %82 = arith.addf %80, %81 : vector<256x1xf32>
    %83 = math.rsqrt %82 : vector<256x1xf32>
    %84 = vector.broadcast %83 : vector<256x1xf32> to vector<256x128xf32>
    %85 = arith.mulf %75, %84 : vector<256x128xf32>
    %86 = vector.broadcast %7 : vector<1x128xf32> to vector<256x128xf32>
    %87 = arith.mulf %85, %86 : vector<256x128xf32>
    %88 = vector.broadcast %8 : vector<1x128xf32> to vector<256x128xf32>
    %89 = arith.addf %87, %88 : vector<256x128xf32>
    %90 = arith.addf %89, %63 : vector<256x128xf32>
    %c0_44 = arith.constant 0 : index
    %c0_45 = arith.constant 0 : index
    %91 = vector.load %arg7[%c0_44, %c0_45] : memref<256x128xf32, #tpu.memory_space<vmem>>, vector<256x128xf32>
    tpu.vector_store %arg7[%c0_44, %c0_45], %90 {strides = array<i32>} : memref<256x128xf32, #tpu.memory_space<vmem>>, vector<256x128xf32>,
    return
  }
  func.func @transform_0(%arg0: i32) -> (i32, i32) {
    %c0_i32 = arith.constant 0 : i32
    %c0_i32_0 = arith.constant 0 : i32
    return %arg0, %c0_i32 : i32, i32
  }
  func.func @transform_1(%arg0: i32) -> (i32, i32) {
    %c0_i32 = arith.constant 0 : i32
    %c0_i32_0 = arith.constant 0 : i32
    %c0_i32_1 = arith.constant 0 : i32
    return %c0_i32, %c0_i32_0 : i32, i32
  }
  func.func @transform_2(%arg0: i32) -> (i32, i32) {
    %c0_i32 = arith.constant 0 : i32
    %c0_i32_0 = arith.constant 0 : i32
    %c0_i32_1 = arith.constant 0 : i32
    return %c0_i32, %c0_i32_0 : i32, i32
  }
  func.func @transform_3(%arg0: i32) -> (i32, i32) {
    %c0_i32 = arith.constant 0 : i32
    %c0_i32_0 = arith.constant 0 : i32
    %c0_i32_1 = arith.constant 0 : i32
    return %c0_i32, %c0_i32_0 : i32, i32
  }
  func.func @transform_4(%arg0: i32) -> (i32, i32) {
    %c0_i32 = arith.constant 0 : i32
    %c0_i32_0 = arith.constant 0 : i32
    %c0_i32_1 = arith.constant 0 : i32
    return %c0_i32, %c0_i32_0 : i32, i32
  }
  func.func @transform_5(%arg0: i32) -> (i32, i32) {
    %c0_i32 = arith.constant 0 : i32
    %c0_i32_0 = arith.constant 0 : i32
    %c0_i32_1 = arith.constant 0 : i32
    return %c0_i32, %c0_i32_0 : i32, i32
  }
  func.func @transform_6(%arg0: i32) -> (i32, i32) {
    %c0_i32 = arith.constant 0 : i32
    %c0_i32_0 = arith.constant 0 : i32
    return %arg0, %c0_i32 : i32, i32
  }
}

</mosaic_0001>

<llo_original>
// kernel: tpu_custom_call.1
$region0: #{tpu_custom_call.1}
  #allocation0 [shape = 'u32[]', space=smem, size = 0x4, offset = 0x4, fixed_abs, tag = 'smem constant byte address 0x4 - core index']
  #allocation1 [shape = 'u32[144,128]{1,0:T(1,128)}', space=vmem, size = 0x12000, scoped, tag = 'internal scratch']
  %s0 = inlined_call_operand.vmem [shape: f32[768,5], index: 0, kind: input, shape index: {}]
  %s1 = inlined_call_operand.vmem [shape: f32[128,128], index: 1, kind: input, shape index: {}]
  %s2 = inlined_call_operand.vmem [shape: f32[128,128], index: 2, kind: input, shape index: {}]
  %s3 = inlined_call_operand.hbm [shape: f32[128,128], index: 3, kind: input, shape index: {}]
  %s4 = inlined_call_operand.vmem [shape: f32[128,512], index: 4, kind: input, shape index: {}]
  %s5 = inlined_call_operand.vmem [shape: f32[16,128], index: 5, kind: input, shape index: {}]
  %s6 = inlined_call_operand.hbm [shape: f32[768,128], index: 6, kind: output, shape index: {}]
  %s7 = sld [smem:[#allocation0]]
  $region61: #{tpu_custom_call.1} parent=0
    _
  %s9 = ssub.s32 1, %s7
  %s10 = scalar_select 0, %s9, %s7
  $region1: #{tpu_custom_call.1} parent=0
    #allocation2 [shape = 'u8[65536]{0}', space=vmem, size = 0x10000, scoped, tag = 'input window, operand 3, single buffered']
    #allocation3 [shape = 's32[2]{0}', space=sflag, size = 0x8, scoped, tag = 'scoped memory for tpu_custom_call.1']
    #allocation4 [shape = 's32[2]{0}', space=sflag, size = 0x8, scoped, tag = 'scoped memory for tpu_custom_call.1']
    #allocation5 [shape = 'u8[262144]{0}', space=vmem, size = 0x40000, scoped, tag = 'output window, operand 0']
    %11 = vsyncpa [#allocation3], 0
    %12 = vsyncpa [#allocation4], 0
    %s13 = scalar_lea.sflag [#allocation4], 1
    %14 = vsyncpa %s13, 0
    loop: start=0, step=1, limit=5
    $region2: #{tpu_custom_call.1} parent=1 // loop_pre_header
      _
    $region3: #{tpu_custom_call.1} parent=1 // loop_header
      %s16 = sphi 0, %s20
      %p17 = scmp.ge.s32.totalorder %s16, 5
      %s26 = sphi 0, %s28
      %s29 = sphi 0, %s26
      %s30 = sphi 0, %s29
      %s46 = sphi 0, %s30
      %s50 = sphi 0, %s50
      %s52 = sphi 0, %s50
      %s53 = sphi 0, %s52
      %s67 = sphi 0, %s53
      %s71 = sphi 0, %s71
      %s73 = sphi 0, %s71
      %s74 = sphi 0, %s73
      %s88 = sphi 0, %s74
      %s92 = sphi 0, %s92
      %s94 = sphi 0, %s92
      %s95 = sphi 0, %s94
      %s109 = sphi 0, %s95
      %s113 = sphi 0, %s113
      %s115 = sphi 0, %s113
      %s116 = sphi 0, %s115
      %s130 = sphi 0, %s116
      %s134 = sphi 0, %s134
      %s136 = sphi 0, %s134
      %s137 = sphi 0, %s136
      %s151 = sphi 0, %s137
      %s157 = sphi 0, %s159
      %s160 = sphi 0, %s157
      %s161 = sphi 0, %s160
      %s177 = sphi 0, %s161
    $region4: #{tpu_custom_call.1} parent=1 // loop_header_branch
      %19 = sbr.rel (%p17) target = $region8
    $region5: #{tpu_custom_call.1} parent=1 // loop_body
      %s21 = ssub.s32 %s16, 1
      %s22 = ssub.s32 %s16, 2
      %s23 = sadd.s32 %s16, 1
      %s24 = ssub.s32 %s16, %s23
      %p25 = scmp.eq.s32.totalorder %s24, 0
      %s27 = sadd.s32 %s26, 1
      %s28 = scalar_select %p25, %s26, %s27
      %p31 = pneg %p25
      %p32 = scmp.eq.s32.totalorder %s16, 2
      %p33 = por %p31, %p32
      %p34 = scmp.ne.s32.totalorder %s26, %s29
      %p35 = scmp.eq.s32.totalorder %s16, 0
      %p36 = por %p34, %p35
      %p37 = scmp.ne.s32.totalorder %s26, %s29
      %p38 = scmp.eq.s32.totalorder %s21, 2
      %p39 = por %p37, %p38
      %p40 = scmp.ne.s32.totalorder %s29, %s30
      %p41 = scmp.eq.s32.totalorder %s21, 0
      %p42 = por %p40, %p41
      %p43 = scmp.ne.s32.totalorder %s29, %s30
      %p44 = scmp.eq.s32.totalorder %s22, 2
      %p45 = por %p43, %p44
      %p47 = scmp.ne.s32.totalorder %s30, %s46
      %p48 = scmp.eq.s32.totalorder %s22, 0
      %p49 = por %p47, %p48
      %s51 = sadd.s32 %s50, 1
      %p54 = scmp.eq.s32.totalorder %s16, 2
      %p55 = scmp.ne.s32.totalorder %s50, %s52
      %p56 = scmp.eq.s32.totalorder %s16, 0
      %p57 = por %p55, %p56
      %p58 = scmp.ne.s32.totalorder %s50, %s52
      %p59 = scmp.eq.s32.totalorder %s21, 2
      %p60 = por %p58, %p59
      %p61 = scmp.ne.s32.totalorder %s52, %s53
      %p62 = scmp.eq.s32.totalorder %s21, 0
      %p63 = por %p61, %p62
      %p64 = scmp.ne.s32.totalorder %s52, %s53
      %p65 = scmp.eq.s32.totalorder %s22, 2
      %p66 = por %p64, %p65
      %p68 = scmp.ne.s32.totalorder %s53, %s67
      %p69 = scmp.eq.s32.totalorder %s22, 0
      %p70 = por %p68, %p69
      %s72 = sadd.s32 %s71, 1
      %p75 = scmp.eq.s32.totalorder %s16, 2
      %p76 = scmp.ne.s32.totalorder %s71, %s73
      %p77 = scmp.eq.s32.totalorder %s16, 0
      %p78 = por %p76, %p77
      %p79 = scmp.ne.s32.totalorder %s71, %s73
      %p80 = scmp.eq.s32.totalorder %s21, 2
      %p81 = por %p79, %p80
      %p82 = scmp.ne.s32.totalorder %s73, %s74
      %p83 = scmp.eq.s32.totalorder %s21, 0
      %p84 = por %p82, %p83
      %p85 = scmp.ne.s32.totalorder %s73, %s74
      %p86 = scmp.eq.s32.totalorder %s22, 2
      %p87 = por %p85, %p86
      %p89 = scmp.ne.s32.totalorder %s74, %s88
      %p90 = scmp.eq.s32.totalorder %s22, 0
      %p91 = por %p89, %p90
      %s93 = sadd.s32 %s92, 1
      %p96 = scmp.eq.s32.totalorder %s16, 2
      %p97 = scmp.ne.s32.totalorder %s92, %s94
      %p98 = scmp.eq.s32.totalorder %s16, 0
      %p99 = por %p97, %p98
      %p100 = scmp.ne.s32.totalorder %s92, %s94
      %p101 = scmp.eq.s32.totalorder %s21, 2
      %p102 = por %p100, %p101
      %p103 = scmp.ne.s32.totalorder %s94, %s95
      %p104 = scmp.eq.s32.totalorder %s21, 0
      %p105 = por %p103, %p104
      %p106 = scmp.ne.s32.totalorder %s94, %s95
      %p107 = scmp.eq.s32.totalorder %s22, 2
      %p108 = por %p106, %p107
      %p110 = scmp.ne.s32.totalorder %s95, %s109
      %p111 = scmp.eq.s32.totalorder %s22, 0
      %p112 = por %p110, %p111
      %s114 = sadd.s32 %s113, 1
      %p117 = scmp.eq.s32.totalorder %s16, 2
      %p118 = scmp.ne.s32.totalorder %s113, %s115
      %p119 = scmp.eq.s32.totalorder %s16, 0
      %p120 = por %p118, %p119
      %p121 = scmp.ne.s32.totalorder %s113, %s115
      %p122 = scmp.eq.s32.totalorder %s21, 2
      %p123 = por %p121, %p122
      %p124 = scmp.ne.s32.totalorder %s115, %s116
      %p125 = scmp.eq.s32.totalorder %s21, 0
      %p126 = por %p124, %p125
      %p127 = scmp.ne.s32.totalorder %s115, %s116
      %p128 = scmp.eq.s32.totalorder %s22, 2
      %p129 = por %p127, %p128
      %p131 = scmp.ne.s32.totalorder %s116, %s130
      %p132 = scmp.eq.s32.totalorder %s22, 0
      %p133 = por %p131, %p132
      %s135 = sadd.s32 %s134, 1
      %p138 = scmp.eq.s32.totalorder %s16, 2
      %p139 = scmp.ne.s32.totalorder %s134, %s136
      %p140 = scmp.eq.s32.totalorder %s16, 0
      %p141 = por %p139, %p140
      %p142 = scmp.ne.s32.totalorder %s134, %s136
      %p143 = scmp.eq.s32.totalorder %s21, 2
      %p144 = por %p142, %p143
      %p145 = scmp.ne.s32.totalorder %s136, %s137
      %p146 = scmp.eq.s32.totalorder %s21, 0
      %p147 = por %p145, %p146
      %p148 = scmp.ne.s32.totalorder %s136, %s137
      %p149 = scmp.eq.s32.totalorder %s22, 2
      %p150 = por %p148, %p149
      %p152 = scmp.ne.s32.totalorder %s137, %s151
      %p153 = scmp.eq.s32.totalorder %s22, 0
      %p154 = por %p152, %p153
      %s155 = ssub.s32 %s16, %s23
      %p156 = scmp.eq.s32.totalorder %s155, 0
      %s158 = sadd.s32 %s157, 1
      %s159 = scalar_select %p156, %s157, %s158
      %p162 = pneg %p156
      %p163 = scmp.eq.s32.totalorder %s16, 2
      %p164 = por %p162, %p163
      %p165 = scmp.ne.s32.totalorder %s157, %s160
      %p166 = scmp.eq.s32.totalorder %s16, 0
      %p167 = por %p165, %p166
      %p168 = scmp.ne.s32.totalorder %s157, %s160
      %p169 = scmp.eq.s32.totalorder %s21, 2
      %p170 = por %p168, %p169
      %p171 = scmp.ne.s32.totalorder %s160, %s161
      %p172 = scmp.eq.s32.totalorder %s21, 0
      %p173 = por %p171, %p172
      %p174 = scmp.ne.s32.totalorder %s160, %s161
      %p175 = scmp.eq.s32.totalorder %s22, 2
      %p176 = por %p174, %p175
      %p178 = scmp.ne.s32.totalorder %s161, %s177
      %p179 = scmp.eq.s32.totalorder %s22, 0
      %p180 = por %p178, %p179
      %p181 = scmp.le.s32.totalorder 1, %s16
      %p182 = scmp.lt.s32.totalorder %s16, 4
      %p183 = pnand %p181, %p182
      %p184 = pneg %p183
      // Predicated region
      $region9: #{tpu_custom_call.1} parent=5 // pred_check
        _
      $region10: #{tpu_custom_call.1} parent=5 // pred_check_branch
        %186 = sbr.rel (%p183) target = $region12
      $region11: #{tpu_custom_call.1} parent=5 // pred_region
        %s187 = ssub.s32 %s16, 1
        // Predicated region
        $region13: #{tpu_custom_call.1} parent=11 // pred_check
          %p188 = pneg %p63
        $region14: #{tpu_custom_call.1} parent=11 // pred_check_branch
          %190 = sbr.rel (%p188) target = $region16
        $region15: #{tpu_custom_call.1} parent=11 // pred_region
          _
        $region16: #{tpu_custom_call.1} parent=11 // pred_fallthru
          _
        // Predicated region
        $region17: #{tpu_custom_call.1} parent=11 // pred_check
          %p191 = pneg %p84
        $region18: #{tpu_custom_call.1} parent=11 // pred_check_branch
          %193 = sbr.rel (%p191) target = $region20
        $region19: #{tpu_custom_call.1} parent=11 // pred_region
          _
        $region20: #{tpu_custom_call.1} parent=11 // pred_fallthru
          _
        // Predicated region
        $region21: #{tpu_custom_call.1} parent=11 // pred_check
          %p194 = pneg %p105
        $region22: #{tpu_custom_call.1} parent=11 // pred_check_branch
          %196 = sbr.rel (%p194) target = $region24
        $region23: #{tpu_custom_call.1} parent=11 // pred_region
          %s198 = ssub.s32 2048, 2048
          %199 = vsyncadd [#allocation3], %s198
          %s200 = sshll.u32 [#allocation2], 4
          %s201 = int_to_ptr.vmem [resolvable:$true] %s200
          %206 = dma.hbm_to_vmem [thread:$0]  %s3, 2048, %s201, [#allocation3], 128, 128, 8
        $region24: #{tpu_custom_call.1} parent=11 // pred_fallthru
          _
        // Predicated region
        $region25: #{tpu_custom_call.1} parent=11 // pred_check
          %p207 = pneg %p126
        $region26: #{tpu_custom_call.1} parent=11 // pred_check_branch
          %209 = sbr.rel (%p207) target = $region28
        $region27: #{tpu_custom_call.1} parent=11 // pred_region
          _
        $region28: #{tpu_custom_call.1} parent=11 // pred_fallthru
          _
        // Predicated region
        $region29: #{tpu_custom_call.1} parent=11 // pred_check
          %p210 = pneg %p147
        $region30: #{tpu_custom_call.1} parent=11 // pred_check_branch
          %212 = sbr.rel (%p210) target = $region32
        $region31: #{tpu_custom_call.1} parent=11 // pred_region
          _
        $region32: #{tpu_custom_call.1} parent=11 // pred_fallthru
          _
      $region12: #{tpu_custom_call.1} parent=5 // pred_fallthru
        _
      %p213 = scmp.lt.s32.totalorder %s16, 3
      // Predicated region
      $region33: #{tpu_custom_call.1} parent=5 // pred_check
        %p214 = pneg %p213
      $region34: #{tpu_custom_call.1} parent=5 // pred_check_branch
        %216 = sbr.rel (%p214) target = $region36
      $region35: #{tpu_custom_call.1} parent=5 // pred_region
        // Predicated region
        $region37: #{tpu_custom_call.1} parent=35 // pred_check
          %p217 = pneg %p36
        $region38: #{tpu_custom_call.1} parent=35 // pred_check_branch
          %219 = sbr.rel (%p217) target = $region40
        $region39: #{tpu_custom_call.1} parent=35 // pred_region
          %s220 = smul.u32 32, %s16
          %p221 = scmp.lt.s32.totalorder %s220, 95
          %s222 = scalar_select %p221, %s220, 95
          %s223 = smul.addr %s222, 8
          %s224 = scalar_lea.vmem %s0, %s223
          %s225 = smul.u32 32, %s16
        $region40: #{tpu_custom_call.1} parent=35 // pred_fallthru
          _
      $region36: #{tpu_custom_call.1} parent=5 // pred_fallthru
        _
      %p226 = scmp.le.s32.totalorder 1, %s16
      %p227 = scmp.lt.s32.totalorder %s16, 4
      %p228 = pnand %p226, %p227
      %p229 = pneg %p228
      // Predicated region
      $region41: #{tpu_custom_call.1} parent=5 // pred_check
        _
      $region42: #{tpu_custom_call.1} parent=5 // pred_check_branch
        %231 = sbr.rel (%p228) target = $region44
      $region43: #{tpu_custom_call.1} parent=5 // pred_region
        %s232 = ssub.s32 %s16, 1
        // Predicated region
        $region45: #{tpu_custom_call.1} parent=43 // pred_check
          %p233 = pneg %p105
        $region46: #{tpu_custom_call.1} parent=43 // pred_check_branch
          %235 = sbr.rel (%p233) target = $region48
        $region47: #{tpu_custom_call.1} parent=43 // pred_region
          %236 = dma.done [#allocation3], 2048
        $region48: #{tpu_custom_call.1} parent=43 // pred_fallthru
          _
        %s237 = smul.u32 32, %s21
        %p238 = scmp.lt.s32.totalorder %s237, 95
        %s239 = scalar_select %p238, %s237, 95
        %s240 = smul.addr %s239, 8
        %s241 = scalar_lea.vmem %s0, %s240
        %p242 = pneg %p42
        %p243 = pneg %p39
        %p244 = pneg %p63
        %p245 = pneg %p60
        %p246 = pneg %p84
        %p247 = pneg %p81
        %p248 = pneg %p105
        %p249 = pneg %p102
        %p250 = pneg %p126
        %p251 = pneg %p123
        %p252 = pneg %p147
        %p253 = pneg %p144
        %p254 = pneg %p173
        %p255 = pneg %p170
        %s256 = sand.u32 %s160, 1
        %s257 = scalar_lea.sflag [#allocation4], %s256
        %s258 = sand.u32 %s160, 1
        %s259 = smul.addr %s258, 256
        %s260 = scalar_lea.vmem [#allocation5], %s259
        %s261 = smul.u32 32, %s21
        %p262 = scmp.lt.s32.totalorder %s261, 95
        %s263 = scalar_select %p262, %s261, 95
        %s264 = smul.addr %s263, 8
        %s265 = scalar_lea.vmem %s0, %s264
        %s266 = smul.u32 32, %s21
        %s267 = smul.u32 32, %s21
        %v268 = vld [vmem:[%s5 + $0x5] sm:$0x1]
        %v269 = vld [vmem:[%s5 + $0x6] sm:$0x1]
        %v270 = vld [vmem:[%s5 + $0x7] sm:$0x1]
        %v271 = vld [vmem:[%s5 + $0x8] sm:$0x1]
        %v272 = vld [vmem:[%s5 + $0x9] sm:$0x1]
        %v273 = vld [vmem:[%s5 + $0xa] sm:$0x1]
        %v274 = vld [vmem:[%s5 + $0xb] sm:$0x1]
        %v275 = vld [vmem:[%s5 + $0xc] sm:$0x1]
        %v276 = vld [vmem:[%s5 + $0xd] sm:$0x1]
        %v277 = vld [vmem:[%s265] sm:$0xff]
        %v278 = vld [vmem:[%s265 + $0x8] sm:$0xff]
        %v279 = vld [vmem:[%s265 + $0x10] sm:$0xff]
        %v280 = vld [vmem:[%s265 + $0x18] sm:$0xff]
        %v281 = vld [vmem:[%s265 + $0x20] sm:$0xff]
        %v282 = vld [vmem:[%s265 + $0x28] sm:$0xff]
        %v283 = vld [vmem:[%s265 + $0x30] sm:$0xff]
        %v284 = vld [vmem:[%s265 + $0x38] sm:$0xff]
        %v285 = vld [vmem:[%s265 + $0x40] sm:$0xff]
        %v286 = vld [vmem:[%s265 + $0x48] sm:$0xff]
        %v287 = vld [vmem:[%s265 + $0x50] sm:$0xff]
        %v288 = vld [vmem:[%s265 + $0x58] sm:$0xff]
        %v289 = vld [vmem:[%s265 + $0x60] sm:$0xff]
        %v290 = vld [vmem:[%s265 + $0x68] sm:$0xff]
        %v291 = vld [vmem:[%s265 + $0x70] sm:$0xff]
        %v292 = vld [vmem:[%s265 + $0x78] sm:$0xff]
        %v293 = vld [vmem:[%s265 + $0x80] sm:$0xff]
        %v294 = vld [vmem:[%s265 + $0x88] sm:$0xff]
        %v295 = vld [vmem:[%s265 + $0x90] sm:$0xff]
        %v296 = vld [vmem:[%s265 + $0x98] sm:$0xff]
        %v297 = vld [vmem:[%s265 + $0xa0] sm:$0xff]
        %v298 = vld [vmem:[%s265 + $0xa8] sm:$0xff]
        %v299 = vld [vmem:[%s265 + $0xb0] sm:$0xff]
        %v300 = vld [vmem:[%s265 + $0xb8] sm:$0xff]
        %v301 = vld [vmem:[%s265 + $0xc0] sm:$0xff]
        %v302 = vld [vmem:[%s265 + $0xc8] sm:$0xff]
        %v303 = vld [vmem:[%s265 + $0xd0] sm:$0xff]
        %v304 = vld [vmem:[%s265 + $0xd8] sm:$0xff]
        %v305 = vld [vmem:[%s265 + $0xe0] sm:$0xff]
        %v306 = vld [vmem:[%s265 + $0xe8] sm:$0xff]
        %v307 = vld [vmem:[%s265 + $0xf0] sm:$0xff]
        %v308 = vld [vmem:[%s265 + $0xf8] sm:$0xff]
        %v309 = vld [vmem:[%s5] sm:$0x1f]
        %v310 = vlaneseq
        %v311 = vshrl.u32 %v310, 7
        %v312 = vsub.s32 0, %v311
        %v313 = vrot.slane %v268, %v312
        %vm314 = vcmask 39936
        %v316 = vsel %vm314, %v277, 0
        %v319 = vsel %vm314, %v278, 0
        %v322 = vsel %vm314, %v279, 0
        %v325 = vsel %vm314, %v280, 0
        %v328 = vsel %vm314, %v281, 0
        %v331 = vsel %vm314, %v282, 0
        %v334 = vsel %vm314, %v283, 0
        %v337 = vsel %vm314, %v284, 0
        %v340 = vsel %vm314, %v285, 0
        %v343 = vsel %vm314, %v286, 0
        %v346 = vsel %vm314, %v287, 0
        %v349 = vsel %vm314, %v288, 0
        %v352 = vsel %vm314, %v289, 0
        %v355 = vsel %vm314, %v290, 0
        %v358 = vsel %vm314, %v291, 0
        %v361 = vsel %vm314, %v292, 0
        %v364 = vsel %vm314, %v293, 0
        %v367 = vsel %vm314, %v294, 0
        %v370 = vsel %vm314, %v295, 0
        %v373 = vsel %vm314, %v296, 0
        %v376 = vsel %vm314, %v297, 0
        %v379 = vsel %vm314, %v298, 0
        %v382 = vsel %vm314, %v299, 0
        %v385 = vsel %vm314, %v300, 0
        %v388 = vsel %vm314, %v301, 0
        %v391 = vsel %vm314, %v302, 0
        %v394 = vsel %vm314, %v303, 0
        %v397 = vsel %vm314, %v304, 0
        %v400 = vsel %vm314, %v305, 0
        %v403 = vsel %vm314, %v306, 0
        %v406 = vsel %vm314, %v307, 0
        %v409 = vsel %vm314, %v308, 0
        %vm411 = vcmask 1044480
        %v413 = vsel %vm411, %v309, 0
        %415 = vmatprep.subr.mxu0 0.0
        %416 = vmatpush1.msra.mxu0 %v413
        %417 = vmatprep.subr.mxu0 0.0
        %418 = vmatpush1.msra.mxu0 0.0
        %419 = vmatprep.subr.mxu0 0.0
        %420 = vmatpush1.msra.mxu0 0.0
        %421 = vmatprep.subr.mxu0 0.0
        %422 = vmatpush1.msra.mxu0 0.0
        %423 = vmatprep.subr.mxu0 0.0
        %424 = vmatpush1.msra.mxu0 0.0
        %425 = vmatprep.subr.mxu0 0.0
        %426 = vmatpush1.msra.mxu0 0.0
        %427 = vmatprep.subr.mxu0 0.0
        %428 = vmatpush1.msra.mxu0 0.0
        %429 = vmatprep.subr.mxu0 0.0
        %430 = vmatpush1.msra.mxu0 0.0
        %431 = vmatprep.subr.mxu0 0.0
        %432 = vmatpush1.msra.mxu0 0.0
        %433 = vmatprep.subr.mxu0 0.0
        %434 = vmatpush1.msra.mxu0 0.0
        %435 = vmatprep.subr.mxu0 0.0
        %436 = vmatpush1.msra.mxu0 0.0
        %437 = vmatprep.subr.mxu0 0.0
        %438 = vmatpush1.msra.mxu0 0.0
        %439 = vmatprep.subr.mxu0 0.0
        %440 = vmatpush1.msra.mxu0 0.0
        %441 = vmatprep.subr.mxu0 0.0
        %442 = vmatpush1.msra.mxu0 0.0
        %443 = vmatprep.subr.mxu0 0.0
        %444 = vmatpush1.msra.mxu0 0.0
        %445 = vmatprep.subr.mxu0 0.0
        %446 = vmatpush1.msra.mxu0 0.0
        %447 = vmatprep.subr.mxu0 0.0
        %448 = vmatpush1.msra.mxu0 0.0
        %449 = vmatprep.subr.mxu0 0.0
        %450 = vmatpush1.msra.mxu0 0.0
        %451 = vmatprep.subr.mxu0 0.0
        %452 = vmatpush1.msra.mxu0 0.0
        %453 = vmatprep.subr.mxu0 0.0
        %454 = vmatpush1.msra.mxu0 0.0
        %455 = vmatprep.subr.mxu0 0.0
        %456 = vmatpush1.msra.mxu0 0.0
        %457 = vmatprep.subr.mxu0 0.0
        %458 = vmatpush1.msra.mxu0 0.0
        %459 = vmatprep.subr.mxu0 0.0
        %460 = vmatpush1.msra.mxu0 0.0
        %461 = vmatprep.subr.mxu0 0.0
        %462 = vmatpush1.msra.mxu0 0.0
        %463 = vmatprep.subr.mxu0 0.0
        %464 = vmatpush1.msra.mxu0 0.0
        %465 = vmatprep.subr.mxu0 0.0
        %466 = vmatpush1.msra.mxu0 0.0
        %467 = vmatprep.subr.mxu0 0.0
        %468 = vmatpush1.msra.mxu0 0.0
        %469 = vmatprep.subr.mxu0 0.0
        %470 = vmatpush1.msra.mxu0 0.0
        %471 = vmatprep.subr.mxu0 0.0
        %472 = vmatpush1.msra.mxu0 0.0
        %473 = vmatprep.subr.mxu0 0.0
        %474 = vmatpush1.msra.mxu0 0.0
        %475 = vmatprep.subr.mxu0 0.0
        %476 = vmatpush1.msra.mxu0 0.0
        %477 = vmatprep.subr.mxu0 0.0
        %478 = vmatpush1.msra.mxu0 0.0
        %479 = vmatprep.mubr.f32.mxu0 0.0
        %480 = vmatmul.mubr.f32.gmra.mrb[0].mxu0 %v316
        %v481 = vpop.f32.mrb[0].mxu0
        %v482 = vadd.f32 %v313, %v481
        %v483 = vpop.f32.mrb[0].mxu0
        %484 = vmatprep.mubr.f32.mxu0 0.0
        %485 = vmatmul.mubr.f32.gmra.mrb[0].mxu0 %v319
        %v486 = vpop.f32.mrb[0].mxu0
        %v487 = vadd.f32 %v313, %v486
        %v488 = vpop.f32.mrb[0].mxu0
        %489 = vmatprep.mubr.f32.mxu0 0.0
        %490 = vmatmul.mubr.f32.gmra.mrb[0].mxu0 %v322
        %v491 = vpop.f32.mrb[0].mxu0
        %v492 = vadd.f32 %v313, %v491
        %v493 = vpop.f32.mrb[0].mxu0
        %494 = vmatprep.mubr.f32.mxu0 0.0
        %495 = vmatmul.mubr.f32.gmra.mrb[0].mxu0 %v325
        %v496 = vpop.f32.mrb[0].mxu0
        %v497 = vadd.f32 %v313, %v496
        %v498 = vpop.f32.mrb[0].mxu0
        %499 = vmatprep.mubr.f32.mxu0 0.0
        %500 = vmatmul.mubr.f32.gmra.mrb[0].mxu0 %v328
        %v501 = vpop.f32.mrb[0].mxu0
        %v502 = vadd.f32 %v313, %v501
        %v503 = vpop.f32.mrb[0].mxu0
        %504 = vmatprep.mubr.f32.mxu0 0.0
        %505 = vmatmul.mubr.f32.gmra.mrb[0].mxu0 %v331
        %v506 = vpop.f32.mrb[0].mxu0
        %v507 = vadd.f32 %v313, %v506
        %v508 = vpop.f32.mrb[0].mxu0
        %509 = vmatprep.mubr.f32.mxu0 0.0
        %510 = vmatmul.mubr.f32.gmra.mrb[0].mxu0 %v334
        %v511 = vpop.f32.mrb[0].mxu0
        %v512 = vadd.f32 %v313, %v511
        %v513 = vpop.f32.mrb[0].mxu0
        %514 = vmatprep.mubr.f32.mxu0 0.0
        %515 = vmatmul.mubr.f32.gmra.mrb[0].mxu0 %v337
        %v516 = vpop.f32.mrb[0].mxu0
        %v517 = vadd.f32 %v313, %v516
        %v518 = vpop.f32.mrb[0].mxu0
        %519 = vmatprep.mubr.f32.mxu0 0.0
        %520 = vmatmul.mubr.f32.gmra.mrb[0].mxu0 %v340
        %v521 = vpop.f32.mrb[0].mxu0
        %v522 = vadd.f32 %v313, %v521
        %v523 = vpop.f32.mrb[0].mxu0
        %524 = vmatprep.mubr.f32.mxu0 0.0
        %525 = vmatmul.mubr.f32.gmra.mrb[0].mxu0 %v343
        %v526 = vpop.f32.mrb[0].mxu0
        %v527 = vadd.f32 %v313, %v526
        %v528 = vpop.f32.mrb[0].mxu0
        %529 = vmatprep.mubr.f32.mxu0 0.0
        %530 = vmatmul.mubr.f32.gmra.mrb[0].mxu0 %v346
        %v531 = vpop.f32.mrb[0].mxu0
        %v532 = vadd.f32 %v313, %v531
        %v533 = vpop.f32.mrb[0].mxu0
        %534 = vmatprep.mubr.f32.mxu0 0.0
        %535 = vmatmul.mubr.f32.gmra.mrb[0].mxu0 %v349
        %v536 = vpop.f32.mrb[0].mxu0
        %v537 = vadd.f32 %v313, %v536
        %v538 = vpop.f32.mrb[0].mxu0
        %539 = vmatprep.mubr.f32.mxu0 0.0
        %540 = vmatmul.mubr.f32.gmra.mrb[0].mxu0 %v352
        %v541 = vpop.f32.mrb[0].mxu0
        %v542 = vadd.f32 %v313, %v541
        %v543 = vpop.f32.mrb[0].mxu0
        %544 = vmatprep.mubr.f32.mxu0 0.0
        %545 = vmatmul.mubr.f32.gmra.mrb[0].mxu0 %v355
        %v546 = vpop.f32.mrb[0].mxu0
        %v547 = vadd.f32 %v313, %v546
        %v548 = vpop.f32.mrb[0].mxu0
        %549 = vmatprep.mubr.f32.mxu0 0.0
        %550 = vmatmul.mubr.f32.gmra.mrb[0].mxu0 %v358
        %v551 = vpop.f32.mrb[0].mxu0
        %v552 = vadd.f32 %v313, %v551
        %v553 = vpop.f32.mrb[0].mxu0
        %554 = vmatprep.mubr.f32.mxu0 0.0
        %555 = vmatmul.mubr.f32.gmra.mrb[0].mxu0 %v361
        %v556 = vpop.f32.mrb[0].mxu0
        %v557 = vadd.f32 %v313, %v556
        %v558 = vpop.f32.mrb[0].mxu0
        %559 = vmatprep.mubr.f32.mxu0 0.0
        %560 = vmatmul.mubr.f32.gmra.mrb[0].mxu0 %v364
        %v561 = vpop.f32.mrb[0].mxu0
        %v562 = vadd.f32 %v313, %v561
        %v563 = vpop.f32.mrb[0].mxu0
        %564 = vmatprep.mubr.f32.mxu0 0.0
        %565 = vmatmul.mubr.f32.gmra.mrb[0].mxu0 %v367
        %v566 = vpop.f32.mrb[0].mxu0
        %v567 = vadd.f32 %v313, %v566
        %v568 = vpop.f32.mrb[0].mxu0
        %569 = vmatprep.mubr.f32.mxu0 0.0
        %570 = vmatmul.mubr.f32.gmra.mrb[0].mxu0 %v370
        %v571 = vpop.f32.mrb[0].mxu0
        %v572 = vadd.f32 %v313, %v571
        %v573 = vpop.f32.mrb[0].mxu0
        %574 = vmatprep.mubr.f32.mxu0 0.0
        %575 = vmatmul.mubr.f32.gmra.mrb[0].mxu0 %v373
        %v576 = vpop.f32.mrb[0].mxu0
        %v577 = vadd.f32 %v313, %v576
        %v578 = vpop.f32.mrb[0].mxu0
        %579 = vmatprep.mubr.f32.mxu0 0.0
        %580 = vmatmul.mubr.f32.gmra.mrb[0].mxu0 %v376
        %v581 = vpop.f32.mrb[0].mxu0
        %v582 = vadd.f32 %v313, %v581
        %v583 = vpop.f32.mrb[0].mxu0
        %584 = vmatprep.mubr.f32.mxu0 0.0
        %585 = vmatmul.mubr.f32.gmra.mrb[0].mxu0 %v379
        %v586 = vpop.f32.mrb[0].mxu0
        %v587 = vadd.f32 %v313, %v586
        %v588 = vpop.f32.mrb[0].mxu0
        %589 = vmatprep.mubr.f32.mxu0 0.0
        %590 = vmatmul.mubr.f32.gmra.mrb[0].mxu0 %v382
        %v591 = vpop.f32.mrb[0].mxu0
        %v592 = vadd.f32 %v313, %v591
        %v593 = vpop.f32.mrb[0].mxu0
        %594 = vmatprep.mubr.f32.mxu0 0.0
        %595 = vmatmul.mubr.f32.gmra.mrb[0].mxu0 %v385
        %v596 = vpop.f32.mrb[0].mxu0
        %v597 = vadd.f32 %v313, %v596
        %v598 = vpop.f32.mrb[0].mxu0
        %599 = vmatprep.mubr.f32.mxu0 0.0
        %600 = vmatmul.mubr.f32.gmra.mrb[0].mxu0 %v388
        %v601 = vpop.f32.mrb[0].mxu0
        %v602 = vadd.f32 %v313, %v601
        %v603 = vpop.f32.mrb[0].mxu0
        %604 = vmatprep.mubr.f32.mxu0 0.0
        %605 = vmatmul.mubr.f32.gmra.mrb[0].mxu0 %v391
        %v606 = vpop.f32.mrb[0].mxu0
        %v607 = vadd.f32 %v313, %v606
        %v608 = vpop.f32.mrb[0].mxu0
        %609 = vmatprep.mubr.f32.mxu0 0.0
        %610 = vmatmul.mubr.f32.gmra.mrb[0].mxu0 %v394
        %v611 = vpop.f32.mrb[0].mxu0
        %v612 = vadd.f32 %v313, %v611
        %v613 = vpop.f32.mrb[0].mxu0
        %614 = vmatprep.mubr.f32.mxu0 0.0
        %615 = vmatmul.mubr.f32.gmra.mrb[0].mxu0 %v397
        %v616 = vpop.f32.mrb[0].mxu0
        %v617 = vadd.f32 %v313, %v616
        %v618 = vpop.f32.mrb[0].mxu0
        %619 = vmatprep.mubr.f32.mxu0 0.0
        %620 = vmatmul.mubr.f32.gmra.mrb[0].mxu0 %v400
        %v621 = vpop.f32.mrb[0].mxu0
        %v622 = vadd.f32 %v313, %v621
        %v623 = vpop.f32.mrb[0].mxu0
        %624 = vmatprep.mubr.f32.mxu0 0.0
        %625 = vmatmul.mubr.f32.gmra.mrb[0].mxu0 %v403
        %v626 = vpop.f32.mrb[0].mxu0
        %v627 = vadd.f32 %v313, %v626
        %v628 = vpop.f32.mrb[0].mxu0
        %629 = vmatprep.mubr.f32.mxu0 0.0
        %630 = vmatmul.mubr.f32.gmra.mrb[0].mxu0 %v406
        %v631 = vpop.f32.mrb[0].mxu0
        %v632 = vadd.f32 %v313, %v631
        %v633 = vpop.f32.mrb[0].mxu0
        %634 = vmatprep.mubr.f32.mxu0 0.0
        %635 = vmatmul.mubr.f32.gmra.mrb[0].mxu0 %v409
        %v636 = vpop.f32.mrb[0].mxu0
        %v637 = vadd.f32 %v313, %v636
        %v638 = vpop.f32.mrb[0].mxu0
        %639 = vdwg.mxu0
        %v640 = vmax.f32 %v482, 0.0
        %v641 = vmax.f32 %v487, 0.0
        %v642 = vmax.f32 %v492, 0.0
        %v643 = vmax.f32 %v497, 0.0
        %v644 = vmax.f32 %v502, 0.0
        %v645 = vmax.f32 %v507, 0.0
        %v646 = vmax.f32 %v512, 0.0
        %v647 = vmax.f32 %v517, 0.0
        %v648 = vmax.f32 %v522, 0.0
        %v649 = vmax.f32 %v527, 0.0
        %v650 = vmax.f32 %v532, 0.0
        %v651 = vmax.f32 %v537, 0.0
        %v652 = vmax.f32 %v542, 0.0
        %v653 = vmax.f32 %v547, 0.0
        %v654 = vmax.f32 %v552, 0.0
        %v655 = vmax.f32 %v557, 0.0
        %v656 = vmax.f32 %v562, 0.0
        %v657 = vmax.f32 %v567, 0.0
        %v658 = vmax.f32 %v572, 0.0
        %v659 = vmax.f32 %v577, 0.0
        %v660 = vmax.f32 %v582, 0.0
        %v661 = vmax.f32 %v587, 0.0
        %v662 = vmax.f32 %v592, 0.0
        %v663 = vmax.f32 %v597, 0.0
        %v664 = vmax.f32 %v602, 0.0
        %v665 = vmax.f32 %v607, 0.0
        %v666 = vmax.f32 %v612, 0.0
        %v667 = vmax.f32 %v617, 0.0
        %v668 = vmax.f32 %v622, 0.0
        %v669 = vmax.f32 %v627, 0.0
        %v670 = vmax.f32 %v632, 0.0
        %v671 = vmax.f32 %v637, 0.0
        %v672 = vld [vmem:[%s4] sm:$0xff]
        %v673 = vld [vmem:[%s4 + $0x20] sm:$0xff]
        %v674 = vld [vmem:[%s4 + $0x40] sm:$0xff]
        %v675 = vld [vmem:[%s4 + $0x60] sm:$0xff]
        %v676 = vld [vmem:[%s4 + $0x80] sm:$0xff]
        %v677 = vld [vmem:[%s4 + $0xa0] sm:$0xff]
        %v678 = vld [vmem:[%s4 + $0xc0] sm:$0xff]
        %v679 = vld [vmem:[%s4 + $0xe0] sm:$0xff]
        %v680 = vld [vmem:[%s4 + $0x100] sm:$0xff]
        %v681 = vld [vmem:[%s4 + $0x120] sm:$0xff]
        %v682 = vld [vmem:[%s4 + $0x140] sm:$0xff]
        %v683 = vld [vmem:[%s4 + $0x160] sm:$0xff]
        %v684 = vld [vmem:[%s4 + $0x180] sm:$0xff]
        %v685 = vld [vmem:[%s4 + $0x1a0] sm:$0xff]
        %v686 = vld [vmem:[%s4 + $0x1c0] sm:$0xff]
        %v687 = vld [vmem:[%s4 + $0x1e0] sm:$0xff]
        %v688 = vlaneseq
        %v689 = vshrl.u32 %v688, 7
        %v690 = vsub.s32 0, %v689
        %v691 = vrot.slane %v269, %v690
        %692 = vmatprep.subr.mxu0 0.0
        %693 = vmatpush1.msra.mxu0 %v672
        %694 = vmatprep.subr.mxu0 0.0
        %695 = vmatpush1.msra.mxu0 %v673
        %696 = vmatprep.subr.mxu0 0.0
        %697 = vmatpush1.msra.mxu0 %v674
        %698 = vmatprep.subr.mxu0 0.0
        %699 = vmatpush1.msra.mxu0 %v675
        %700 = vmatprep.subr.mxu0 0.0
        %701 = vmatpush1.msra.mxu0 %v676
        %702 = vmatprep.subr.mxu0 0.0
        %703 = vmatpush1.msra.mxu0 %v677
        %704 = vmatprep.subr.mxu0 0.0
        %705 = vmatpush1.msra.mxu0 %v678
        %706 = vmatprep.subr.mxu0 0.0
        %707 = vmatpush1.msra.mxu0 %v679
        %708 = vmatprep.subr.mxu0 0.0
        %709 = vmatpush1.msra.mxu0 %v680
        %710 = vmatprep.subr.mxu0 0.0
        %711 = vmatpush1.msra.mxu0 %v681
        %712 = vmatprep.subr.mxu0 0.0
        %713 = vmatpush1.msra.mxu0 %v682
        %714 = vmatprep.subr.mxu0 0.0
        %715 = vmatpush1.msra.mxu0 %v683
        %716 = vmatprep.subr.mxu0 0.0
        %717 = vmatpush1.msra.mxu0 %v684
        %718 = vmatprep.subr.mxu0 0.0
        %719 = vmatpush1.msra.mxu0 %v685
        %720 = vmatprep.subr.mxu0 0.0
        %721 = vmatpush1.msra.mxu0 %v686
        %722 = vmatprep.subr.mxu0 0.0
        %723 = vmatpush1.msra.mxu0 %v687
        %724 = vmatprep.subr.mxu0 0.0
        %725 = vmatpush1.msra.mxu0 0.0
        %726 = vmatprep.subr.mxu0 0.0
        %727 = vmatpush1.msra.mxu0 0.0
        %728 = vmatprep.subr.mxu0 0.0
        %729 = vmatpush1.msra.mxu0 0.0
        %730 = vmatprep.subr.mxu0 0.0
        %731 = vmatpush1.msra.mxu0 0.0
        %732 = vmatprep.subr.mxu0 0.0
        %733 = vmatpush1.msra.mxu0 0.0
        %734 = vmatprep.subr.mxu0 0.0
        %735 = vmatpush1.msra.mxu0 0.0
        %736 = vmatprep.subr.mxu0 0.0
        %737 = vmatpush1.msra.mxu0 0.0
        %738 = vmatprep.subr.mxu0 0.0
        %739 = vmatpush1.msra.mxu0 0.0
        %740 = vmatprep.subr.mxu0 0.0
        %741 = vmatpush1.msra.mxu0 0.0
        %742 = vmatprep.subr.mxu0 0.0
        %743 = vmatpush1.msra.mxu0 0.0
        %744 = vmatprep.subr.mxu0 0.0
        %745 = vmatpush1.msra.mxu0 0.0
        %746 = vmatprep.subr.mxu0 0.0
        %747 = vmatpush1.msra.mxu0 0.0
        %748 = vmatprep.subr.mxu0 0.0
        %749 = vmatpush1.msra.mxu0 0.0
        %750 = vmatprep.subr.mxu0 0.0
        %751 = vmatpush1.msra.mxu0 0.0
        %752 = vmatprep.subr.mxu0 0.0
        %753 = vmatpush1.msra.mxu0 0.0
        %754 = vmatprep.subr.mxu0 0.0
        %755 = vmatpush1.msra.mxu0 0.0
        %756 = vmatprep.mubr.f32.mxu0 0.0
        %757 = vmatmul.mubr.f32.gmra.mrb[0].mxu0 %v640
        %v758 = vpop.f32.mrb[0].mxu0
        %v759 = vadd.f32 %v691, %v758
        %v760 = vpop.f32.mrb[0].mxu0
        %761 = vmatprep.mubr.f32.mxu0 0.0
        %762 = vmatmul.mubr.f32.gmra.mrb[0].mxu0 %v641
        %v763 = vpop.f32.mrb[0].mxu0
        %v764 = vadd.f32 %v691, %v763
        %v765 = vpop.f32.mrb[0].mxu0
        %766 = vmatprep.mubr.f32.mxu0 0.0
        %767 = vmatmul.mubr.f32.gmra.mrb[0].mxu0 %v642
        %v768 = vpop.f32.mrb[0].mxu0
        %v769 = vadd.f32 %v691, %v768
        %v770 = vpop.f32.mrb[0].mxu0
        %771 = vmatprep.mubr.f32.mxu0 0.0
        %772 = vmatmul.mubr.f32.gmra.mrb[0].mxu0 %v643
        %v773 = vpop.f32.mrb[0].mxu0
        %v774 = vadd.f32 %v691, %v773
        %v775 = vpop.f32.mrb[0].mxu0
        %776 = vmatprep.mubr.f32.mxu0 0.0
        %777 = vmatmul.mubr.f32.gmra.mrb[0].mxu0 %v644
        %v778 = vpop.f32.mrb[0].mxu0
        %v779 = vadd.f32 %v691, %v778
        %v780 = vpop.f32.mrb[0].mxu0
        %781 = vmatprep.mubr.f32.mxu0 0.0
        %782 = vmatmul.mubr.f32.gmra.mrb[0].mxu0 %v645
        %v783 = vpop.f32.mrb[0].mxu0
        %v784 = vadd.f32 %v691, %v783
        %v785 = vpop.f32.mrb[0].mxu0
        %786 = vmatprep.mubr.f32.mxu0 0.0
        %787 = vmatmul.mubr.f32.gmra.mrb[0].mxu0 %v646
        %v788 = vpop.f32.mrb[0].mxu0
        %v789 = vadd.f32 %v691, %v788
        %v790 = vpop.f32.mrb[0].mxu0
        %791 = vmatprep.mubr.f32.mxu0 0.0
        %792 = vmatmul.mubr.f32.gmra.mrb[0].mxu0 %v647
        %v793 = vpop.f32.mrb[0].mxu0
        %v794 = vadd.f32 %v691, %v793
        %v795 = vpop.f32.mrb[0].mxu0
        %796 = vmatprep.mubr.f32.mxu0 0.0
        %797 = vmatmul.mubr.f32.gmra.mrb[0].mxu0 %v648
        %v798 = vpop.f32.mrb[0].mxu0
        %v799 = vadd.f32 %v691, %v798
        %v800 = vpop.f32.mrb[0].mxu0
        %801 = vmatprep.mubr.f32.mxu0 0.0
        %802 = vmatmul.mubr.f32.gmra.mrb[0].mxu0 %v649
        %v803 = vpop.f32.mrb[0].mxu0
        %v804 = vadd.f32 %v691, %v803
        %v805 = vpop.f32.mrb[0].mxu0
        %806 = vmatprep.mubr.f32.mxu0 0.0
        %807 = vmatmul.mubr.f32.gmra.mrb[0].mxu0 %v650
        %v808 = vpop.f32.mrb[0].mxu0
        %v809 = vadd.f32 %v691, %v808
        %v810 = vpop.f32.mrb[0].mxu0
        %811 = vmatprep.mubr.f32.mxu0 0.0
        %812 = vmatmul.mubr.f32.gmra.mrb[0].mxu0 %v651
        %v813 = vpop.f32.mrb[0].mxu0
        %v814 = vadd.f32 %v691, %v813
        %v815 = vpop.f32.mrb[0].mxu0
        %816 = vmatprep.mubr.f32.mxu0 0.0
        %817 = vmatmul.mubr.f32.gmra.mrb[0].mxu0 %v652
        %v818 = vpop.f32.mrb[0].mxu0
        %v819 = vadd.f32 %v691, %v818
        %v820 = vpop.f32.mrb[0].mxu0
        %821 = vmatprep.mubr.f32.mxu0 0.0
        %822 = vmatmul.mubr.f32.gmra.mrb[0].mxu0 %v653
        %v823 = vpop.f32.mrb[0].mxu0
        %v824 = vadd.f32 %v691, %v823
        %v825 = vpop.f32.mrb[0].mxu0
        %826 = vmatprep.mubr.f32.mxu0 0.0
        %827 = vmatmul.mubr.f32.gmra.mrb[0].mxu0 %v654
        %v828 = vpop.f32.mrb[0].mxu0
        %v829 = vadd.f32 %v691, %v828
        %v830 = vpop.f32.mrb[0].mxu0
        %831 = vmatprep.mubr.f32.mxu0 0.0
        %832 = vmatmul.mubr.f32.gmra.mrb[0].mxu0 %v655
        %v833 = vpop.f32.mrb[0].mxu0
        %v834 = vadd.f32 %v691, %v833
        %v835 = vpop.f32.mrb[0].mxu0
        %836 = vmatprep.mubr.f32.mxu0 0.0
        %837 = vmatmul.mubr.f32.gmra.mrb[0].mxu0 %v656
        %v838 = vpop.f32.mrb[0].mxu0
        %v839 = vadd.f32 %v691, %v838
        %v840 = vpop.f32.mrb[0].mxu0
        %841 = vmatprep.mubr.f32.mxu0 0.0
        %842 = vmatmul.mubr.f32.gmra.mrb[0].mxu0 %v657
        %v843 = vpop.f32.mrb[0].mxu0
        %v844 = vadd.f32 %v691, %v843
        %v845 = vpop.f32.mrb[0].mxu0
        %846 = vmatprep.mubr.f32.mxu0 0.0
        %847 = vmatmul.mubr.f32.gmra.mrb[0].mxu0 %v658
        %v848 = vpop.f32.mrb[0].mxu0
        %v849 = vadd.f32 %v691, %v848
        %v850 = vpop.f32.mrb[0].mxu0
        %851 = vmatprep.mubr.f32.mxu0 0.0
        %852 = vmatmul.mubr.f32.gmra.mrb[0].mxu0 %v659
        %v853 = vpop.f32.mrb[0].mxu0
        %v854 = vadd.f32 %v691, %v853
        %v855 = vpop.f32.mrb[0].mxu0
        %856 = vmatprep.mubr.f32.mxu0 0.0
        %857 = vmatmul.mubr.f32.gmra.mrb[0].mxu0 %v660
        %v858 = vpop.f32.mrb[0].mxu0
        %v859 = vadd.f32 %v691, %v858
        %v860 = vpop.f32.mrb[0].mxu0
        %861 = vmatprep.mubr.f32.mxu0 0.0
        %862 = vmatmul.mubr.f32.gmra.mrb[0].mxu0 %v661
        %v863 = vpop.f32.mrb[0].mxu0
        %v864 = vadd.f32 %v691, %v863
        %v865 = vpop.f32.mrb[0].mxu0
        %866 = vmatprep.mubr.f32.mxu0 0.0
        %867 = vmatmul.mubr.f32.gmra.mrb[0].mxu0 %v662
        %v868 = vpop.f32.mrb[0].mxu0
        %v869 = vadd.f32 %v691, %v868
        %v870 = vpop.f32.mrb[0].mxu0
        %871 = vmatprep.mubr.f32.mxu0 0.0
        %872 = vmatmul.mubr.f32.gmra.mrb[0].mxu0 %v663
        %v873 = vpop.f32.mrb[0].mxu0
        %v874 = vadd.f32 %v691, %v873
        %v875 = vpop.f32.mrb[0].mxu0
        %876 = vmatprep.mubr.f32.mxu0 0.0
        %877 = vmatmul.mubr.f32.gmra.mrb[0].mxu0 %v664
        %v878 = vpop.f32.mrb[0].mxu0
        %v879 = vadd.f32 %v691, %v878
        %v880 = vpop.f32.mrb[0].mxu0
        %881 = vmatprep.mubr.f32.mxu0 0.0
        %882 = vmatmul.mubr.f32.gmra.mrb[0].mxu0 %v665
        %v883 = vpop.f32.mrb[0].mxu0
        %v884 = vadd.f32 %v691, %v883
        %v885 = vpop.f32.mrb[0].mxu0
        %886 = vmatprep.mubr.f32.mxu0 0.0
        %887 = vmatmul.mubr.f32.gmra.mrb[0].mxu0 %v666
        %v888 = vpop.f32.mrb[0].mxu0
        %v889 = vadd.f32 %v691, %v888
        %v890 = vpop.f32.mrb[0].mxu0
        %891 = vmatprep.mubr.f32.mxu0 0.0
        %892 = vmatmul.mubr.f32.gmra.mrb[0].mxu0 %v667
        %v893 = vpop.f32.mrb[0].mxu0
        %v894 = vadd.f32 %v691, %v893
        %v895 = vpop.f32.mrb[0].mxu0
        %896 = vmatprep.mubr.f32.mxu0 0.0
        %897 = vmatmul.mubr.f32.gmra.mrb[0].mxu0 %v668
        %v898 = vpop.f32.mrb[0].mxu0
        %v899 = vadd.f32 %v691, %v898
        %v900 = vpop.f32.mrb[0].mxu0
        %901 = vmatprep.mubr.f32.mxu0 0.0
        %902 = vmatmul.mubr.f32.gmra.mrb[0].mxu0 %v669
        %v903 = vpop.f32.mrb[0].mxu0
        %v904 = vadd.f32 %v691, %v903
        %v905 = vpop.f32.mrb[0].mxu0
        %906 = vmatprep.mubr.f32.mxu0 0.0
        %907 = vmatmul.mubr.f32.gmra.mrb[0].mxu0 %v670
        %v908 = vpop.f32.mrb[0].mxu0
        %v909 = vadd.f32 %v691, %v908
        %v910 = vpop.f32.mrb[0].mxu0
        %911 = vmatprep.mubr.f32.mxu0 0.0
        %912 = vmatmul.mubr.f32.gmra.mrb[0].mxu0 %v671
        %v913 = vpop.f32.mrb[0].mxu0
        %v914 = vadd.f32 %v691, %v913
        %v915 = vpop.f32.mrb[0].mxu0
        %916 = vdwg.mxu0
        %v917 = vmax.f32 %v759, 0.0
        %v918 = vmax.f32 %v764, 0.0
        %v919 = vmax.f32 %v769, 0.0
        %v920 = vmax.f32 %v774, 0.0
        %v921 = vmax.f32 %v779, 0.0
        %v922 = vmax.f32 %v784, 0.0
        %v923 = vmax.f32 %v789, 0.0
        %v924 = vmax.f32 %v794, 0.0
        %v925 = vmax.f32 %v799, 0.0
        %v926 = vmax.f32 %v804, 0.0
        %v927 = vmax.f32 %v809, 0.0
        %v928 = vmax.f32 %v814, 0.0
        %v929 = vmax.f32 %v819, 0.0
        %v930 = vmax.f32 %v824, 0.0
        %v931 = vmax.f32 %v829, 0.0
        %v932 = vmax.f32 %v834, 0.0
        %v933 = vmax.f32 %v839, 0.0
        %v934 = vmax.f32 %v844, 0.0
        %v935 = vmax.f32 %v849, 0.0
        %v936 = vmax.f32 %v854, 0.0
        %v937 = vmax.f32 %v859, 0.0
        %v938 = vmax.f32 %v864, 0.0
        %v939 = vmax.f32 %v869, 0.0
        %v940 = vmax.f32 %v874, 0.0
        %v941 = vmax.f32 %v879, 0.0
        %v942 = vmax.f32 %v884, 0.0
        %v943 = vmax.f32 %v889, 0.0
        %v944 = vmax.f32 %v894, 0.0
        %v945 = vmax.f32 %v899, 0.0
        %v946 = vmax.f32 %v904, 0.0
        %v947 = vmax.f32 %v909, 0.0
        %v948 = vmax.f32 %v914, 0.0
        %v949 = vld [vmem:[%s4 + $0x8] sm:$0xff]
        %v950 = vld [vmem:[%s4 + $0x28] sm:$0xff]
        %v951 = vld [vmem:[%s4 + $0x48] sm:$0xff]
        %v952 = vld [vmem:[%s4 + $0x68] sm:$0xff]
        %v953 = vld [vmem:[%s4 + $0x88] sm:$0xff]
        %v954 = vld [vmem:[%s4 + $0xa8] sm:$0xff]
        %v955 = vld [vmem:[%s4 + $0xc8] sm:$0xff]
        %v956 = vld [vmem:[%s4 + $0xe8] sm:$0xff]
        %v957 = vld [vmem:[%s4 + $0x108] sm:$0xff]
        %v958 = vld [vmem:[%s4 + $0x128] sm:$0xff]
        %v959 = vld [vmem:[%s4 + $0x148] sm:$0xff]
        %v960 = vld [vmem:[%s4 + $0x168] sm:$0xff]
        %v961 = vld [vmem:[%s4 + $0x188] sm:$0xff]
        %v962 = vld [vmem:[%s4 + $0x1a8] sm:$0xff]
        %v963 = vld [vmem:[%s4 + $0x1c8] sm:$0xff]
        %v964 = vld [vmem:[%s4 + $0x1e8] sm:$0xff]
        %v965 = vlaneseq
        %v966 = vshrl.u32 %v965, 7
        %v967 = vsub.s32 0, %v966
        %v968 = vrot.slane %v270, %v967
        %969 = vmatprep.subr.mxu0 0.0
        %970 = vmatpush1.msra.mxu0 %v949
        %971 = vmatprep.subr.mxu0 0.0
        %972 = vmatpush1.msra.mxu0 %v950
        %973 = vmatprep.subr.mxu0 0.0
        %974 = vmatpush1.msra.mxu0 %v951
        %975 = vmatprep.subr.mxu0 0.0
        %976 = vmatpush1.msra.mxu0 %v952
        %977 = vmatprep.subr.mxu0 0.0
        %978 = vmatpush1.msra.mxu0 %v953
        %979 = vmatprep.subr.mxu0 0.0
        %980 = vmatpush1.msra.mxu0 %v954
        %981 = vmatprep.subr.mxu0 0.0
        %982 = vmatpush1.msra.mxu0 %v955
        %983 = vmatprep.subr.mxu0 0.0
        %984 = vmatpush1.msra.mxu0 %v956
        %985 = vmatprep.subr.mxu0 0.0
        %986 = vmatpush1.msra.mxu0 %v957
        %987 = vmatprep.subr.mxu0 0.0
        %988 = vmatpush1.msra.mxu0 %v958
        %989 = vmatprep.subr.mxu0 0.0
        %990 = vmatpush1.msra.mxu0 %v959
        %991 = vmatprep.subr.mxu0 0.0
        %992 = vmatpush1.msra.mxu0 %v960
        %993 = vmatprep.subr.mxu0 0.0
        %994 = vmatpush1.msra.mxu0 %v961
        %995 = vmatprep.subr.mxu0 0.0
        %996 = vmatpush1.msra.mxu0 %v962
        %997 = vmatprep.subr.mxu0 0.0
        %998 = vmatpush1.msra.mxu0 %v963
        %999 = vmatprep.subr.mxu0 0.0
        %1000 = vmatpush1.msra.mxu0 %v964
        %1001 = vmatprep.subr.mxu0 0.0
        %1002 = vmatpush1.msra.mxu0 0.0
        %1003 = vmatprep.subr.mxu0 0.0
        %1004 = vmatpush1.msra.mxu0 0.0
        %1005 = vmatprep.subr.mxu0 0.0
        %1006 = vmatpush1.msra.mxu0 0.0
        %1007 = vmatprep.subr.mxu0 0.0
        %1008 = vmatpush1.msra.mxu0 0.0
        %1009 = vmatprep.subr.mxu0 0.0
        %1010 = vmatpush1.msra.mxu0 0.0
        %1011 = vmatprep.subr.mxu0 0.0
        %1012 = vmatpush1.msra.mxu0 0.0
        %1013 = vmatprep.subr.mxu0 0.0
        %1014 = vmatpush1.msra.mxu0 0.0
        %1015 = vmatprep.subr.mxu0 0.0
        %1016 = vmatpush1.msra.mxu0 0.0
        %1017 = vmatprep.subr.mxu0 0.0
        %1018 = vmatpush1.msra.mxu0 0.0
        %1019 = vmatprep.subr.mxu0 0.0
        %1020 = vmatpush1.msra.mxu0 0.0
        %1021 = vmatprep.subr.mxu0 0.0
        %1022 = vmatpush1.msra.mxu0 0.0
        %1023 = vmatprep.subr.mxu0 0.0
        %1024 = vmatpush1.msra.mxu0 0.0
        %1025 = vmatprep.subr.mxu0 0.0
        %1026 = vmatpush1.msra.mxu0 0.0
        %1027 = vmatprep.subr.mxu0 0.0
        %1028 = vmatpush1.msra.mxu0 0.0
        %1029 = vmatprep.subr.mxu0 0.0
        %1030 = vmatpush1.msra.mxu0 0.0
        %1031 = vmatprep.subr.mxu0 0.0
        %1032 = vmatpush1.msra.mxu0 0.0
        %1033 = vmatprep.mubr.f32.mxu0 0.0
        %1034 = vmatmul.mubr.f32.gmra.mrb[0].mxu0 %v917
        %v1035 = vpop.f32.mrb[0].mxu0
        %v1036 = vadd.f32 %v968, %v1035
        %v1037 = vpop.f32.mrb[0].mxu0
        %1038 = vmatprep.mubr.f32.mxu0 0.0
        %1039 = vmatmul.mubr.f32.gmra.mrb[0].mxu0 %v918
        %v1040 = vpop.f32.mrb[0].mxu0
        %v1041 = vadd.f32 %v968, %v1040
        %v1042 = vpop.f32.mrb[0].mxu0
        %1043 = vmatprep.mubr.f32.mxu0 0.0
        %1044 = vmatmul.mubr.f32.gmra.mrb[0].mxu0 %v919
        %v1045 = vpop.f32.mrb[0].mxu0
        %v1046 = vadd.f32 %v968, %v1045
        %v1047 = vpop.f32.mrb[0].mxu0
        %1048 = vmatprep.mubr.f32.mxu0 0.0
        %1049 = vmatmul.mubr.f32.gmra.mrb[0].mxu0 %v920
        %v1050 = vpop.f32.mrb[0].mxu0
        %v1051 = vadd.f32 %v968, %v1050
        %v1052 = vpop.f32.mrb[0].mxu0
        %1053 = vmatprep.mubr.f32.mxu0 0.0
        %1054 = vmatmul.mubr.f32.gmra.mrb[0].mxu0 %v921
        %v1055 = vpop.f32.mrb[0].mxu0
        %v1056 = vadd.f32 %v968, %v1055
        %v1057 = vpop.f32.mrb[0].mxu0
        %1058 = vmatprep.mubr.f32.mxu0 0.0
        %1059 = vmatmul.mubr.f32.gmra.mrb[0].mxu0 %v922
        %v1060 = vpop.f32.mrb[0].mxu0
        %v1061 = vadd.f32 %v968, %v1060
        %v1062 = vpop.f32.mrb[0].mxu0
        %1063 = vmatprep.mubr.f32.mxu0 0.0
        %1064 = vmatmul.mubr.f32.gmra.mrb[0].mxu0 %v923
        %v1065 = vpop.f32.mrb[0].mxu0
        %v1066 = vadd.f32 %v968, %v1065
        %v1067 = vpop.f32.mrb[0].mxu0
        %1068 = vmatprep.mubr.f32.mxu0 0.0
        %1069 = vmatmul.mubr.f32.gmra.mrb[0].mxu0 %v924
        %v1070 = vpop.f32.mrb[0].mxu0
        %v1071 = vadd.f32 %v968, %v1070
        %v1072 = vpop.f32.mrb[0].mxu0
        %1073 = vmatprep.mubr.f32.mxu0 0.0
        %1074 = vmatmul.mubr.f32.gmra.mrb[0].mxu0 %v925
        %v1075 = vpop.f32.mrb[0].mxu0
        %v1076 = vadd.f32 %v968, %v1075
        %v1077 = vpop.f32.mrb[0].mxu0
        %1078 = vmatprep.mubr.f32.mxu0 0.0
        %1079 = vmatmul.mubr.f32.gmra.mrb[0].mxu0 %v926
        %v1080 = vpop.f32.mrb[0].mxu0
        %v1081 = vadd.f32 %v968, %v1080
        %v1082 = vpop.f32.mrb[0].mxu0
        %1083 = vmatprep.mubr.f32.mxu0 0.0
        %1084 = vmatmul.mubr.f32.gmra.mrb[0].mxu0 %v927
        %v1085 = vpop.f32.mrb[0].mxu0
        %v1086 = vadd.f32 %v968, %v1085
        %v1087 = vpop.f32.mrb[0].mxu0
        %1088 = vmatprep.mubr.f32.mxu0 0.0
        %1089 = vmatmul.mubr.f32.gmra.mrb[0].mxu0 %v928
        %v1090 = vpop.f32.mrb[0].mxu0
        %v1091 = vadd.f32 %v968, %v1090
        %v1092 = vpop.f32.mrb[0].mxu0
        %1093 = vmatprep.mubr.f32.mxu0 0.0
        %1094 = vmatmul.mubr.f32.gmra.mrb[0].mxu0 %v929
        %v1095 = vpop.f32.mrb[0].mxu0
        %v1096 = vadd.f32 %v968, %v1095
        %v1097 = vpop.f32.mrb[0].mxu0
        %1098 = vmatprep.mubr.f32.mxu0 0.0
        %1099 = vmatmul.mubr.f32.gmra.mrb[0].mxu0 %v930
        %v1100 = vpop.f32.mrb[0].mxu0
        %v1101 = vadd.f32 %v968, %v1100
        %v1102 = vpop.f32.mrb[0].mxu0
        %1103 = vmatprep.mubr.f32.mxu0 0.0
        %1104 = vmatmul.mubr.f32.gmra.mrb[0].mxu0 %v931
        %v1105 = vpop.f32.mrb[0].mxu0
        %v1106 = vadd.f32 %v968, %v1105
        %v1107 = vpop.f32.mrb[0].mxu0
        %1108 = vmatprep.mubr.f32.mxu0 0.0
        %1109 = vmatmul.mubr.f32.gmra.mrb[0].mxu0 %v932
        %v1110 = vpop.f32.mrb[0].mxu0
        %v1111 = vadd.f32 %v968, %v1110
        %v1112 = vpop.f32.mrb[0].mxu0
        %1113 = vmatprep.mubr.f32.mxu0 0.0
        %1114 = vmatmul.mubr.f32.gmra.mrb[0].mxu0 %v933
        %v1115 = vpop.f32.mrb[0].mxu0
        %v1116 = vadd.f32 %v968, %v1115
        %v1117 = vpop.f32.mrb[0].mxu0
        %1118 = vmatprep.mubr.f32.mxu0 0.0
        %1119 = vmatmul.mubr.f32.gmra.mrb[0].mxu0 %v934
        %v1120 = vpop.f32.mrb[0].mxu0
        %v1121 = vadd.f32 %v968, %v1120
        %v1122 = vpop.f32.mrb[0].mxu0
        %1123 = vmatprep.mubr.f32.mxu0 0.0
        %1124 = vmatmul.mubr.f32.gmra.mrb[0].mxu0 %v935
        %v1125 = vpop.f32.mrb[0].mxu0
        %v1126 = vadd.f32 %v968, %v1125
        %v1127 = vpop.f32.mrb[0].mxu0
        %1128 = vmatprep.mubr.f32.mxu0 0.0
        %1129 = vmatmul.mubr.f32.gmra.mrb[0].mxu0 %v936
        %v1130 = vpop.f32.mrb[0].mxu0
        %v1131 = vadd.f32 %v968, %v1130
        %v1132 = vpop.f32.mrb[0].mxu0
        %1133 = vmatprep.mubr.f32.mxu0 0.0
        %1134 = vmatmul.mubr.f32.gmra.mrb[0].mxu0 %v937
        %v1135 = vpop.f32.mrb[0].mxu0
        %v1136 = vadd.f32 %v968, %v1135
        %v1137 = vpop.f32.mrb[0].mxu0
        %1138 = vmatprep.mubr.f32.mxu0 0.0
        %1139 = vmatmul.mubr.f32.gmra.mrb[0].mxu0 %v938
        %v1140 = vpop.f32.mrb[0].mxu0
        %v1141 = vadd.f32 %v968, %v1140
        %v1142 = vpop.f32.mrb[0].mxu0
        %1143 = vmatprep.mubr.f32.mxu0 0.0
        %1144 = vmatmul.mubr.f32.gmra.mrb[0].mxu0 %v939
        %v1145 = vpop.f32.mrb[0].mxu0
        %v1146 = vadd.f32 %v968, %v1145
        %v1147 = vpop.f32.mrb[0].mxu0
        %1148 = vmatprep.mubr.f32.mxu0 0.0
        %1149 = vmatmul.mubr.f32.gmra.mrb[0].mxu0 %v940
        %v1150 = vpop.f32.mrb[0].mxu0
        %v1151 = vadd.f32 %v968, %v1150
        %v1152 = vpop.f32.mrb[0].mxu0
        %1153 = vmatprep.mubr.f32.mxu0 0.0
        %1154 = vmatmul.mubr.f32.gmra.mrb[0].mxu0 %v941
        %v1155 = vpop.f32.mrb[0].mxu0
        %v1156 = vadd.f32 %v968, %v1155
        %v1157 = vpop.f32.mrb[0].mxu0
        %1158 = vmatprep.mubr.f32.mxu0 0.0
        %1159 = vmatmul.mubr.f32.gmra.mrb[0].mxu0 %v942
        %v1160 = vpop.f32.mrb[0].mxu0
        %v1161 = vadd.f32 %v968, %v1160
        %v1162 = vpop.f32.mrb[0].mxu0
        %1163 = vmatprep.mubr.f32.mxu0 0.0
        %1164 = vmatmul.mubr.f32.gmra.mrb[0].mxu0 %v943
        %v1165 = vpop.f32.mrb[0].mxu0
        %v1166 = vadd.f32 %v968, %v1165
        %v1167 = vpop.f32.mrb[0].mxu0
        %1168 = vmatprep.mubr.f32.mxu0 0.0
        %1169 = vmatmul.mubr.f32.gmra.mrb[0].mxu0 %v944
        %v1170 = vpop.f32.mrb[0].mxu0
        %v1171 = vadd.f32 %v968, %v1170
        %v1172 = vpop.f32.mrb[0].mxu0
        %1173 = vmatprep.mubr.f32.mxu0 0.0
        %1174 = vmatmul.mubr.f32.gmra.mrb[0].mxu0 %v945
        %v1175 = vpop.f32.mrb[0].mxu0
        %v1176 = vadd.f32 %v968, %v1175
        %v1177 = vpop.f32.mrb[0].mxu0
        %1178 = vmatprep.mubr.f32.mxu0 0.0
        %1179 = vmatmul.mubr.f32.gmra.mrb[0].mxu0 %v946
        %v1180 = vpop.f32.mrb[0].mxu0
        %v1181 = vadd.f32 %v968, %v1180
        %v1182 = vpop.f32.mrb[0].mxu0
        %1183 = vmatprep.mubr.f32.mxu0 0.0
        %1184 = vmatmul.mubr.f32.gmra.mrb[0].mxu0 %v947
        %v1185 = vpop.f32.mrb[0].mxu0
        %v1186 = vadd.f32 %v968, %v1185
        %v1187 = vpop.f32.mrb[0].mxu0
        %1188 = vmatprep.mubr.f32.mxu0 0.0
        %1189 = vmatmul.mubr.f32.gmra.mrb[0].mxu0 %v948
        %v1190 = vpop.f32.mrb[0].mxu0
        %v1191 = vadd.f32 %v968, %v1190
        %v1192 = vpop.f32.mrb[0].mxu0
        %1193 = vdwg.mxu0
        %v1194 = vld [vmem:[%s1] sm:$0xff]
        %v1195 = vld [vmem:[%s1 + $0x8] sm:$0xff]
        %v1196 = vld [vmem:[%s1 + $0x10] sm:$0xff]
        %v1197 = vld [vmem:[%s1 + $0x18] sm:$0xff]
        %v1198 = vld [vmem:[%s1 + $0x20] sm:$0xff]
        %v1199 = vld [vmem:[%s1 + $0x28] sm:$0xff]
        %v1200 = vld [vmem:[%s1 + $0x30] sm:$0xff]
        %v1201 = vld [vmem:[%s1 + $0x38] sm:$0xff]
        %v1202 = vld [vmem:[%s1 + $0x40] sm:$0xff]
        %v1203 = vld [vmem:[%s1 + $0x48] sm:$0xff]
        %v1204 = vld [vmem:[%s1 + $0x50] sm:$0xff]
        %v1205 = vld [vmem:[%s1 + $0x58] sm:$0xff]
        %v1206 = vld [vmem:[%s1 + $0x60] sm:$0xff]
        %v1207 = vld [vmem:[%s1 + $0x68] sm:$0xff]
        %v1208 = vld [vmem:[%s1 + $0x70] sm:$0xff]
        %v1209 = vld [vmem:[%s1 + $0x78] sm:$0xff]
        %1210 = vmatprep.subr.mxu0 0.0
        %1211 = vmatpush1.msra.mxu0 %v1194
        %1212 = vmatprep.subr.mxu0 0.0
        %1213 = vmatpush1.msra.mxu0 %v1195
        %1214 = vmatprep.subr.mxu0 0.0
        %1215 = vmatpush1.msra.mxu0 %v1196
        %1216 = vmatprep.subr.mxu0 0.0
        %1217 = vmatpush1.msra.mxu0 %v1197
        %1218 = vmatprep.subr.mxu0 0.0
        %1219 = vmatpush1.msra.mxu0 %v1198
        %1220 = vmatprep.subr.mxu0 0.0
        %1221 = vmatpush1.msra.mxu0 %v1199
        %1222 = vmatprep.subr.mxu0 0.0
        %1223 = vmatpush1.msra.mxu0 %v1200
        %1224 = vmatprep.subr.mxu0 0.0
        %1225 = vmatpush1.msra.mxu0 %v1201
        %1226 = vmatprep.subr.mxu0 0.0
        %1227 = vmatpush1.msra.mxu0 %v1202
        %1228 = vmatprep.subr.mxu0 0.0
        %1229 = vmatpush1.msra.mxu0 %v1203
        %1230 = vmatprep.subr.mxu0 0.0
        %1231 = vmatpush1.msra.mxu0 %v1204
        %1232 = vmatprep.subr.mxu0 0.0
        %1233 = vmatpush1.msra.mxu0 %v1205
        %1234 = vmatprep.subr.mxu0 0.0
        %1235 = vmatpush1.msra.mxu0 %v1206
        %1236 = vmatprep.subr.mxu0 0.0
        %1237 = vmatpush1.msra.mxu0 %v1207
        %1238 = vmatprep.subr.mxu0 0.0
        %1239 = vmatpush1.msra.mxu0 %v1208
        %1240 = vmatprep.subr.mxu0 0.0
        %1241 = vmatpush1.msra.mxu0 %v1209
        %1242 = vmatprep.subr.mxu0 0.0
        %1243 = vmatpush1.msra.mxu0 0.0
        %1244 = vmatprep.subr.mxu0 0.0
        %1245 = vmatpush1.msra.mxu0 0.0
        %1246 = vmatprep.subr.mxu0 0.0
        %1247 = vmatpush1.msra.mxu0 0.0
        %1248 = vmatprep.subr.mxu0 0.0
        %1249 = vmatpush1.msra.mxu0 0.0
        %1250 = vmatprep.subr.mxu0 0.0
        %1251 = vmatpush1.msra.mxu0 0.0
        %1252 = vmatprep.subr.mxu0 0.0
        %1253 = vmatpush1.msra.mxu0 0.0
        %1254 = vmatprep.subr.mxu0 0.0
        %1255 = vmatpush1.msra.mxu0 0.0
        %1256 = vmatprep.subr.mxu0 0.0
        %1257 = vmatpush1.msra.mxu0 0.0
        %1258 = vmatprep.subr.mxu0 0.0
        %1259 = vmatpush1.msra.mxu0 0.0
        %1260 = vmatprep.subr.mxu0 0.0
        %1261 = vmatpush1.msra.mxu0 0.0
        %1262 = vmatprep.subr.mxu0 0.0
        %1263 = vmatpush1.msra.mxu0 0.0
        %1264 = vmatprep.subr.mxu0 0.0
        %1265 = vmatpush1.msra.mxu0 0.0
        %1266 = vmatprep.subr.mxu0 0.0
        %1267 = vmatpush1.msra.mxu0 0.0
        %1268 = vmatprep.subr.mxu0 0.0
        %1269 = vmatpush1.msra.mxu0 0.0
        %1270 = vmatprep.subr.mxu0 0.0
        %1271 = vmatpush1.msra.mxu0 0.0
        %1272 = vmatprep.subr.mxu0 0.0
        %1273 = vmatpush1.msra.mxu0 0.0
        %1274 = vmatprep.mubr.f32.mxu0 0.0
        %1275 = vmatmul.mubr.f32.gmra.mrb[0].mxu0 %v1036
        %v1276 = vpop.f32.mrb[0].mxu0
        %v1277 = vadd.f32 0.0, %v1276
        %v1278 = vpop.f32.mrb[0].mxu0
        %1279 = vmatprep.mubr.f32.mxu0 0.0
        %1280 = vmatmul.mubr.f32.gmra.mrb[0].mxu0 %v1041
        %v1281 = vpop.f32.mrb[0].mxu0
        %v1282 = vadd.f32 0.0, %v1281
        %v1283 = vpop.f32.mrb[0].mxu0
        %1284 = vmatprep.mubr.f32.mxu0 0.0
        %1285 = vmatmul.mubr.f32.gmra.mrb[0].mxu0 %v1046
        %v1286 = vpop.f32.mrb[0].mxu0
        %v1287 = vadd.f32 0.0, %v1286
        %v1288 = vpop.f32.mrb[0].mxu0
        %1289 = vmatprep.mubr.f32.mxu0 0.0
        %1290 = vmatmul.mubr.f32.gmra.mrb[0].mxu0 %v1051
        %v1291 = vpop.f32.mrb[0].mxu0
        %v1292 = vadd.f32 0.0, %v1291
        %v1293 = vpop.f32.mrb[0].mxu0
        %1294 = vmatprep.mubr.f32.mxu0 0.0
        %1295 = vmatmul.mubr.f32.gmra.mrb[0].mxu0 %v1056
        %v1296 = vpop.f32.mrb[0].mxu0
        %v1297 = vadd.f32 0.0, %v1296
        %v1298 = vpop.f32.mrb[0].mxu0
        %1299 = vmatprep.mubr.f32.mxu0 0.0
        %1300 = vmatmul.mubr.f32.gmra.mrb[0].mxu0 %v1061
        %v1301 = vpop.f32.mrb[0].mxu0
        %v1302 = vadd.f32 0.0, %v1301
        %v1303 = vpop.f32.mrb[0].mxu0
        %1304 = vmatprep.mubr.f32.mxu0 0.0
        %1305 = vmatmul.mubr.f32.gmra.mrb[0].mxu0 %v1066
        %v1306 = vpop.f32.mrb[0].mxu0
        %v1307 = vadd.f32 0.0, %v1306
        %v1308 = vpop.f32.mrb[0].mxu0
        %1309 = vmatprep.mubr.f32.mxu0 0.0
        %1310 = vmatmul.mubr.f32.gmra.mrb[0].mxu0 %v1071
        %v1311 = vpop.f32.mrb[0].mxu0
        %v1312 = vadd.f32 0.0, %v1311
        %v1313 = vpop.f32.mrb[0].mxu0
        %1314 = vmatprep.mubr.f32.mxu0 0.0
        %1315 = vmatmul.mubr.f32.gmra.mrb[0].mxu0 %v1076
        %v1316 = vpop.f32.mrb[0].mxu0
        %v1317 = vadd.f32 0.0, %v1316
        %v1318 = vpop.f32.mrb[0].mxu0
        %1319 = vmatprep.mubr.f32.mxu0 0.0
        %1320 = vmatmul.mubr.f32.gmra.mrb[0].mxu0 %v1081
        %v1321 = vpop.f32.mrb[0].mxu0
        %v1322 = vadd.f32 0.0, %v1321
        %v1323 = vpop.f32.mrb[0].mxu0
        %1324 = vmatprep.mubr.f32.mxu0 0.0
        %1325 = vmatmul.mubr.f32.gmra.mrb[0].mxu0 %v1086
        %v1326 = vpop.f32.mrb[0].mxu0
        %v1327 = vadd.f32 0.0, %v1326
        %v1328 = vpop.f32.mrb[0].mxu0
        %1329 = vmatprep.mubr.f32.mxu0 0.0
        %1330 = vmatmul.mubr.f32.gmra.mrb[0].mxu0 %v1091
        %v1331 = vpop.f32.mrb[0].mxu0
        %v1332 = vadd.f32 0.0, %v1331
        %v1333 = vpop.f32.mrb[0].mxu0
        %1334 = vmatprep.mubr.f32.mxu0 0.0
        %1335 = vmatmul.mubr.f32.gmra.mrb[0].mxu0 %v1096
        %v1336 = vpop.f32.mrb[0].mxu0
        %v1337 = vadd.f32 0.0, %v1336
        %v1338 = vpop.f32.mrb[0].mxu0
        %1339 = vmatprep.mubr.f32.mxu0 0.0
        %1340 = vmatmul.mubr.f32.gmra.mrb[0].mxu0 %v1101
        %v1341 = vpop.f32.mrb[0].mxu0
        %v1342 = vadd.f32 0.0, %v1341
        %v1343 = vpop.f32.mrb[0].mxu0
        %1344 = vmatprep.mubr.f32.mxu0 0.0
        %1345 = vmatmul.mubr.f32.gmra.mrb[0].mxu0 %v1106
        %v1346 = vpop.f32.mrb[0].mxu0
        %v1347 = vadd.f32 0.0, %v1346
        %v1348 = vpop.f32.mrb[0].mxu0
        %1349 = vmatprep.mubr.f32.mxu0 0.0
        %1350 = vmatmul.mubr.f32.gmra.mrb[0].mxu0 %v1111
        %v1351 = vpop.f32.mrb[0].mxu0
        %v1352 = vadd.f32 0.0, %v1351
        %v1353 = vpop.f32.mrb[0].mxu0
        %1354 = vmatprep.mubr.f32.mxu0 0.0
        %1355 = vmatmul.mubr.f32.gmra.mrb[0].mxu0 %v1116
        %v1356 = vpop.f32.mrb[0].mxu0
        %v1357 = vadd.f32 0.0, %v1356
        %v1358 = vpop.f32.mrb[0].mxu0
        %1359 = vmatprep.mubr.f32.mxu0 0.0
        %1360 = vmatmul.mubr.f32.gmra.mrb[0].mxu0 %v1121
        %v1361 = vpop.f32.mrb[0].mxu0
        %v1362 = vadd.f32 0.0, %v1361
        %v1363 = vpop.f32.mrb[0].mxu0
        %1364 = vmatprep.mubr.f32.mxu0 0.0
        %1365 = vmatmul.mubr.f32.gmra.mrb[0].mxu0 %v1126
        %v1366 = vpop.f32.mrb[0].mxu0
        %v1367 = vadd.f32 0.0, %v1366
        %v1368 = vpop.f32.mrb[0].mxu0
        %1369 = vmatprep.mubr.f32.mxu0 0.0
        %1370 = vmatmul.mubr.f32.gmra.mrb[0].mxu0 %v1131
        %v1371 = vpop.f32.mrb[0].mxu0
        %v1372 = vadd.f32 0.0, %v1371
        %v1373 = vpop.f32.mrb[0].mxu0
        %1374 = vmatprep.mubr.f32.mxu0 0.0
        %1375 = vmatmul.mubr.f32.gmra.mrb[0].mxu0 %v1136
        %v1376 = vpop.f32.mrb[0].mxu0
        %v1377 = vadd.f32 0.0, %v1376
        %v1378 = vpop.f32.mrb[0].mxu0
        %1379 = vmatprep.mubr.f32.mxu0 0.0
        %1380 = vmatmul.mubr.f32.gmra.mrb[0].mxu0 %v1141
        %v1381 = vpop.f32.mrb[0].mxu0
        %v1382 = vadd.f32 0.0, %v1381
        %v1383 = vpop.f32.mrb[0].mxu0
        %1384 = vmatprep.mubr.f32.mxu0 0.0
        %1385 = vmatmul.mubr.f32.gmra.mrb[0].mxu0 %v1146
        %v1386 = vpop.f32.mrb[0].mxu0
        %v1387 = vadd.f32 0.0, %v1386
        %v1388 = vpop.f32.mrb[0].mxu0
        %1389 = vmatprep.mubr.f32.mxu0 0.0
        %1390 = vmatmul.mubr.f32.gmra.mrb[0].mxu0 %v1151
        %v1391 = vpop.f32.mrb[0].mxu0
        %v1392 = vadd.f32 0.0, %v1391
        %v1393 = vpop.f32.mrb[0].mxu0
        %1394 = vmatprep.mubr.f32.mxu0 0.0
        %1395 = vmatmul.mubr.f32.gmra.mrb[0].mxu0 %v1156
        %v1396 = vpop.f32.mrb[0].mxu0
        %v1397 = vadd.f32 0.0, %v1396
        %v1398 = vpop.f32.mrb[0].mxu0
        %1399 = vmatprep.mubr.f32.mxu0 0.0
        %1400 = vmatmul.mubr.f32.gmra.mrb[0].mxu0 %v1161
        %v1401 = vpop.f32.mrb[0].mxu0
        %v1402 = vadd.f32 0.0, %v1401
        %v1403 = vpop.f32.mrb[0].mxu0
        %1404 = vmatprep.mubr.f32.mxu0 0.0
        %1405 = vmatmul.mubr.f32.gmra.mrb[0].mxu0 %v1166
        %v1406 = vpop.f32.mrb[0].mxu0
        %v1407 = vadd.f32 0.0, %v1406
        %v1408 = vpop.f32.mrb[0].mxu0
        %1409 = vmatprep.mubr.f32.mxu0 0.0
        %1410 = vmatmul.mubr.f32.gmra.mrb[0].mxu0 %v1171
        %v1411 = vpop.f32.mrb[0].mxu0
        %v1412 = vadd.f32 0.0, %v1411
        %v1413 = vpop.f32.mrb[0].mxu0
        %1414 = vmatprep.mubr.f32.mxu0 0.0
        %1415 = vmatmul.mubr.f32.gmra.mrb[0].mxu0 %v1176
        %v1416 = vpop.f32.mrb[0].mxu0
        %v1417 = vadd.f32 0.0, %v1416
        %v1418 = vpop.f32.mrb[0].mxu0
        %1419 = vmatprep.mubr.f32.mxu0 0.0
        %1420 = vmatmul.mubr.f32.gmra.mrb[0].mxu0 %v1181
        %v1421 = vpop.f32.mrb[0].mxu0
        %v1422 = vadd.f32 0.0, %v1421
        %v1423 = vpop.f32.mrb[0].mxu0
        %1424 = vmatprep.mubr.f32.mxu0 0.0
        %1425 = vmatmul.mubr.f32.gmra.mrb[0].mxu0 %v1186
        %v1426 = vpop.f32.mrb[0].mxu0
        %v1427 = vadd.f32 0.0, %v1426
        %v1428 = vpop.f32.mrb[0].mxu0
        %1429 = vmatprep.mubr.f32.mxu0 0.0
        %1430 = vmatmul.mubr.f32.gmra.mrb[0].mxu0 %v1191
        %v1431 = vpop.f32.mrb[0].mxu0
        %v1432 = vadd.f32 0.0, %v1431
        %v1433 = vpop.f32.mrb[0].mxu0
        %1434 = vdwg.mxu0
        %1435 = vmax.xlane.f32.xlu0 %v1277
        %v1436 = vpop.xlane.xlu0 %1435
        %1437 = vmax.xlane.f32.xlu0 %v1282
        %v1438 = vpop.xlane.xlu0 %1437
        %1439 = vmax.xlane.f32.xlu0 %v1287
        %v1440 = vpop.xlane.xlu0 %1439
        %1441 = vmax.xlane.f32.xlu0 %v1292
        %v1442 = vpop.xlane.xlu0 %1441
        %1443 = vmax.xlane.f32.xlu0 %v1297
        %v1444 = vpop.xlane.xlu0 %1443
        %1445 = vmax.xlane.f32.xlu0 %v1302
        %v1446 = vpop.xlane.xlu0 %1445
        %1447 = vmax.xlane.f32.xlu0 %v1307
        %v1448 = vpop.xlane.xlu0 %1447
        %1449 = vmax.xlane.f32.xlu0 %v1312
        %v1450 = vpop.xlane.xlu0 %1449
        %1451 = vmax.xlane.f32.xlu0 %v1317
        %v1452 = vpop.xlane.xlu0 %1451
        %1453 = vmax.xlane.f32.xlu0 %v1322
        %v1454 = vpop.xlane.xlu0 %1453
        %1455 = vmax.xlane.f32.xlu0 %v1327
        %v1456 = vpop.xlane.xlu0 %1455
        %1457 = vmax.xlane.f32.xlu0 %v1332
        %v1458 = vpop.xlane.xlu0 %1457
        %1459 = vmax.xlane.f32.xlu0 %v1337
        %v1460 = vpop.xlane.xlu0 %1459
        %1461 = vmax.xlane.f32.xlu0 %v1342
        %v1462 = vpop.xlane.xlu0 %1461
        %1463 = vmax.xlane.f32.xlu0 %v1347
        %v1464 = vpop.xlane.xlu0 %1463
        %1465 = vmax.xlane.f32.xlu0 %v1352
        %v1466 = vpop.xlane.xlu0 %1465
        %1467 = vmax.xlane.f32.xlu0 %v1357
        %v1468 = vpop.xlane.xlu0 %1467
        %1469 = vmax.xlane.f32.xlu0 %v1362
        %v1470 = vpop.xlane.xlu0 %1469
        %1471 = vmax.xlane.f32.xlu0 %v1367
        %v1472 = vpop.xlane.xlu0 %1471
        %1473 = vmax.xlane.f32.xlu0 %v1372
        %v1474 = vpop.xlane.xlu0 %1473
        %1475 = vmax.xlane.f32.xlu0 %v1377
        %v1476 = vpop.xlane.xlu0 %1475
        %1477 = vmax.xlane.f32.xlu0 %v1382
        %v1478 = vpop.xlane.xlu0 %1477
        %1479 = vmax.xlane.f32.xlu0 %v1387
        %v1480 = vpop.xlane.xlu0 %1479
        %1481 = vmax.xlane.f32.xlu0 %v1392
        %v1482 = vpop.xlane.xlu0 %1481
        %1483 = vmax.xlane.f32.xlu0 %v1397
        %v1484 = vpop.xlane.xlu0 %1483
        %1485 = vmax.xlane.f32.xlu0 %v1402
        %v1486 = vpop.xlane.xlu0 %1485
        %1487 = vmax.xlane.f32.xlu0 %v1407
        %v1488 = vpop.xlane.xlu0 %1487
        %1489 = vmax.xlane.f32.xlu0 %v1412
        %v1490 = vpop.xlane.xlu0 %1489
        %1491 = vmax.xlane.f32.xlu0 %v1417
        %v1492 = vpop.xlane.xlu0 %1491
        %1493 = vmax.xlane.f32.xlu0 %v1422
        %v1494 = vpop.xlane.xlu0 %1493
        %1495 = vmax.xlane.f32.xlu0 %v1427
        %v1496 = vpop.xlane.xlu0 %1495
        %1497 = vmax.xlane.f32.xlu0 %v1432
        %v1498 = vpop.xlane.xlu0 %1497
        %v1499 = vsub.f32 %v1277, %v1436
        %v1500 = vsub.f32 %v1282, %v1438
        %v1501 = vsub.f32 %v1287, %v1440
        %v1502 = vsub.f32 %v1292, %v1442
        %v1503 = vsub.f32 %v1297, %v1444
        %v1504 = vsub.f32 %v1302, %v1446
        %v1505 = vsub.f32 %v1307, %v1448
        %v1506 = vsub.f32 %v1312, %v1450
        %v1507 = vsub.f32 %v1317, %v1452
        %v1508 = vsub.f32 %v1322, %v1454
        %v1509 = vsub.f32 %v1327, %v1456
        %v1510 = vsub.f32 %v1332, %v1458
        %v1511 = vsub.f32 %v1337, %v1460
        %v1512 = vsub.f32 %v1342, %v1462
        %v1513 = vsub.f32 %v1347, %v1464
        %v1514 = vsub.f32 %v1352, %v1466
        %v1515 = vsub.f32 %v1357, %v1468
        %v1516 = vsub.f32 %v1362, %v1470
        %v1517 = vsub.f32 %v1367, %v1472
        %v1518 = vsub.f32 %v1372, %v1474
        %v1519 = vsub.f32 %v1377, %v1476
        %v1520 = vsub.f32 %v1382, %v1478
        %v1521 = vsub.f32 %v1387, %v1480
        %v1522 = vsub.f32 %v1392, %v1482
        %v1523 = vsub.f32 %v1397, %v1484
        %v1524 = vsub.f32 %v1402, %v1486
        %v1525 = vsub.f32 %v1407, %v1488
        %v1526 = vsub.f32 %v1412, %v1490
        %v1527 = vsub.f32 %v1417, %v1492
        %v1528 = vsub.f32 %v1422, %v1494
        %v1529 = vsub.f32 %v1427, %v1496
        %v1530 = vsub.f32 %v1432, %v1498
        %v1531 = vmul.f32 %v1499, 1.442695
        %v1532 = vpow.pop %v1531
        %v1533 = vmul.f32 %v1500, 1.442695
        %v1534 = vpow.pop %v1533
        %v1535 = vmul.f32 %v1501, 1.442695
        %v1536 = vpow.pop %v1535
        %v1537 = vmul.f32 %v1502, 1.442695
        %v1538 = vpow.pop %v1537
        %v1539 = vmul.f32 %v1503, 1.442695
        %v1540 = vpow.pop %v1539
        %v1541 = vmul.f32 %v1504, 1.442695
        %v1542 = vpow.pop %v1541
        %v1543 = vmul.f32 %v1505, 1.442695
        %v1544 = vpow.pop %v1543
        %v1545 = vmul.f32 %v1506, 1.442695
        %v1546 = vpow.pop %v1545
        %v1547 = vmul.f32 %v1507, 1.442695
        %v1548 = vpow.pop %v1547
        %v1549 = vmul.f32 %v1508, 1.442695
        %v1550 = vpow.pop %v1549
        %v1551 = vmul.f32 %v1509, 1.442695
        %v1552 = vpow.pop %v1551
        %v1553 = vmul.f32 %v1510, 1.442695
        %v1554 = vpow.pop %v1553
        %v1555 = vmul.f32 %v1511, 1.442695
        %v1556 = vpow.pop %v1555
        %v1557 = vmul.f32 %v1512, 1.442695
        %v1558 = vpow.pop %v1557
        %v1559 = vmul.f32 %v1513, 1.442695
        %v1560 = vpow.pop %v1559
        %v1561 = vmul.f32 %v1514, 1.442695
        %v1562 = vpow.pop %v1561
        %v1563 = vmul.f32 %v1515, 1.442695
        %v1564 = vpow.pop %v1563
        %v1565 = vmul.f32 %v1516, 1.442695
        %v1566 = vpow.pop %v1565
        %v1567 = vmul.f32 %v1517, 1.442695
        %v1568 = vpow.pop %v1567
        %v1569 = vmul.f32 %v1518, 1.442695
        %v1570 = vpow.pop %v1569
        %v1571 = vmul.f32 %v1519, 1.442695
        %v1572 = vpow.pop %v1571
        %v1573 = vmul.f32 %v1520, 1.442695
        %v1574 = vpow.pop %v1573
        %v1575 = vmul.f32 %v1521, 1.442695
        %v1576 = vpow.pop %v1575
        %v1577 = vmul.f32 %v1522, 1.442695
        %v1578 = vpow.pop %v1577
        %v1579 = vmul.f32 %v1523, 1.442695
        %v1580 = vpow.pop %v1579
        %v1581 = vmul.f32 %v1524, 1.442695
        %v1582 = vpow.pop %v1581
        %v1583 = vmul.f32 %v1525, 1.442695
        %v1584 = vpow.pop %v1583
        %v1585 = vmul.f32 %v1526, 1.442695
        %v1586 = vpow.pop %v1585
        %v1587 = vmul.f32 %v1527, 1.442695
        %v1588 = vpow.pop %v1587
        %v1589 = vmul.f32 %v1528, 1.442695
        %v1590 = vpow.pop %v1589
        %v1591 = vmul.f32 %v1529, 1.442695
        %v1592 = vpow.pop %v1591
        %v1593 = vmul.f32 %v1530, 1.442695
        %v1594 = vpow.pop %v1593
        %v1595 = vld [vmem:[#allocation2] sm:$0xff]
        %v1596 = vld [vmem:[#allocation2 + $0x8] sm:$0xff]
        %v1597 = vld [vmem:[#allocation2 + $0x10] sm:$0xff]
        %v1598 = vld [vmem:[#allocation2 + $0x18] sm:$0xff]
        %v1599 = vld [vmem:[#allocation2 + $0x20] sm:$0xff]
        %v1600 = vld [vmem:[#allocation2 + $0x28] sm:$0xff]
        %v1601 = vld [vmem:[#allocation2 + $0x30] sm:$0xff]
        %v1602 = vld [vmem:[#allocation2 + $0x38] sm:$0xff]
        %v1603 = vld [vmem:[#allocation2 + $0x40] sm:$0xff]
        %v1604 = vld [vmem:[#allocation2 + $0x48] sm:$0xff]
        %v1605 = vld [vmem:[#allocation2 + $0x50] sm:$0xff]
        %v1606 = vld [vmem:[#allocation2 + $0x58] sm:$0xff]
        %v1607 = vld [vmem:[#allocation2 + $0x60] sm:$0xff]
        %v1608 = vld [vmem:[#allocation2 + $0x68] sm:$0xff]
        %v1609 = vld [vmem:[#allocation2 + $0x70] sm:$0xff]
        %v1610 = vld [vmem:[#allocation2 + $0x78] sm:$0xff]
        %1611 = vmatprep.subr.mxu0 0.0
        %1612 = vmatpush1.msra.mxu0 %v1595
        %1613 = vmatprep.subr.mxu0 0.0
        %1614 = vmatpush1.msra.mxu0 %v1596
        %1615 = vmatprep.subr.mxu0 0.0
        %1616 = vmatpush1.msra.mxu0 %v1597
        %1617 = vmatprep.subr.mxu0 0.0
        %1618 = vmatpush1.msra.mxu0 %v1598
        %1619 = vmatprep.subr.mxu0 0.0
        %1620 = vmatpush1.msra.mxu0 %v1599
        %1621 = vmatprep.subr.mxu0 0.0
        %1622 = vmatpush1.msra.mxu0 %v1600
        %1623 = vmatprep.subr.mxu0 0.0
        %1624 = vmatpush1.msra.mxu0 %v1601
        %1625 = vmatprep.subr.mxu0 0.0
        %1626 = vmatpush1.msra.mxu0 %v1602
        %1627 = vmatprep.subr.mxu0 0.0
        %1628 = vmatpush1.msra.mxu0 %v1603
        %1629 = vmatprep.subr.mxu0 0.0
        %1630 = vmatpush1.msra.mxu0 %v1604
        %1631 = vmatprep.subr.mxu0 0.0
        %1632 = vmatpush1.msra.mxu0 %v1605
        %1633 = vmatprep.subr.mxu0 0.0
        %1634 = vmatpush1.msra.mxu0 %v1606
        %1635 = vmatprep.subr.mxu0 0.0
        %1636 = vmatpush1.msra.mxu0 %v1607
        %1637 = vmatprep.subr.mxu0 0.0
        %1638 = vmatpush1.msra.mxu0 %v1608
        %1639 = vmatprep.subr.mxu0 0.0
        %1640 = vmatpush1.msra.mxu0 %v1609
        %1641 = vmatprep.subr.mxu0 0.0
        %1642 = vmatpush1.msra.mxu0 %v1610
        %1643 = vmatprep.subr.mxu0 0.0
        %1644 = vmatpush1.msra.mxu0 0.0
        %1645 = vmatprep.subr.mxu0 0.0
        %1646 = vmatpush1.msra.mxu0 0.0
        %1647 = vmatprep.subr.mxu0 0.0
        %1648 = vmatpush1.msra.mxu0 0.0
        %1649 = vmatprep.subr.mxu0 0.0
        %1650 = vmatpush1.msra.mxu0 0.0
        %1651 = vmatprep.subr.mxu0 0.0
        %1652 = vmatpush1.msra.mxu0 0.0
        %1653 = vmatprep.subr.mxu0 0.0
        %1654 = vmatpush1.msra.mxu0 0.0
        %1655 = vmatprep.subr.mxu0 0.0
        %1656 = vmatpush1.msra.mxu0 0.0
        %1657 = vmatprep.subr.mxu0 0.0
        %1658 = vmatpush1.msra.mxu0 0.0
        %1659 = vmatprep.subr.mxu0 0.0
        %1660 = vmatpush1.msra.mxu0 0.0
        %1661 = vmatprep.subr.mxu0 0.0
        %1662 = vmatpush1.msra.mxu0 0.0
        %1663 = vmatprep.subr.mxu0 0.0
        %1664 = vmatpush1.msra.mxu0 0.0
        %1665 = vmatprep.subr.mxu0 0.0
        %1666 = vmatpush1.msra.mxu0 0.0
        %1667 = vmatprep.subr.mxu0 0.0
        %1668 = vmatpush1.msra.mxu0 0.0
        %1669 = vmatprep.subr.mxu0 0.0
        %1670 = vmatpush1.msra.mxu0 0.0
        %1671 = vmatprep.subr.mxu0 0.0
        %1672 = vmatpush1.msra.mxu0 0.0
        %1673 = vmatprep.subr.mxu0 0.0
        %1674 = vmatpush1.msra.mxu0 0.0
        %1675 = vmatprep.mubr.f32.mxu0 0.0
        %1676 = vmatmul.mubr.f32.gmra.mrb[0].mxu0 %v1532
        %v1677 = vpop.f32.mrb[0].mxu0
        %v1678 = vadd.f32 0.0, %v1677
        %v1679 = vpop.f32.mrb[0].mxu0
        %1680 = vmatprep.mubr.f32.mxu0 0.0
        %1681 = vmatmul.mubr.f32.gmra.mrb[0].mxu0 %v1534
        %v1682 = vpop.f32.mrb[0].mxu0
        %v1683 = vadd.f32 0.0, %v1682
        %v1684 = vpop.f32.mrb[0].mxu0
        %1685 = vmatprep.mubr.f32.mxu0 0.0
        %1686 = vmatmul.mubr.f32.gmra.mrb[0].mxu0 %v1536
        %v1687 = vpop.f32.mrb[0].mxu0
        %v1688 = vadd.f32 0.0, %v1687
        %v1689 = vpop.f32.mrb[0].mxu0
        %1690 = vmatprep.mubr.f32.mxu0 0.0
        %1691 = vmatmul.mubr.f32.gmra.mrb[0].mxu0 %v1538
        %v1692 = vpop.f32.mrb[0].mxu0
        %v1693 = vadd.f32 0.0, %v1692
        %v1694 = vpop.f32.mrb[0].mxu0
        %1695 = vmatprep.mubr.f32.mxu0 0.0
        %1696 = vmatmul.mubr.f32.gmra.mrb[0].mxu0 %v1540
        %v1697 = vpop.f32.mrb[0].mxu0
        %v1698 = vadd.f32 0.0, %v1697
        %v1699 = vpop.f32.mrb[0].mxu0
        %1700 = vmatprep.mubr.f32.mxu0 0.0
        %1701 = vmatmul.mubr.f32.gmra.mrb[0].mxu0 %v1542
        %v1702 = vpop.f32.mrb[0].mxu0
        %v1703 = vadd.f32 0.0, %v1702
        %v1704 = vpop.f32.mrb[0].mxu0
        %1705 = vmatprep.mubr.f32.mxu0 0.0
        %1706 = vmatmul.mubr.f32.gmra.mrb[0].mxu0 %v1544
        %v1707 = vpop.f32.mrb[0].mxu0
        %v1708 = vadd.f32 0.0, %v1707
        %v1709 = vpop.f32.mrb[0].mxu0
        %1710 = vmatprep.mubr.f32.mxu0 0.0
        %1711 = vmatmul.mubr.f32.gmra.mrb[0].mxu0 %v1546
        %v1712 = vpop.f32.mrb[0].mxu0
        %v1713 = vadd.f32 0.0, %v1712
        %v1714 = vpop.f32.mrb[0].mxu0
        %1715 = vmatprep.mubr.f32.mxu0 0.0
        %1716 = vmatmul.mubr.f32.gmra.mrb[0].mxu0 %v1548
        %v1717 = vpop.f32.mrb[0].mxu0
        %v1718 = vadd.f32 0.0, %v1717
        %v1719 = vpop.f32.mrb[0].mxu0
        %1720 = vmatprep.mubr.f32.mxu0 0.0
        %1721 = vmatmul.mubr.f32.gmra.mrb[0].mxu0 %v1550
        %v1722 = vpop.f32.mrb[0].mxu0
        %v1723 = vadd.f32 0.0, %v1722
        %v1724 = vpop.f32.mrb[0].mxu0
        %1725 = vmatprep.mubr.f32.mxu0 0.0
        %1726 = vmatmul.mubr.f32.gmra.mrb[0].mxu0 %v1552
        %v1727 = vpop.f32.mrb[0].mxu0
        %v1728 = vadd.f32 0.0, %v1727
        %v1729 = vpop.f32.mrb[0].mxu0
        %1730 = vmatprep.mubr.f32.mxu0 0.0
        %1731 = vmatmul.mubr.f32.gmra.mrb[0].mxu0 %v1554
        %v1732 = vpop.f32.mrb[0].mxu0
        %v1733 = vadd.f32 0.0, %v1732
        %v1734 = vpop.f32.mrb[0].mxu0
        %1735 = vmatprep.mubr.f32.mxu0 0.0
        %1736 = vmatmul.mubr.f32.gmra.mrb[0].mxu0 %v1556
        %v1737 = vpop.f32.mrb[0].mxu0
        %v1738 = vadd.f32 0.0, %v1737
        %v1739 = vpop.f32.mrb[0].mxu0
        %1740 = vmatprep.mubr.f32.mxu0 0.0
        %1741 = vmatmul.mubr.f32.gmra.mrb[0].mxu0 %v1558
        %v1742 = vpop.f32.mrb[0].mxu0
        %v1743 = vadd.f32 0.0, %v1742
        %v1744 = vpop.f32.mrb[0].mxu0
        %1745 = vmatprep.mubr.f32.mxu0 0.0
        %1746 = vmatmul.mubr.f32.gmra.mrb[0].mxu0 %v1560
        %v1747 = vpop.f32.mrb[0].mxu0
        %v1748 = vadd.f32 0.0, %v1747
        %v1749 = vpop.f32.mrb[0].mxu0
        %1750 = vmatprep.mubr.f32.mxu0 0.0
        %1751 = vmatmul.mubr.f32.gmra.mrb[0].mxu0 %v1562
        %v1752 = vpop.f32.mrb[0].mxu0
        %v1753 = vadd.f32 0.0, %v1752
        %v1754 = vpop.f32.mrb[0].mxu0
        %1755 = vmatprep.mubr.f32.mxu0 0.0
        %1756 = vmatmul.mubr.f32.gmra.mrb[0].mxu0 %v1564
        %v1757 = vpop.f32.mrb[0].mxu0
        %v1758 = vadd.f32 0.0, %v1757
        %v1759 = vpop.f32.mrb[0].mxu0
        %1760 = vmatprep.mubr.f32.mxu0 0.0
        %1761 = vmatmul.mubr.f32.gmra.mrb[0].mxu0 %v1566
        %v1762 = vpop.f32.mrb[0].mxu0
        %v1763 = vadd.f32 0.0, %v1762
        %v1764 = vpop.f32.mrb[0].mxu0
        %1765 = vmatprep.mubr.f32.mxu0 0.0
        %1766 = vmatmul.mubr.f32.gmra.mrb[0].mxu0 %v1568
        %v1767 = vpop.f32.mrb[0].mxu0
        %v1768 = vadd.f32 0.0, %v1767
        %v1769 = vpop.f32.mrb[0].mxu0
        %1770 = vmatprep.mubr.f32.mxu0 0.0
        %1771 = vmatmul.mubr.f32.gmra.mrb[0].mxu0 %v1570
        %v1772 = vpop.f32.mrb[0].mxu0
        %v1773 = vadd.f32 0.0, %v1772
        %v1774 = vpop.f32.mrb[0].mxu0
        %1775 = vmatprep.mubr.f32.mxu0 0.0
        %1776 = vmatmul.mubr.f32.gmra.mrb[0].mxu0 %v1572
        %v1777 = vpop.f32.mrb[0].mxu0
        %v1778 = vadd.f32 0.0, %v1777
        %v1779 = vpop.f32.mrb[0].mxu0
        %1780 = vmatprep.mubr.f32.mxu0 0.0
        %1781 = vmatmul.mubr.f32.gmra.mrb[0].mxu0 %v1574
        %v1782 = vpop.f32.mrb[0].mxu0
        %v1783 = vadd.f32 0.0, %v1782
        %v1784 = vpop.f32.mrb[0].mxu0
        %1785 = vmatprep.mubr.f32.mxu0 0.0
        %1786 = vmatmul.mubr.f32.gmra.mrb[0].mxu0 %v1576
        %v1787 = vpop.f32.mrb[0].mxu0
        %v1788 = vadd.f32 0.0, %v1787
        %v1789 = vpop.f32.mrb[0].mxu0
        %1790 = vmatprep.mubr.f32.mxu0 0.0
        %1791 = vmatmul.mubr.f32.gmra.mrb[0].mxu0 %v1578
        %v1792 = vpop.f32.mrb[0].mxu0
        %v1793 = vadd.f32 0.0, %v1792
        %v1794 = vpop.f32.mrb[0].mxu0
        %1795 = vmatprep.mubr.f32.mxu0 0.0
        %1796 = vmatmul.mubr.f32.gmra.mrb[0].mxu0 %v1580
        %v1797 = vpop.f32.mrb[0].mxu0
        %v1798 = vadd.f32 0.0, %v1797
        %v1799 = vpop.f32.mrb[0].mxu0
        %1800 = vmatprep.mubr.f32.mxu0 0.0
        %1801 = vmatmul.mubr.f32.gmra.mrb[0].mxu0 %v1582
        %v1802 = vpop.f32.mrb[0].mxu0
        %v1803 = vadd.f32 0.0, %v1802
        %v1804 = vpop.f32.mrb[0].mxu0
        %1805 = vmatprep.mubr.f32.mxu0 0.0
        %1806 = vmatmul.mubr.f32.gmra.mrb[0].mxu0 %v1584
        %v1807 = vpop.f32.mrb[0].mxu0
        %v1808 = vadd.f32 0.0, %v1807
        %v1809 = vpop.f32.mrb[0].mxu0
        %1810 = vmatprep.mubr.f32.mxu0 0.0
        %1811 = vmatmul.mubr.f32.gmra.mrb[0].mxu0 %v1586
        %v1812 = vpop.f32.mrb[0].mxu0
        %v1813 = vadd.f32 0.0, %v1812
        %v1814 = vpop.f32.mrb[0].mxu0
        %1815 = vmatprep.mubr.f32.mxu0 0.0
        %1816 = vmatmul.mubr.f32.gmra.mrb[0].mxu0 %v1588
        %v1817 = vpop.f32.mrb[0].mxu0
        %v1818 = vadd.f32 0.0, %v1817
        %v1819 = vpop.f32.mrb[0].mxu0
        %1820 = vmatprep.mubr.f32.mxu0 0.0
        %1821 = vmatmul.mubr.f32.gmra.mrb[0].mxu0 %v1590
        %v1822 = vpop.f32.mrb[0].mxu0
        %v1823 = vadd.f32 0.0, %v1822
        %v1824 = vpop.f32.mrb[0].mxu0
        %1825 = vmatprep.mubr.f32.mxu0 0.0
        %1826 = vmatmul.mubr.f32.gmra.mrb[0].mxu0 %v1592
        %v1827 = vpop.f32.mrb[0].mxu0
        %v1828 = vadd.f32 0.0, %v1827
        %v1829 = vpop.f32.mrb[0].mxu0
        %1830 = vmatprep.mubr.f32.mxu0 0.0
        %1831 = vmatmul.mubr.f32.gmra.mrb[0].mxu0 %v1594
        %v1832 = vpop.f32.mrb[0].mxu0
        %v1833 = vadd.f32 0.0, %v1832
        %v1834 = vpop.f32.mrb[0].mxu0
        %1835 = vdwg.mxu0
        %v1836 = vrcp.pop %v1678
        %v1837 = vrcp.pop %v1683
        %v1838 = vrcp.pop %v1688
        %v1839 = vrcp.pop %v1693
        %v1840 = vrcp.pop %v1698
        %v1841 = vrcp.pop %v1703
        %v1842 = vrcp.pop %v1708
        %v1843 = vrcp.pop %v1713
        %v1844 = vrcp.pop %v1718
        %v1845 = vrcp.pop %v1723
        %v1846 = vrcp.pop %v1728
        %v1847 = vrcp.pop %v1733
        %v1848 = vrcp.pop %v1738
        %v1849 = vrcp.pop %v1743
        %v1850 = vrcp.pop %v1748
        %v1851 = vrcp.pop %v1753
        %v1852 = vrcp.pop %v1758
        %v1853 = vrcp.pop %v1763
        %v1854 = vrcp.pop %v1768
        %v1855 = vrcp.pop %v1773
        %v1856 = vrcp.pop %v1778
        %v1857 = vrcp.pop %v1783
        %v1858 = vrcp.pop %v1788
        %v1859 = vrcp.pop %v1793
        %v1860 = vrcp.pop %v1798
        %v1861 = vrcp.pop %v1803
        %v1862 = vrcp.pop %v1808
        %v1863 = vrcp.pop %v1813
        %v1864 = vrcp.pop %v1818
        %v1865 = vrcp.pop %v1823
        %v1866 = vrcp.pop %v1828
        %v1867 = vrcp.pop %v1833
        %v1868 = vmul.f32 %v1532, %v1836
        %v1869 = vmul.f32 %v1534, %v1837
        %v1870 = vmul.f32 %v1536, %v1838
        %v1871 = vmul.f32 %v1538, %v1839
        %v1872 = vmul.f32 %v1540, %v1840
        %v1873 = vmul.f32 %v1542, %v1841
        %v1874 = vmul.f32 %v1544, %v1842
        %v1875 = vmul.f32 %v1546, %v1843
        %v1876 = vmul.f32 %v1548, %v1844
        %v1877 = vmul.f32 %v1550, %v1845
        %v1878 = vmul.f32 %v1552, %v1846
        %v1879 = vmul.f32 %v1554, %v1847
        %v1880 = vmul.f32 %v1556, %v1848
        %v1881 = vmul.f32 %v1558, %v1849
        %v1882 = vmul.f32 %v1560, %v1850
        %v1883 = vmul.f32 %v1562, %v1851
        %v1884 = vmul.f32 %v1564, %v1852
        %v1885 = vmul.f32 %v1566, %v1853
        %v1886 = vmul.f32 %v1568, %v1854
        %v1887 = vmul.f32 %v1570, %v1855
        %v1888 = vmul.f32 %v1572, %v1856
        %v1889 = vmul.f32 %v1574, %v1857
        %v1890 = vmul.f32 %v1576, %v1858
        %v1891 = vmul.f32 %v1578, %v1859
        %v1892 = vmul.f32 %v1580, %v1860
        %v1893 = vmul.f32 %v1582, %v1861
        %v1894 = vmul.f32 %v1584, %v1862
        %v1895 = vmul.f32 %v1586, %v1863
        %v1896 = vmul.f32 %v1588, %v1864
        %v1897 = vmul.f32 %v1590, %v1865
        %v1898 = vmul.f32 %v1592, %v1866
        %v1899 = vmul.f32 %v1594, %v1867
        %v1900 = vld [vmem:[%s2] sm:$0xff]
        %v1901 = vld [vmem:[%s2 + $0x8] sm:$0xff]
        %v1902 = vld [vmem:[%s2 + $0x10] sm:$0xff]
        %v1903 = vld [vmem:[%s2 + $0x18] sm:$0xff]
        %v1904 = vld [vmem:[%s2 + $0x20] sm:$0xff]
        %v1905 = vld [vmem:[%s2 + $0x28] sm:$0xff]
        %v1906 = vld [vmem:[%s2 + $0x30] sm:$0xff]
        %v1907 = vld [vmem:[%s2 + $0x38] sm:$0xff]
        %v1908 = vld [vmem:[%s2 + $0x40] sm:$0xff]
        %v1909 = vld [vmem:[%s2 + $0x48] sm:$0xff]
        %v1910 = vld [vmem:[%s2 + $0x50] sm:$0xff]
        %v1911 = vld [vmem:[%s2 + $0x58] sm:$0xff]
        %v1912 = vld [vmem:[%s2 + $0x60] sm:$0xff]
        %v1913 = vld [vmem:[%s2 + $0x68] sm:$0xff]
        %v1914 = vld [vmem:[%s2 + $0x70] sm:$0xff]
        %v1915 = vld [vmem:[%s2 + $0x78] sm:$0xff]
        %1916 = vmatprep.subr.mxu0 0.0
        %1917 = vmatpush1.msra.mxu0 %v1900
        %1918 = vmatprep.subr.mxu0 0.0
        %1919 = vmatpush1.msra.mxu0 %v1901
        %1920 = vmatprep.subr.mxu0 0.0
        %1921 = vmatpush1.msra.mxu0 %v1902
        %1922 = vmatprep.subr.mxu0 0.0
        %1923 = vmatpush1.msra.mxu0 %v1903
        %1924 = vmatprep.subr.mxu0 0.0
        %1925 = vmatpush1.msra.mxu0 %v1904
        %1926 = vmatprep.subr.mxu0 0.0
        %1927 = vmatpush1.msra.mxu0 %v1905
        %1928 = vmatprep.subr.mxu0 0.0
        %1929 = vmatpush1.msra.mxu0 %v1906
        %1930 = vmatprep.subr.mxu0 0.0
        %1931 = vmatpush1.msra.mxu0 %v1907
        %1932 = vmatprep.subr.mxu0 0.0
        %1933 = vmatpush1.msra.mxu0 %v1908
        %1934 = vmatprep.subr.mxu0 0.0
        %1935 = vmatpush1.msra.mxu0 %v1909
        %1936 = vmatprep.subr.mxu0 0.0
        %1937 = vmatpush1.msra.mxu0 %v1910
        %1938 = vmatprep.subr.mxu0 0.0
        %1939 = vmatpush1.msra.mxu0 %v1911
        %1940 = vmatprep.subr.mxu0 0.0
        %1941 = vmatpush1.msra.mxu0 %v1912
        %1942 = vmatprep.subr.mxu0 0.0
        %1943 = vmatpush1.msra.mxu0 %v1913
        %1944 = vmatprep.subr.mxu0 0.0
        %1945 = vmatpush1.msra.mxu0 %v1914
        %1946 = vmatprep.subr.mxu0 0.0
        %1947 = vmatpush1.msra.mxu0 %v1915
        %1948 = vmatprep.subr.mxu0 0.0
        %1949 = vmatpush1.msra.mxu0 0.0
        %1950 = vmatprep.subr.mxu0 0.0
        %1951 = vmatpush1.msra.mxu0 0.0
        %1952 = vmatprep.subr.mxu0 0.0
        %1953 = vmatpush1.msra.mxu0 0.0
        %1954 = vmatprep.subr.mxu0 0.0
        %1955 = vmatpush1.msra.mxu0 0.0
        %1956 = vmatprep.subr.mxu0 0.0
        %1957 = vmatpush1.msra.mxu0 0.0
        %1958 = vmatprep.subr.mxu0 0.0
        %1959 = vmatpush1.msra.mxu0 0.0
        %1960 = vmatprep.subr.mxu0 0.0
        %1961 = vmatpush1.msra.mxu0 0.0
        %1962 = vmatprep.subr.mxu0 0.0
        %1963 = vmatpush1.msra.mxu0 0.0
        %1964 = vmatprep.subr.mxu0 0.0
        %1965 = vmatpush1.msra.mxu0 0.0
        %1966 = vmatprep.subr.mxu0 0.0
        %1967 = vmatpush1.msra.mxu0 0.0
        %1968 = vmatprep.subr.mxu0 0.0
        %1969 = vmatpush1.msra.mxu0 0.0
        %1970 = vmatprep.subr.mxu0 0.0
        %1971 = vmatpush1.msra.mxu0 0.0
        %1972 = vmatprep.subr.mxu0 0.0
        %1973 = vmatpush1.msra.mxu0 0.0
        %1974 = vmatprep.subr.mxu0 0.0
        %1975 = vmatpush1.msra.mxu0 0.0
        %1976 = vmatprep.subr.mxu0 0.0
        %1977 = vmatpush1.msra.mxu0 0.0
        %1978 = vmatprep.subr.mxu0 0.0
        %1979 = vmatpush1.msra.mxu0 0.0
        %1980 = vmatprep.mubr.f32.mxu0 0.0
        %1981 = vmatmul.mubr.f32.gmra.mrb[0].mxu0 %v1868
        %v1982 = vpop.f32.mrb[0].mxu0
        %v1983 = vadd.f32 0.0, %v1982
        %v1984 = vpop.f32.mrb[0].mxu0
        %1985 = vmatprep.mubr.f32.mxu0 0.0
        %1986 = vmatmul.mubr.f32.gmra.mrb[0].mxu0 %v1869
        %v1987 = vpop.f32.mrb[0].mxu0
        %v1988 = vadd.f32 0.0, %v1987
        %v1989 = vpop.f32.mrb[0].mxu0
        %1990 = vmatprep.mubr.f32.mxu0 0.0
        %1991 = vmatmul.mubr.f32.gmra.mrb[0].mxu0 %v1870
        %v1992 = vpop.f32.mrb[0].mxu0
        %v1993 = vadd.f32 0.0, %v1992
        %v1994 = vpop.f32.mrb[0].mxu0
        %1995 = vmatprep.mubr.f32.mxu0 0.0
        %1996 = vmatmul.mubr.f32.gmra.mrb[0].mxu0 %v1871
        %v1997 = vpop.f32.mrb[0].mxu0
        %v1998 = vadd.f32 0.0, %v1997
        %v1999 = vpop.f32.mrb[0].mxu0
        %2000 = vmatprep.mubr.f32.mxu0 0.0
        %2001 = vmatmul.mubr.f32.gmra.mrb[0].mxu0 %v1872
        %v2002 = vpop.f32.mrb[0].mxu0
        %v2003 = vadd.f32 0.0, %v2002
        %v2004 = vpop.f32.mrb[0].mxu0
        %2005 = vmatprep.mubr.f32.mxu0 0.0
        %2006 = vmatmul.mubr.f32.gmra.mrb[0].mxu0 %v1873
        %v2007 = vpop.f32.mrb[0].mxu0
        %v2008 = vadd.f32 0.0, %v2007
        %v2009 = vpop.f32.mrb[0].mxu0
        %2010 = vmatprep.mubr.f32.mxu0 0.0
        %2011 = vmatmul.mubr.f32.gmra.mrb[0].mxu0 %v1874
        %v2012 = vpop.f32.mrb[0].mxu0
        %v2013 = vadd.f32 0.0, %v2012
        %v2014 = vpop.f32.mrb[0].mxu0
        %2015 = vmatprep.mubr.f32.mxu0 0.0
        %2016 = vmatmul.mubr.f32.gmra.mrb[0].mxu0 %v1875
        %v2017 = vpop.f32.mrb[0].mxu0
        %v2018 = vadd.f32 0.0, %v2017
        %v2019 = vpop.f32.mrb[0].mxu0
        %2020 = vmatprep.mubr.f32.mxu0 0.0
        %2021 = vmatmul.mubr.f32.gmra.mrb[0].mxu0 %v1876
        %v2022 = vpop.f32.mrb[0].mxu0
        %v2023 = vadd.f32 0.0, %v2022
        %v2024 = vpop.f32.mrb[0].mxu0
        %2025 = vmatprep.mubr.f32.mxu0 0.0
        %2026 = vmatmul.mubr.f32.gmra.mrb[0].mxu0 %v1877
        %v2027 = vpop.f32.mrb[0].mxu0
        %v2028 = vadd.f32 0.0, %v2027
        %v2029 = vpop.f32.mrb[0].mxu0
        %2030 = vmatprep.mubr.f32.mxu0 0.0
        %2031 = vmatmul.mubr.f32.gmra.mrb[0].mxu0 %v1878
        %v2032 = vpop.f32.mrb[0].mxu0
        %v2033 = vadd.f32 0.0, %v2032
        %v2034 = vpop.f32.mrb[0].mxu0
        %2035 = vmatprep.mubr.f32.mxu0 0.0
        %2036 = vmatmul.mubr.f32.gmra.mrb[0].mxu0 %v1879
        %v2037 = vpop.f32.mrb[0].mxu0
        %v2038 = vadd.f32 0.0, %v2037
        %v2039 = vpop.f32.mrb[0].mxu0
        %2040 = vmatprep.mubr.f32.mxu0 0.0
        %2041 = vmatmul.mubr.f32.gmra.mrb[0].mxu0 %v1880
        %v2042 = vpop.f32.mrb[0].mxu0
        %v2043 = vadd.f32 0.0, %v2042
        %v2044 = vpop.f32.mrb[0].mxu0
        %2045 = vmatprep.mubr.f32.mxu0 0.0
        %2046 = vmatmul.mubr.f32.gmra.mrb[0].mxu0 %v1881
        %v2047 = vpop.f32.mrb[0].mxu0
        %v2048 = vadd.f32 0.0, %v2047
        %v2049 = vpop.f32.mrb[0].mxu0
        %2050 = vmatprep.mubr.f32.mxu0 0.0
        %2051 = vmatmul.mubr.f32.gmra.mrb[0].mxu0 %v1882
        %v2052 = vpop.f32.mrb[0].mxu0
        %v2053 = vadd.f32 0.0, %v2052
        %v2054 = vpop.f32.mrb[0].mxu0
        %2055 = vmatprep.mubr.f32.mxu0 0.0
        %2056 = vmatmul.mubr.f32.gmra.mrb[0].mxu0 %v1883
        %v2057 = vpop.f32.mrb[0].mxu0
        %v2058 = vadd.f32 0.0, %v2057
        %v2059 = vpop.f32.mrb[0].mxu0
        %2060 = vmatprep.mubr.f32.mxu0 0.0
        %2061 = vmatmul.mubr.f32.gmra.mrb[0].mxu0 %v1884
        %v2062 = vpop.f32.mrb[0].mxu0
        %v2063 = vadd.f32 0.0, %v2062
        %v2064 = vpop.f32.mrb[0].mxu0
        %2065 = vmatprep.mubr.f32.mxu0 0.0
        %2066 = vmatmul.mubr.f32.gmra.mrb[0].mxu0 %v1885
        %v2067 = vpop.f32.mrb[0].mxu0
        %v2068 = vadd.f32 0.0, %v2067
        %v2069 = vpop.f32.mrb[0].mxu0
        %2070 = vmatprep.mubr.f32.mxu0 0.0
        %2071 = vmatmul.mubr.f32.gmra.mrb[0].mxu0 %v1886
        %v2072 = vpop.f32.mrb[0].mxu0
        %v2073 = vadd.f32 0.0, %v2072
        %v2074 = vpop.f32.mrb[0].mxu0
        %2075 = vmatprep.mubr.f32.mxu0 0.0
        %2076 = vmatmul.mubr.f32.gmra.mrb[0].mxu0 %v1887
        %v2077 = vpop.f32.mrb[0].mxu0
        %v2078 = vadd.f32 0.0, %v2077
        %v2079 = vpop.f32.mrb[0].mxu0
        %2080 = vmatprep.mubr.f32.mxu0 0.0
        %2081 = vmatmul.mubr.f32.gmra.mrb[0].mxu0 %v1888
        %v2082 = vpop.f32.mrb[0].mxu0
        %v2083 = vadd.f32 0.0, %v2082
        %v2084 = vpop.f32.mrb[0].mxu0
        %2085 = vmatprep.mubr.f32.mxu0 0.0
        %2086 = vmatmul.mubr.f32.gmra.mrb[0].mxu0 %v1889
        %v2087 = vpop.f32.mrb[0].mxu0
        %v2088 = vadd.f32 0.0, %v2087
        %v2089 = vpop.f32.mrb[0].mxu0
        %2090 = vmatprep.mubr.f32.mxu0 0.0
        %2091 = vmatmul.mubr.f32.gmra.mrb[0].mxu0 %v1890
        %v2092 = vpop.f32.mrb[0].mxu0
        %v2093 = vadd.f32 0.0, %v2092
        %v2094 = vpop.f32.mrb[0].mxu0
        %2095 = vmatprep.mubr.f32.mxu0 0.0
        %2096 = vmatmul.mubr.f32.gmra.mrb[0].mxu0 %v1891
        %v2097 = vpop.f32.mrb[0].mxu0
        %v2098 = vadd.f32 0.0, %v2097
        %v2099 = vpop.f32.mrb[0].mxu0
        %2100 = vmatprep.mubr.f32.mxu0 0.0
        %2101 = vmatmul.mubr.f32.gmra.mrb[0].mxu0 %v1892
        %v2102 = vpop.f32.mrb[0].mxu0
        %v2103 = vadd.f32 0.0, %v2102
        %v2104 = vpop.f32.mrb[0].mxu0
        %2105 = vmatprep.mubr.f32.mxu0 0.0
        %2106 = vmatmul.mubr.f32.gmra.mrb[0].mxu0 %v1893
        %v2107 = vpop.f32.mrb[0].mxu0
        %v2108 = vadd.f32 0.0, %v2107
        %v2109 = vpop.f32.mrb[0].mxu0
        %2110 = vmatprep.mubr.f32.mxu0 0.0
        %2111 = vmatmul.mubr.f32.gmra.mrb[0].mxu0 %v1894
        %v2112 = vpop.f32.mrb[0].mxu0
        %v2113 = vadd.f32 0.0, %v2112
        %v2114 = vpop.f32.mrb[0].mxu0
        %2115 = vmatprep.mubr.f32.mxu0 0.0
        %2116 = vmatmul.mubr.f32.gmra.mrb[0].mxu0 %v1895
        %v2117 = vpop.f32.mrb[0].mxu0
        %v2118 = vadd.f32 0.0, %v2117
        %v2119 = vpop.f32.mrb[0].mxu0
        %2120 = vmatprep.mubr.f32.mxu0 0.0
        %2121 = vmatmul.mubr.f32.gmra.mrb[0].mxu0 %v1896
        %v2122 = vpop.f32.mrb[0].mxu0
        %v2123 = vadd.f32 0.0, %v2122
        %v2124 = vpop.f32.mrb[0].mxu0
        %2125 = vmatprep.mubr.f32.mxu0 0.0
        %2126 = vmatmul.mubr.f32.gmra.mrb[0].mxu0 %v1897
        %v2127 = vpop.f32.mrb[0].mxu0
        %v2128 = vadd.f32 0.0, %v2127
        %v2129 = vpop.f32.mrb[0].mxu0
        %2130 = vmatprep.mubr.f32.mxu0 0.0
        %2131 = vmatmul.mubr.f32.gmra.mrb[0].mxu0 %v1898
        %v2132 = vpop.f32.mrb[0].mxu0
        %v2133 = vadd.f32 0.0, %v2132
        %v2134 = vpop.f32.mrb[0].mxu0
        %2135 = vmatprep.mubr.f32.mxu0 0.0
        %2136 = vmatmul.mubr.f32.gmra.mrb[0].mxu0 %v1899
        %v2137 = vpop.f32.mrb[0].mxu0
        %v2138 = vadd.f32 0.0, %v2137
        %v2139 = vpop.f32.mrb[0].mxu0
        %2140 = vdwg.mxu0
        %v2141 = vld [vmem:[%s4 + $0x10] sm:$0xff]
        %v2142 = vld [vmem:[%s4 + $0x30] sm:$0xff]
        %v2143 = vld [vmem:[%s4 + $0x50] sm:$0xff]
        %v2144 = vld [vmem:[%s4 + $0x70] sm:$0xff]
        %v2145 = vld [vmem:[%s4 + $0x90] sm:$0xff]
        %v2146 = vld [vmem:[%s4 + $0xb0] sm:$0xff]
        %v2147 = vld [vmem:[%s4 + $0xd0] sm:$0xff]
        %v2148 = vld [vmem:[%s4 + $0xf0] sm:$0xff]
        %v2149 = vld [vmem:[%s4 + $0x110] sm:$0xff]
        %v2150 = vld [vmem:[%s4 + $0x130] sm:$0xff]
        %v2151 = vld [vmem:[%s4 + $0x150] sm:$0xff]
        %v2152 = vld [vmem:[%s4 + $0x170] sm:$0xff]
        %v2153 = vld [vmem:[%s4 + $0x190] sm:$0xff]
        %v2154 = vld [vmem:[%s4 + $0x1b0] sm:$0xff]
        %v2155 = vld [vmem:[%s4 + $0x1d0] sm:$0xff]
        %v2156 = vld [vmem:[%s4 + $0x1f0] sm:$0xff]
        %v2157 = vlaneseq
        %v2158 = vshrl.u32 %v2157, 7
        %v2159 = vsub.s32 0, %v2158
        %v2160 = vrot.slane %v271, %v2159
        %2161 = vmatprep.subr.mxu0 0.0
        %2162 = vmatpush1.msra.mxu0 %v2141
        %2163 = vmatprep.subr.mxu0 0.0
        %2164 = vmatpush1.msra.mxu0 %v2142
        %2165 = vmatprep.subr.mxu0 0.0
        %2166 = vmatpush1.msra.mxu0 %v2143
        %2167 = vmatprep.subr.mxu0 0.0
        %2168 = vmatpush1.msra.mxu0 %v2144
        %2169 = vmatprep.subr.mxu0 0.0
        %2170 = vmatpush1.msra.mxu0 %v2145
        %2171 = vmatprep.subr.mxu0 0.0
        %2172 = vmatpush1.msra.mxu0 %v2146
        %2173 = vmatprep.subr.mxu0 0.0
        %2174 = vmatpush1.msra.mxu0 %v2147
        %2175 = vmatprep.subr.mxu0 0.0
        %2176 = vmatpush1.msra.mxu0 %v2148
        %2177 = vmatprep.subr.mxu0 0.0
        %2178 = vmatpush1.msra.mxu0 %v2149
        %2179 = vmatprep.subr.mxu0 0.0
        %2180 = vmatpush1.msra.mxu0 %v2150
        %2181 = vmatprep.subr.mxu0 0.0
        %2182 = vmatpush1.msra.mxu0 %v2151
        %2183 = vmatprep.subr.mxu0 0.0
        %2184 = vmatpush1.msra.mxu0 %v2152
        %2185 = vmatprep.subr.mxu0 0.0
        %2186 = vmatpush1.msra.mxu0 %v2153
        %2187 = vmatprep.subr.mxu0 0.0
        %2188 = vmatpush1.msra.mxu0 %v2154
        %2189 = vmatprep.subr.mxu0 0.0
        %2190 = vmatpush1.msra.mxu0 %v2155
        %2191 = vmatprep.subr.mxu0 0.0
        %2192 = vmatpush1.msra.mxu0 %v2156
        %2193 = vmatprep.subr.mxu0 0.0
        %2194 = vmatpush1.msra.mxu0 0.0
        %2195 = vmatprep.subr.mxu0 0.0
        %2196 = vmatpush1.msra.mxu0 0.0
        %2197 = vmatprep.subr.mxu0 0.0
        %2198 = vmatpush1.msra.mxu0 0.0
        %2199 = vmatprep.subr.mxu0 0.0
        %2200 = vmatpush1.msra.mxu0 0.0
        %2201 = vmatprep.subr.mxu0 0.0
        %2202 = vmatpush1.msra.mxu0 0.0
        %2203 = vmatprep.subr.mxu0 0.0
        %2204 = vmatpush1.msra.mxu0 0.0
        %2205 = vmatprep.subr.mxu0 0.0
        %2206 = vmatpush1.msra.mxu0 0.0
        %2207 = vmatprep.subr.mxu0 0.0
        %2208 = vmatpush1.msra.mxu0 0.0
        %2209 = vmatprep.subr.mxu0 0.0
        %2210 = vmatpush1.msra.mxu0 0.0
        %2211 = vmatprep.subr.mxu0 0.0
        %2212 = vmatpush1.msra.mxu0 0.0
        %2213 = vmatprep.subr.mxu0 0.0
        %2214 = vmatpush1.msra.mxu0 0.0
        %2215 = vmatprep.subr.mxu0 0.0
        %2216 = vmatpush1.msra.mxu0 0.0
        %2217 = vmatprep.subr.mxu0 0.0
        %2218 = vmatpush1.msra.mxu0 0.0
        %2219 = vmatprep.subr.mxu0 0.0
        %2220 = vmatpush1.msra.mxu0 0.0
        %2221 = vmatprep.subr.mxu0 0.0
        %2222 = vmatpush1.msra.mxu0 0.0
        %2223 = vmatprep.subr.mxu0 0.0
        %2224 = vmatpush1.msra.mxu0 0.0
        %2225 = vmatprep.mubr.f32.mxu0 0.0
        %2226 = vmatmul.mubr.f32.gmra.mrb[0].mxu0 %v1983
        %v2227 = vpop.f32.mrb[0].mxu0
        %v2228 = vadd.f32 %v2160, %v2227
        %v2229 = vpop.f32.mrb[0].mxu0
        %2230 = vmatprep.mubr.f32.mxu0 0.0
        %2231 = vmatmul.mubr.f32.gmra.mrb[0].mxu0 %v1988
        %v2232 = vpop.f32.mrb[0].mxu0
        %v2233 = vadd.f32 %v2160, %v2232
        %v2234 = vpop.f32.mrb[0].mxu0
        %2235 = vmatprep.mubr.f32.mxu0 0.0
        %2236 = vmatmul.mubr.f32.gmra.mrb[0].mxu0 %v1993
        %v2237 = vpop.f32.mrb[0].mxu0
        %v2238 = vadd.f32 %v2160, %v2237
        %v2239 = vpop.f32.mrb[0].mxu0
        %2240 = vmatprep.mubr.f32.mxu0 0.0
        %2241 = vmatmul.mubr.f32.gmra.mrb[0].mxu0 %v1998
        %v2242 = vpop.f32.mrb[0].mxu0
        %v2243 = vadd.f32 %v2160, %v2242
        %v2244 = vpop.f32.mrb[0].mxu0
        %2245 = vmatprep.mubr.f32.mxu0 0.0
        %2246 = vmatmul.mubr.f32.gmra.mrb[0].mxu0 %v2003
        %v2247 = vpop.f32.mrb[0].mxu0
        %v2248 = vadd.f32 %v2160, %v2247
        %v2249 = vpop.f32.mrb[0].mxu0
        %2250 = vmatprep.mubr.f32.mxu0 0.0
        %2251 = vmatmul.mubr.f32.gmra.mrb[0].mxu0 %v2008
        %v2252 = vpop.f32.mrb[0].mxu0
        %v2253 = vadd.f32 %v2160, %v2252
        %v2254 = vpop.f32.mrb[0].mxu0
        %2255 = vmatprep.mubr.f32.mxu0 0.0
        %2256 = vmatmul.mubr.f32.gmra.mrb[0].mxu0 %v2013
        %v2257 = vpop.f32.mrb[0].mxu0
        %v2258 = vadd.f32 %v2160, %v2257
        %v2259 = vpop.f32.mrb[0].mxu0
        %2260 = vmatprep.mubr.f32.mxu0 0.0
        %2261 = vmatmul.mubr.f32.gmra.mrb[0].mxu0 %v2018
        %v2262 = vpop.f32.mrb[0].mxu0
        %v2263 = vadd.f32 %v2160, %v2262
        %v2264 = vpop.f32.mrb[0].mxu0
        %2265 = vmatprep.mubr.f32.mxu0 0.0
        %2266 = vmatmul.mubr.f32.gmra.mrb[0].mxu0 %v2023
        %v2267 = vpop.f32.mrb[0].mxu0
        %v2268 = vadd.f32 %v2160, %v2267
        %v2269 = vpop.f32.mrb[0].mxu0
        %2270 = vmatprep.mubr.f32.mxu0 0.0
        %2271 = vmatmul.mubr.f32.gmra.mrb[0].mxu0 %v2028
        %v2272 = vpop.f32.mrb[0].mxu0
        %v2273 = vadd.f32 %v2160, %v2272
        %v2274 = vpop.f32.mrb[0].mxu0
        %2275 = vmatprep.mubr.f32.mxu0 0.0
        %2276 = vmatmul.mubr.f32.gmra.mrb[0].mxu0 %v2033
        %v2277 = vpop.f32.mrb[0].mxu0
        %v2278 = vadd.f32 %v2160, %v2277
        %v2279 = vpop.f32.mrb[0].mxu0
        %2280 = vmatprep.mubr.f32.mxu0 0.0
        %2281 = vmatmul.mubr.f32.gmra.mrb[0].mxu0 %v2038
        %v2282 = vpop.f32.mrb[0].mxu0
        %v2283 = vadd.f32 %v2160, %v2282
        %v2284 = vpop.f32.mrb[0].mxu0
        %2285 = vmatprep.mubr.f32.mxu0 0.0
        %2286 = vmatmul.mubr.f32.gmra.mrb[0].mxu0 %v2043
        %v2287 = vpop.f32.mrb[0].mxu0
        %v2288 = vadd.f32 %v2160, %v2287
        %v2289 = vpop.f32.mrb[0].mxu0
        %2290 = vmatprep.mubr.f32.mxu0 0.0
        %2291 = vmatmul.mubr.f32.gmra.mrb[0].mxu0 %v2048
        %v2292 = vpop.f32.mrb[0].mxu0
        %v2293 = vadd.f32 %v2160, %v2292
        %v2294 = vpop.f32.mrb[0].mxu0
        %2295 = vmatprep.mubr.f32.mxu0 0.0
        %2296 = vmatmul.mubr.f32.gmra.mrb[0].mxu0 %v2053
        %v2297 = vpop.f32.mrb[0].mxu0
        %v2298 = vadd.f32 %v2160, %v2297
        %v2299 = vpop.f32.mrb[0].mxu0
        %2300 = vmatprep.mubr.f32.mxu0 0.0
        %2301 = vmatmul.mubr.f32.gmra.mrb[0].mxu0 %v2058
        %v2302 = vpop.f32.mrb[0].mxu0
        %v2303 = vadd.f32 %v2160, %v2302
        %v2304 = vpop.f32.mrb[0].mxu0
        %2305 = vmatprep.mubr.f32.mxu0 0.0
        %2306 = vmatmul.mubr.f32.gmra.mrb[0].mxu0 %v2063
        %v2307 = vpop.f32.mrb[0].mxu0
        %v2308 = vadd.f32 %v2160, %v2307
        %v2309 = vpop.f32.mrb[0].mxu0
        %2310 = vmatprep.mubr.f32.mxu0 0.0
        %2311 = vmatmul.mubr.f32.gmra.mrb[0].mxu0 %v2068
        %v2312 = vpop.f32.mrb[0].mxu0
        %v2313 = vadd.f32 %v2160, %v2312
        %v2314 = vpop.f32.mrb[0].mxu0
        %2315 = vmatprep.mubr.f32.mxu0 0.0
        %2316 = vmatmul.mubr.f32.gmra.mrb[0].mxu0 %v2073
        %v2317 = vpop.f32.mrb[0].mxu0
        %v2318 = vadd.f32 %v2160, %v2317
        %v2319 = vpop.f32.mrb[0].mxu0
        %2320 = vmatprep.mubr.f32.mxu0 0.0
        %2321 = vmatmul.mubr.f32.gmra.mrb[0].mxu0 %v2078
        %v2322 = vpop.f32.mrb[0].mxu0
        %v2323 = vadd.f32 %v2160, %v2322
        %v2324 = vpop.f32.mrb[0].mxu0
        %2325 = vmatprep.mubr.f32.mxu0 0.0
        %2326 = vmatmul.mubr.f32.gmra.mrb[0].mxu0 %v2083
        %v2327 = vpop.f32.mrb[0].mxu0
        %v2328 = vadd.f32 %v2160, %v2327
        %v2329 = vpop.f32.mrb[0].mxu0
        %2330 = vmatprep.mubr.f32.mxu0 0.0
        %2331 = vmatmul.mubr.f32.gmra.mrb[0].mxu0 %v2088
        %v2332 = vpop.f32.mrb[0].mxu0
        %v2333 = vadd.f32 %v2160, %v2332
        %v2334 = vpop.f32.mrb[0].mxu0
        %2335 = vmatprep.mubr.f32.mxu0 0.0
        %2336 = vmatmul.mubr.f32.gmra.mrb[0].mxu0 %v2093
        %v2337 = vpop.f32.mrb[0].mxu0
        %v2338 = vadd.f32 %v2160, %v2337
        %v2339 = vpop.f32.mrb[0].mxu0
        %2340 = vmatprep.mubr.f32.mxu0 0.0
        %2341 = vmatmul.mubr.f32.gmra.mrb[0].mxu0 %v2098
        %v2342 = vpop.f32.mrb[0].mxu0
        %v2343 = vadd.f32 %v2160, %v2342
        %v2344 = vpop.f32.mrb[0].mxu0
        %2345 = vmatprep.mubr.f32.mxu0 0.0
        %2346 = vmatmul.mubr.f32.gmra.mrb[0].mxu0 %v2103
        %v2347 = vpop.f32.mrb[0].mxu0
        %v2348 = vadd.f32 %v2160, %v2347
        %v2349 = vpop.f32.mrb[0].mxu0
        %2350 = vmatprep.mubr.f32.mxu0 0.0
        %2351 = vmatmul.mubr.f32.gmra.mrb[0].mxu0 %v2108
        %v2352 = vpop.f32.mrb[0].mxu0
        %v2353 = vadd.f32 %v2160, %v2352
        %v2354 = vpop.f32.mrb[0].mxu0
        %2355 = vmatprep.mubr.f32.mxu0 0.0
        %2356 = vmatmul.mubr.f32.gmra.mrb[0].mxu0 %v2113
        %v2357 = vpop.f32.mrb[0].mxu0
        %v2358 = vadd.f32 %v2160, %v2357
        %v2359 = vpop.f32.mrb[0].mxu0
        %2360 = vmatprep.mubr.f32.mxu0 0.0
        %2361 = vmatmul.mubr.f32.gmra.mrb[0].mxu0 %v2118
        %v2362 = vpop.f32.mrb[0].mxu0
        %v2363 = vadd.f32 %v2160, %v2362
        %v2364 = vpop.f32.mrb[0].mxu0
        %2365 = vmatprep.mubr.f32.mxu0 0.0
        %2366 = vmatmul.mubr.f32.gmra.mrb[0].mxu0 %v2123
        %v2367 = vpop.f32.mrb[0].mxu0
        %v2368 = vadd.f32 %v2160, %v2367
        %v2369 = vpop.f32.mrb[0].mxu0
        %2370 = vmatprep.mubr.f32.mxu0 0.0
        %2371 = vmatmul.mubr.f32.gmra.mrb[0].mxu0 %v2128
        %v2372 = vpop.f32.mrb[0].mxu0
        %v2373 = vadd.f32 %v2160, %v2372
        %v2374 = vpop.f32.mrb[0].mxu0
        %2375 = vmatprep.mubr.f32.mxu0 0.0
        %2376 = vmatmul.mubr.f32.gmra.mrb[0].mxu0 %v2133
        %v2377 = vpop.f32.mrb[0].mxu0
        %v2378 = vadd.f32 %v2160, %v2377
        %v2379 = vpop.f32.mrb[0].mxu0
        %2380 = vmatprep.mubr.f32.mxu0 0.0
        %2381 = vmatmul.mubr.f32.gmra.mrb[0].mxu0 %v2138
        %v2382 = vpop.f32.mrb[0].mxu0
        %v2383 = vadd.f32 %v2160, %v2382
        %v2384 = vpop.f32.mrb[0].mxu0
        %2385 = vdwg.mxu0
        %v2386 = vadd.f32 %v917, %v2228
        %v2387 = vadd.f32 %v918, %v2233
        %v2388 = vadd.f32 %v919, %v2238
        %v2389 = vadd.f32 %v920, %v2243
        %v2390 = vadd.f32 %v921, %v2248
        %v2391 = vadd.f32 %v922, %v2253
        %v2392 = vadd.f32 %v923, %v2258
        %v2393 = vadd.f32 %v924, %v2263
        %v2394 = vadd.f32 %v925, %v2268
        %v2395 = vadd.f32 %v926, %v2273
        %v2396 = vadd.f32 %v927, %v2278
        %v2397 = vadd.f32 %v928, %v2283
        %v2398 = vadd.f32 %v929, %v2288
        %v2399 = vadd.f32 %v930, %v2293
        %v2400 = vadd.f32 %v931, %v2298
        %v2401 = vadd.f32 %v932, %v2303
        %v2402 = vadd.f32 %v933, %v2308
        %v2403 = vadd.f32 %v934, %v2313
        %v2404 = vadd.f32 %v935, %v2318
        %v2405 = vadd.f32 %v936, %v2323
        %v2406 = vadd.f32 %v937, %v2328
        %v2407 = vadd.f32 %v938, %v2333
        %v2408 = vadd.f32 %v939, %v2338
        %v2409 = vadd.f32 %v940, %v2343
        %v2410 = vadd.f32 %v941, %v2348
        %v2411 = vadd.f32 %v942, %v2353
        %v2412 = vadd.f32 %v943, %v2358
        %v2413 = vadd.f32 %v944, %v2363
        %v2414 = vadd.f32 %v945, %v2368
        %v2415 = vadd.f32 %v946, %v2373
        %v2416 = vadd.f32 %v947, %v2378
        %v2417 = vadd.f32 %v948, %v2383
        %2418 = vadd.xlane.f32.xlu0 %v2386
        %v2419 = vpop.xlane.xlu0 %2418
        %2420 = vadd.xlane.f32.xlu0 %v2387
        %v2421 = vpop.xlane.xlu0 %2420
        %2422 = vadd.xlane.f32.xlu0 %v2388
        %v2423 = vpop.xlane.xlu0 %2422
        %2424 = vadd.xlane.f32.xlu0 %v2389
        %v2425 = vpop.xlane.xlu0 %2424
        %2426 = vadd.xlane.f32.xlu0 %v2390
        %v2427 = vpop.xlane.xlu0 %2426
        %2428 = vadd.xlane.f32.xlu0 %v2391
        %v2429 = vpop.xlane.xlu0 %2428
        %2430 = vadd.xlane.f32.xlu0 %v2392
        %v2431 = vpop.xlane.xlu0 %2430
        %2432 = vadd.xlane.f32.xlu0 %v2393
        %v2433 = vpop.xlane.xlu0 %2432
        %2434 = vadd.xlane.f32.xlu0 %v2394
        %v2435 = vpop.xlane.xlu0 %2434
        %2436 = vadd.xlane.f32.xlu0 %v2395
        %v2437 = vpop.xlane.xlu0 %2436
        %2438 = vadd.xlane.f32.xlu0 %v2396
        %v2439 = vpop.xlane.xlu0 %2438
        %2440 = vadd.xlane.f32.xlu0 %v2397
        %v2441 = vpop.xlane.xlu0 %2440
        %2442 = vadd.xlane.f32.xlu0 %v2398
        %v2443 = vpop.xlane.xlu0 %2442
        %2444 = vadd.xlane.f32.xlu0 %v2399
        %v2445 = vpop.xlane.xlu0 %2444
        %2446 = vadd.xlane.f32.xlu0 %v2400
        %v2447 = vpop.xlane.xlu0 %2446
        %2448 = vadd.xlane.f32.xlu0 %v2401
        %v2449 = vpop.xlane.xlu0 %2448
        %2450 = vadd.xlane.f32.xlu0 %v2402
        %v2451 = vpop.xlane.xlu0 %2450
        %2452 = vadd.xlane.f32.xlu0 %v2403
        %v2453 = vpop.xlane.xlu0 %2452
        %2454 = vadd.xlane.f32.xlu0 %v2404
        %v2455 = vpop.xlane.xlu0 %2454
        %2456 = vadd.xlane.f32.xlu0 %v2405
        %v2457 = vpop.xlane.xlu0 %2456
        %2458 = vadd.xlane.f32.xlu0 %v2406
        %v2459 = vpop.xlane.xlu0 %2458
        %2460 = vadd.xlane.f32.xlu0 %v2407
        %v2461 = vpop.xlane.xlu0 %2460
        %2462 = vadd.xlane.f32.xlu0 %v2408
        %v2463 = vpop.xlane.xlu0 %2462
        %2464 = vadd.xlane.f32.xlu0 %v2409
        %v2465 = vpop.xlane.xlu0 %2464
        %2466 = vadd.xlane.f32.xlu0 %v2410
        %v2467 = vpop.xlane.xlu0 %2466
        %2468 = vadd.xlane.f32.xlu0 %v2411
        %v2469 = vpop.xlane.xlu0 %2468
        %2470 = vadd.xlane.f32.xlu0 %v2412
        %v2471 = vpop.xlane.xlu0 %2470
        %2472 = vadd.xlane.f32.xlu0 %v2413
        %v2473 = vpop.xlane.xlu0 %2472
        %2474 = vadd.xlane.f32.xlu0 %v2414
        %v2475 = vpop.xlane.xlu0 %2474
        %2476 = vadd.xlane.f32.xlu0 %v2415
        %v2477 = vpop.xlane.xlu0 %2476
        %2478 = vadd.xlane.f32.xlu0 %v2416
        %v2479 = vpop.xlane.xlu0 %2478
        %2480 = vadd.xlane.f32.xlu0 %v2417
        %v2481 = vpop.xlane.xlu0 %2480
        %v2482 = vrcp.pop 128.0
        %v2483 = vmul.f32 %v2419, %v2482
        %v2484 = vmul.f32 %v2421, %v2482
        %v2485 = vmul.f32 %v2423, %v2482
        %v2486 = vmul.f32 %v2425, %v2482
        %v2487 = vmul.f32 %v2427, %v2482
        %v2488 = vmul.f32 %v2429, %v2482
        %v2489 = vmul.f32 %v2431, %v2482
        %v2490 = vmul.f32 %v2433, %v2482
        %v2491 = vmul.f32 %v2435, %v2482
        %v2492 = vmul.f32 %v2437, %v2482
        %v2493 = vmul.f32 %v2439, %v2482
        %v2494 = vmul.f32 %v2441, %v2482
        %v2495 = vmul.f32 %v2443, %v2482
        %v2496 = vmul.f32 %v2445, %v2482
        %v2497 = vmul.f32 %v2447, %v2482
        %v2498 = vmul.f32 %v2449, %v2482
        %v2499 = vmul.f32 %v2451, %v2482
        %v2500 = vmul.f32 %v2453, %v2482
        %v2501 = vmul.f32 %v2455, %v2482
        %v2502 = vmul.f32 %v2457, %v2482
        %v2503 = vmul.f32 %v2459, %v2482
        %v2504 = vmul.f32 %v2461, %v2482
        %v2505 = vmul.f32 %v2463, %v2482
        %v2506 = vmul.f32 %v2465, %v2482
        %v2507 = vmul.f32 %v2467, %v2482
        %v2508 = vmul.f32 %v2469, %v2482
        %v2509 = vmul.f32 %v2471, %v2482
        %v2510 = vmul.f32 %v2473, %v2482
        %v2511 = vmul.f32 %v2475, %v2482
        %v2512 = vmul.f32 %v2477, %v2482
        %v2513 = vmul.f32 %v2479, %v2482
        %v2514 = vmul.f32 %v2481, %v2482
        %v2515 = vsub.f32 %v2386, %v2483
        %v2516 = vsub.f32 %v2387, %v2484
        %v2517 = vsub.f32 %v2388, %v2485
        %v2518 = vsub.f32 %v2389, %v2486
        %v2519 = vsub.f32 %v2390, %v2487
        %v2520 = vsub.f32 %v2391, %v2488
        %v2521 = vsub.f32 %v2392, %v2489
        %v2522 = vsub.f32 %v2393, %v2490
        %v2523 = vsub.f32 %v2394, %v2491
        %v2524 = vsub.f32 %v2395, %v2492
        %v2525 = vsub.f32 %v2396, %v2493
        %v2526 = vsub.f32 %v2397, %v2494
        %v2527 = vsub.f32 %v2398, %v2495
        %v2528 = vsub.f32 %v2399, %v2496
        %v2529 = vsub.f32 %v2400, %v2497
        %v2530 = vsub.f32 %v2401, %v2498
        %v2531 = vsub.f32 %v2402, %v2499
        %v2532 = vsub.f32 %v2403, %v2500
        %v2533 = vsub.f32 %v2404, %v2501
        %v2534 = vsub.f32 %v2405, %v2502
        %v2535 = vsub.f32 %v2406, %v2503
        %v2536 = vsub.f32 %v2407, %v2504
        %v2537 = vsub.f32 %v2408, %v2505
        %v2538 = vsub.f32 %v2409, %v2506
        %v2539 = vsub.f32 %v2410, %v2507
        %v2540 = vsub.f32 %v2411, %v2508
        %v2541 = vsub.f32 %v2412, %v2509
        %v2542 = vsub.f32 %v2413, %v2510
        %v2543 = vsub.f32 %v2414, %v2511
        %v2544 = vsub.f32 %v2415, %v2512
        %v2545 = vsub.f32 %v2416, %v2513
        %v2546 = vsub.f32 %v2417, %v2514
        %v2547 = vmul.f32 %v2515, %v2515
        %v2548 = vmul.f32 %v2516, %v2516
        %v2549 = vmul.f32 %v2517, %v2517
        %v2550 = vmul.f32 %v2518, %v2518
        %v2551 = vmul.f32 %v2519, %v2519
        %v2552 = vmul.f32 %v2520, %v2520
        %v2553 = vmul.f32 %v2521, %v2521
        %v2554 = vmul.f32 %v2522, %v2522
        %v2555 = vmul.f32 %v2523, %v2523
        %v2556 = vmul.f32 %v2524, %v2524
        %v2557 = vmul.f32 %v2525, %v2525
        %v2558 = vmul.f32 %v2526, %v2526
        %v2559 = vmul.f32 %v2527, %v2527
        %v2560 = vmul.f32 %v2528, %v2528
        %v2561 = vmul.f32 %v2529, %v2529
        %v2562 = vmul.f32 %v2530, %v2530
        %v2563 = vmul.f32 %v2531, %v2531
        %v2564 = vmul.f32 %v2532, %v2532
        %v2565 = vmul.f32 %v2533, %v2533
        %v2566 = vmul.f32 %v2534, %v2534
        %v2567 = vmul.f32 %v2535, %v2535
        %v2568 = vmul.f32 %v2536, %v2536
        %v2569 = vmul.f32 %v2537, %v2537
        %v2570 = vmul.f32 %v2538, %v2538
        %v2571 = vmul.f32 %v2539, %v2539
        %v2572 = vmul.f32 %v2540, %v2540
        %v2573 = vmul.f32 %v2541, %v2541
        %v2574 = vmul.f32 %v2542, %v2542
        %v2575 = vmul.f32 %v2543, %v2543
        %v2576 = vmul.f32 %v2544, %v2544
        %v2577 = vmul.f32 %v2545, %v2545
        %v2578 = vmul.f32 %v2546, %v2546
        %2579 = vadd.xlane.f32.xlu0 %v2547
        %v2580 = vpop.xlane.xlu0 %2579
        %2581 = vadd.xlane.f32.xlu0 %v2548
        %v2582 = vpop.xlane.xlu0 %2581
        %2583 = vadd.xlane.f32.xlu0 %v2549
        %v2584 = vpop.xlane.xlu0 %2583
        %2585 = vadd.xlane.f32.xlu0 %v2550
        %v2586 = vpop.xlane.xlu0 %2585
        %2587 = vadd.xlane.f32.xlu0 %v2551
        %v2588 = vpop.xlane.xlu0 %2587
        %2589 = vadd.xlane.f32.xlu0 %v2552
        %v2590 = vpop.xlane.xlu0 %2589
        %2591 = vadd.xlane.f32.xlu0 %v2553
        %v2592 = vpop.xlane.xlu0 %2591
        %2593 = vadd.xlane.f32.xlu0 %v2554
        %v2594 = vpop.xlane.xlu0 %2593
        %2595 = vadd.xlane.f32.xlu0 %v2555
        %v2596 = vpop.xlane.xlu0 %2595
        %2597 = vadd.xlane.f32.xlu0 %v2556
        %v2598 = vpop.xlane.xlu0 %2597
        %2599 = vadd.xlane.f32.xlu0 %v2557
        %v2600 = vpop.xlane.xlu0 %2599
        %2601 = vadd.xlane.f32.xlu0 %v2558
        %v2602 = vpop.xlane.xlu0 %2601
        %2603 = vadd.xlane.f32.xlu0 %v2559
        %v2604 = vpop.xlane.xlu0 %2603
        %2605 = vadd.xlane.f32.xlu0 %v2560
        %v2606 = vpop.xlane.xlu0 %2605
        %2607 = vadd.xlane.f32.xlu0 %v2561
        %v2608 = vpop.xlane.xlu0 %2607
        %2609 = vadd.xlane.f32.xlu0 %v2562
        %v2610 = vpop.xlane.xlu0 %2609
        %2611 = vadd.xlane.f32.xlu0 %v2563
        %v2612 = vpop.xlane.xlu0 %2611
        %2613 = vadd.xlane.f32.xlu0 %v2564
        %v2614 = vpop.xlane.xlu0 %2613
        %2615 = vadd.xlane.f32.xlu0 %v2565
        %v2616 = vpop.xlane.xlu0 %2615
        %2617 = vadd.xlane.f32.xlu0 %v2566
        %v2618 = vpop.xlane.xlu0 %2617
        %2619 = vadd.xlane.f32.xlu0 %v2567
        %v2620 = vpop.xlane.xlu0 %2619
        %2621 = vadd.xlane.f32.xlu0 %v2568
        %v2622 = vpop.xlane.xlu0 %2621
        %2623 = vadd.xlane.f32.xlu0 %v2569
        %v2624 = vpop.xlane.xlu0 %2623
        %2625 = vadd.xlane.f32.xlu0 %v2570
        %v2626 = vpop.xlane.xlu0 %2625
        %2627 = vadd.xlane.f32.xlu0 %v2571
        %v2628 = vpop.xlane.xlu0 %2627
        %2629 = vadd.xlane.f32.xlu0 %v2572
        %v2630 = vpop.xlane.xlu0 %2629
        %2631 = vadd.xlane.f32.xlu0 %v2573
        %v2632 = vpop.xlane.xlu0 %2631
        %2633 = vadd.xlane.f32.xlu0 %v2574
        %v2634 = vpop.xlane.xlu0 %2633
        %2635 = vadd.xlane.f32.xlu0 %v2575
        %v2636 = vpop.xlane.xlu0 %2635
        %2637 = vadd.xlane.f32.xlu0 %v2576
        %v2638 = vpop.xlane.xlu0 %2637
        %2639 = vadd.xlane.f32.xlu0 %v2577
        %v2640 = vpop.xlane.xlu0 %2639
        %2641 = vadd.xlane.f32.xlu0 %v2578
        %v2642 = vpop.xlane.xlu0 %2641
        %v2643 = vmul.f32 %v2580, %v2482
        %v2644 = vmul.f32 %v2582, %v2482
        %v2645 = vmul.f32 %v2584, %v2482
        %v2646 = vmul.f32 %v2586, %v2482
        %v2647 = vmul.f32 %v2588, %v2482
        %v2648 = vmul.f32 %v2590, %v2482
        %v2649 = vmul.f32 %v2592, %v2482
        %v2650 = vmul.f32 %v2594, %v2482
        %v2651 = vmul.f32 %v2596, %v2482
        %v2652 = vmul.f32 %v2598, %v2482
        %v2653 = vmul.f32 %v2600, %v2482
        %v2654 = vmul.f32 %v2602, %v2482
        %v2655 = vmul.f32 %v2604, %v2482
        %v2656 = vmul.f32 %v2606, %v2482
        %v2657 = vmul.f32 %v2608, %v2482
        %v2658 = vmul.f32 %v2610, %v2482
        %v2659 = vmul.f32 %v2612, %v2482
        %v2660 = vmul.f32 %v2614, %v2482
        %v2661 = vmul.f32 %v2616, %v2482
        %v2662 = vmul.f32 %v2618, %v2482
        %v2663 = vmul.f32 %v2620, %v2482
        %v2664 = vmul.f32 %v2622, %v2482
        %v2665 = vmul.f32 %v2624, %v2482
        %v2666 = vmul.f32 %v2626, %v2482
        %v2667 = vmul.f32 %v2628, %v2482
        %v2668 = vmul.f32 %v2630, %v2482
        %v2669 = vmul.f32 %v2632, %v2482
        %v2670 = vmul.f32 %v2634, %v2482
        %v2671 = vmul.f32 %v2636, %v2482
        %v2672 = vmul.f32 %v2638, %v2482
        %v2673 = vmul.f32 %v2640, %v2482
        %v2674 = vmul.f32 %v2642, %v2482
        %v2675 = vadd.f32 %v2643, 1e-05
        %v2676 = vadd.f32 %v2644, 1e-05
        %v2677 = vadd.f32 %v2645, 1e-05
        %v2678 = vadd.f32 %v2646, 1e-05
        %v2679 = vadd.f32 %v2647, 1e-05
        %v2680 = vadd.f32 %v2648, 1e-05
        %v2681 = vadd.f32 %v2649, 1e-05
        %v2682 = vadd.f32 %v2650, 1e-05
        %v2683 = vadd.f32 %v2651, 1e-05
        %v2684 = vadd.f32 %v2652, 1e-05
        %v2685 = vadd.f32 %v2653, 1e-05
        %v2686 = vadd.f32 %v2654, 1e-05
        %v2687 = vadd.f32 %v2655, 1e-05
        %v2688 = vadd.f32 %v2656, 1e-05
        %v2689 = vadd.f32 %v2657, 1e-05
        %v2690 = vadd.f32 %v2658, 1e-05
        %v2691 = vadd.f32 %v2659, 1e-05
        %v2692 = vadd.f32 %v2660, 1e-05
        %v2693 = vadd.f32 %v2661, 1e-05
        %v2694 = vadd.f32 %v2662, 1e-05
        %v2695 = vadd.f32 %v2663, 1e-05
        %v2696 = vadd.f32 %v2664, 1e-05
        %v2697 = vadd.f32 %v2665, 1e-05
        %v2698 = vadd.f32 %v2666, 1e-05
        %v2699 = vadd.f32 %v2667, 1e-05
        %v2700 = vadd.f32 %v2668, 1e-05
        %v2701 = vadd.f32 %v2669, 1e-05
        %v2702 = vadd.f32 %v2670, 1e-05
        %v2703 = vadd.f32 %v2671, 1e-05
        %v2704 = vadd.f32 %v2672, 1e-05
        %v2705 = vadd.f32 %v2673, 1e-05
        %v2706 = vadd.f32 %v2674, 1e-05
        %v2707 = vrsqrt.pop %v2675
        %v2708 = vrsqrt.pop %v2676
        %v2709 = vrsqrt.pop %v2677
        %v2710 = vrsqrt.pop %v2678
        %v2711 = vrsqrt.pop %v2679
        %v2712 = vrsqrt.pop %v2680
        %v2713 = vrsqrt.pop %v2681
        %v2714 = vrsqrt.pop %v2682
        %v2715 = vrsqrt.pop %v2683
        %v2716 = vrsqrt.pop %v2684
        %v2717 = vrsqrt.pop %v2685
        %v2718 = vrsqrt.pop %v2686
        %v2719 = vrsqrt.pop %v2687
        %v2720 = vrsqrt.pop %v2688
        %v2721 = vrsqrt.pop %v2689
        %v2722 = vrsqrt.pop %v2690
        %v2723 = vrsqrt.pop %v2691
        %v2724 = vrsqrt.pop %v2692
        %v2725 = vrsqrt.pop %v2693
        %v2726 = vrsqrt.pop %v2694
        %v2727 = vrsqrt.pop %v2695
        %v2728 = vrsqrt.pop %v2696
        %v2729 = vrsqrt.pop %v2697
        %v2730 = vrsqrt.pop %v2698
        %v2731 = vrsqrt.pop %v2699
        %v2732 = vrsqrt.pop %v2700
        %v2733 = vrsqrt.pop %v2701
        %v2734 = vrsqrt.pop %v2702
        %v2735 = vrsqrt.pop %v2703
        %v2736 = vrsqrt.pop %v2704
        %v2737 = vrsqrt.pop %v2705
        %v2738 = vrsqrt.pop %v2706
        %v2739 = vmul.f32 %v2515, %v2707
        %v2740 = vmul.f32 %v2516, %v2708
        %v2741 = vmul.f32 %v2517, %v2709
        %v2742 = vmul.f32 %v2518, %v2710
        %v2743 = vmul.f32 %v2519, %v2711
        %v2744 = vmul.f32 %v2520, %v2712
        %v2745 = vmul.f32 %v2521, %v2713
        %v2746 = vmul.f32 %v2522, %v2714
        %v2747 = vmul.f32 %v2523, %v2715
        %v2748 = vmul.f32 %v2524, %v2716
        %v2749 = vmul.f32 %v2525, %v2717
        %v2750 = vmul.f32 %v2526, %v2718
        %v2751 = vmul.f32 %v2527, %v2719
        %v2752 = vmul.f32 %v2528, %v2720
        %v2753 = vmul.f32 %v2529, %v2721
        %v2754 = vmul.f32 %v2530, %v2722
        %v2755 = vmul.f32 %v2531, %v2723
        %v2756 = vmul.f32 %v2532, %v2724
        %v2757 = vmul.f32 %v2533, %v2725
        %v2758 = vmul.f32 %v2534, %v2726
        %v2759 = vmul.f32 %v2535, %v2727
        %v2760 = vmul.f32 %v2536, %v2728
        %v2761 = vmul.f32 %v2537, %v2729
        %v2762 = vmul.f32 %v2538, %v2730
        %v2763 = vmul.f32 %v2539, %v2731
        %v2764 = vmul.f32 %v2540, %v2732
        %v2765 = vmul.f32 %v2541, %v2733
        %v2766 = vmul.f32 %v2542, %v2734
        %v2767 = vmul.f32 %v2543, %v2735
        %v2768 = vmul.f32 %v2544, %v2736
        %v2769 = vmul.f32 %v2545, %v2737
        %v2770 = vmul.f32 %v2546, %v2738
        %v2771 = vlaneseq
        %v2772 = vshrl.u32 %v2771, 7
        %v2773 = vsub.s32 0, %v2772
        %v2774 = vrot.slane %v272, %v2773
        %v2775 = vmul.f32 %v2739, %v2774
        %v2776 = vmul.f32 %v2740, %v2774
        %v2777 = vmul.f32 %v2741, %v2774
        %v2778 = vmul.f32 %v2742, %v2774
        %v2779 = vmul.f32 %v2743, %v2774
        %v2780 = vmul.f32 %v2744, %v2774
        %v2781 = vmul.f32 %v2745, %v2774
        %v2782 = vmul.f32 %v2746, %v2774
        %v2783 = vmul.f32 %v2747, %v2774
        %v2784 = vmul.f32 %v2748, %v2774
        %v2785 = vmul.f32 %v2749, %v2774
        %v2786 = vmul.f32 %v2750, %v2774
        %v2787 = vmul.f32 %v2751, %v2774
        %v2788 = vmul.f32 %v2752, %v2774
        %v2789 = vmul.f32 %v2753, %v2774
        %v2790 = vmul.f32 %v2754, %v2774
        %v2791 = vmul.f32 %v2755, %v2774
        %v2792 = vmul.f32 %v2756, %v2774
        %v2793 = vmul.f32 %v2757, %v2774
        %v2794 = vmul.f32 %v2758, %v2774
        %v2795 = vmul.f32 %v2759, %v2774
        %v2796 = vmul.f32 %v2760, %v2774
        %v2797 = vmul.f32 %v2761, %v2774
        %v2798 = vmul.f32 %v2762, %v2774
        %v2799 = vmul.f32 %v2763, %v2774
        %v2800 = vmul.f32 %v2764, %v2774
        %v2801 = vmul.f32 %v2765, %v2774
        %v2802 = vmul.f32 %v2766, %v2774
        %v2803 = vmul.f32 %v2767, %v2774
        %v2804 = vmul.f32 %v2768, %v2774
        %v2805 = vmul.f32 %v2769, %v2774
        %v2806 = vmul.f32 %v2770, %v2774
        %v2807 = vlaneseq
        %v2808 = vshrl.u32 %v2807, 7
        %v2809 = vsub.s32 0, %v2808
        %v2810 = vrot.slane %v273, %v2809
        %v2811 = vadd.f32 %v2775, %v2810
        %v2812 = vadd.f32 %v2776, %v2810
        %v2813 = vadd.f32 %v2777, %v2810
        %v2814 = vadd.f32 %v2778, %v2810
        %v2815 = vadd.f32 %v2779, %v2810
        %v2816 = vadd.f32 %v2780, %v2810
        %v2817 = vadd.f32 %v2781, %v2810
        %v2818 = vadd.f32 %v2782, %v2810
        %v2819 = vadd.f32 %v2783, %v2810
        %v2820 = vadd.f32 %v2784, %v2810
        %v2821 = vadd.f32 %v2785, %v2810
        %v2822 = vadd.f32 %v2786, %v2810
        %v2823 = vadd.f32 %v2787, %v2810
        %v2824 = vadd.f32 %v2788, %v2810
        %v2825 = vadd.f32 %v2789, %v2810
        %v2826 = vadd.f32 %v2790, %v2810
        %v2827 = vadd.f32 %v2791, %v2810
        %v2828 = vadd.f32 %v2792, %v2810
        %v2829 = vadd.f32 %v2793, %v2810
        %v2830 = vadd.f32 %v2794, %v2810
        %v2831 = vadd.f32 %v2795, %v2810
        %v2832 = vadd.f32 %v2796, %v2810
        %v2833 = vadd.f32 %v2797, %v2810
        %v2834 = vadd.f32 %v2798, %v2810
        %v2835 = vadd.f32 %v2799, %v2810
        %v2836 = vadd.f32 %v2800, %v2810
        %v2837 = vadd.f32 %v2801, %v2810
        %v2838 = vadd.f32 %v2802, %v2810
        %v2839 = vadd.f32 %v2803, %v2810
        %v2840 = vadd.f32 %v2804, %v2810
        %v2841 = vadd.f32 %v2805, %v2810
        %v2842 = vadd.f32 %v2806, %v2810
        %v2843 = vld [vmem:[%s4 + $0x18] sm:$0xff]
        %v2844 = vld [vmem:[%s4 + $0x38] sm:$0xff]
        %v2845 = vld [vmem:[%s4 + $0x58] sm:$0xff]
        %v2846 = vld [vmem:[%s4 + $0x78] sm:$0xff]
        %v2847 = vld [vmem:[%s4 + $0x98] sm:$0xff]
        %v2848 = vld [vmem:[%s4 + $0xb8] sm:$0xff]
        %v2849 = vld [vmem:[%s4 + $0xd8] sm:$0xff]
        %v2850 = vld [vmem:[%s4 + $0xf8] sm:$0xff]
        %v2851 = vld [vmem:[%s4 + $0x118] sm:$0xff]
        %v2852 = vld [vmem:[%s4 + $0x138] sm:$0xff]
        %v2853 = vld [vmem:[%s4 + $0x158] sm:$0xff]
        %v2854 = vld [vmem:[%s4 + $0x178] sm:$0xff]
        %v2855 = vld [vmem:[%s4 + $0x198] sm:$0xff]
        %v2856 = vld [vmem:[%s4 + $0x1b8] sm:$0xff]
        %v2857 = vld [vmem:[%s4 + $0x1d8] sm:$0xff]
        %v2858 = vld [vmem:[%s4 + $0x1f8] sm:$0xff]
        %v2859 = vlaneseq
        %v2860 = vshrl.u32 %v2859, 7
        %v2861 = vsub.s32 0, %v2860
        %v2862 = vrot.slane %v274, %v2861
        %2863 = vmatprep.subr.mxu0 0.0
        %2864 = vmatpush1.msra.mxu0 %v2843
        %2865 = vmatprep.subr.mxu0 0.0
        %2866 = vmatpush1.msra.mxu0 %v2844
        %2867 = vmatprep.subr.mxu0 0.0
        %2868 = vmatpush1.msra.mxu0 %v2845
        %2869 = vmatprep.subr.mxu0 0.0
        %2870 = vmatpush1.msra.mxu0 %v2846
        %2871 = vmatprep.subr.mxu0 0.0
        %2872 = vmatpush1.msra.mxu0 %v2847
        %2873 = vmatprep.subr.mxu0 0.0
        %2874 = vmatpush1.msra.mxu0 %v2848
        %2875 = vmatprep.subr.mxu0 0.0
        %2876 = vmatpush1.msra.mxu0 %v2849
        %2877 = vmatprep.subr.mxu0 0.0
        %2878 = vmatpush1.msra.mxu0 %v2850
        %2879 = vmatprep.subr.mxu0 0.0
        %2880 = vmatpush1.msra.mxu0 %v2851
        %2881 = vmatprep.subr.mxu0 0.0
        %2882 = vmatpush1.msra.mxu0 %v2852
        %2883 = vmatprep.subr.mxu0 0.0
        %2884 = vmatpush1.msra.mxu0 %v2853
        %2885 = vmatprep.subr.mxu0 0.0
        %2886 = vmatpush1.msra.mxu0 %v2854
        %2887 = vmatprep.subr.mxu0 0.0
        %2888 = vmatpush1.msra.mxu0 %v2855
        %2889 = vmatprep.subr.mxu0 0.0
        %2890 = vmatpush1.msra.mxu0 %v2856
        %2891 = vmatprep.subr.mxu0 0.0
        %2892 = vmatpush1.msra.mxu0 %v2857
        %2893 = vmatprep.subr.mxu0 0.0
        %2894 = vmatpush1.msra.mxu0 %v2858
        %2895 = vmatprep.subr.mxu0 0.0
        %2896 = vmatpush1.msra.mxu0 0.0
        %2897 = vmatprep.subr.mxu0 0.0
        %2898 = vmatpush1.msra.mxu0 0.0
        %2899 = vmatprep.subr.mxu0 0.0
        %2900 = vmatpush1.msra.mxu0 0.0
        %2901 = vmatprep.subr.mxu0 0.0
        %2902 = vmatpush1.msra.mxu0 0.0
        %2903 = vmatprep.subr.mxu0 0.0
        %2904 = vmatpush1.msra.mxu0 0.0
        %2905 = vmatprep.subr.mxu0 0.0
        %2906 = vmatpush1.msra.mxu0 0.0
        %2907 = vmatprep.subr.mxu0 0.0
        %2908 = vmatpush1.msra.mxu0 0.0
        %2909 = vmatprep.subr.mxu0 0.0
        %2910 = vmatpush1.msra.mxu0 0.0
        %2911 = vmatprep.subr.mxu0 0.0
        %2912 = vmatpush1.msra.mxu0 0.0
        %2913 = vmatprep.subr.mxu0 0.0
        %2914 = vmatpush1.msra.mxu0 0.0
        %2915 = vmatprep.subr.mxu0 0.0
        %2916 = vmatpush1.msra.mxu0 0.0
        %2917 = vmatprep.subr.mxu0 0.0
        %2918 = vmatpush1.msra.mxu0 0.0
        %2919 = vmatprep.subr.mxu0 0.0
        %2920 = vmatpush1.msra.mxu0 0.0
        %2921 = vmatprep.subr.mxu0 0.0
        %2922 = vmatpush1.msra.mxu0 0.0
        %2923 = vmatprep.subr.mxu0 0.0
        %2924 = vmatpush1.msra.mxu0 0.0
        %2925 = vmatprep.subr.mxu0 0.0
        %2926 = vmatpush1.msra.mxu0 0.0
        %2927 = vmatprep.mubr.f32.mxu0 0.0
        %2928 = vmatmul.mubr.f32.gmra.mrb[0].mxu0 %v2811
        %v2929 = vpop.f32.mrb[0].mxu0
        %v2930 = vadd.f32 %v2862, %v2929
        %v2931 = vpop.f32.mrb[0].mxu0
        %2932 = vmatprep.mubr.f32.mxu0 0.0
        %2933 = vmatmul.mubr.f32.gmra.mrb[0].mxu0 %v2812
        %v2934 = vpop.f32.mrb[0].mxu0
        %v2935 = vadd.f32 %v2862, %v2934
        %v2936 = vpop.f32.mrb[0].mxu0
        %2937 = vmatprep.mubr.f32.mxu0 0.0
        %2938 = vmatmul.mubr.f32.gmra.mrb[0].mxu0 %v2813
        %v2939 = vpop.f32.mrb[0].mxu0
        %v2940 = vadd.f32 %v2862, %v2939
        %v2941 = vpop.f32.mrb[0].mxu0
        %2942 = vmatprep.mubr.f32.mxu0 0.0
        %2943 = vmatmul.mubr.f32.gmra.mrb[0].mxu0 %v2814
        %v2944 = vpop.f32.mrb[0].mxu0
        %v2945 = vadd.f32 %v2862, %v2944
        %v2946 = vpop.f32.mrb[0].mxu0
        %2947 = vmatprep.mubr.f32.mxu0 0.0
        %2948 = vmatmul.mubr.f32.gmra.mrb[0].mxu0 %v2815
        %v2949 = vpop.f32.mrb[0].mxu0
        %v2950 = vadd.f32 %v2862, %v2949
        %v2951 = vpop.f32.mrb[0].mxu0
        %2952 = vmatprep.mubr.f32.mxu0 0.0
        %2953 = vmatmul.mubr.f32.gmra.mrb[0].mxu0 %v2816
        %v2954 = vpop.f32.mrb[0].mxu0
        %v2955 = vadd.f32 %v2862, %v2954
        %v2956 = vpop.f32.mrb[0].mxu0
        %2957 = vmatprep.mubr.f32.mxu0 0.0
        %2958 = vmatmul.mubr.f32.gmra.mrb[0].mxu0 %v2817
        %v2959 = vpop.f32.mrb[0].mxu0
        %v2960 = vadd.f32 %v2862, %v2959
        %v2961 = vpop.f32.mrb[0].mxu0
        %2962 = vmatprep.mubr.f32.mxu0 0.0
        %2963 = vmatmul.mubr.f32.gmra.mrb[0].mxu0 %v2818
        %v2964 = vpop.f32.mrb[0].mxu0
        %v2965 = vadd.f32 %v2862, %v2964
        %v2966 = vpop.f32.mrb[0].mxu0
        %2967 = vmatprep.mubr.f32.mxu0 0.0
        %2968 = vmatmul.mubr.f32.gmra.mrb[0].mxu0 %v2819
        %v2969 = vpop.f32.mrb[0].mxu0
        %v2970 = vadd.f32 %v2862, %v2969
        %v2971 = vpop.f32.mrb[0].mxu0
        %2972 = vmatprep.mubr.f32.mxu0 0.0
        %2973 = vmatmul.mubr.f32.gmra.mrb[0].mxu0 %v2820
        %v2974 = vpop.f32.mrb[0].mxu0
        %v2975 = vadd.f32 %v2862, %v2974
        %v2976 = vpop.f32.mrb[0].mxu0
        %2977 = vmatprep.mubr.f32.mxu0 0.0
        %2978 = vmatmul.mubr.f32.gmra.mrb[0].mxu0 %v2821
        %v2979 = vpop.f32.mrb[0].mxu0
        %v2980 = vadd.f32 %v2862, %v2979
        %v2981 = vpop.f32.mrb[0].mxu0
        %2982 = vmatprep.mubr.f32.mxu0 0.0
        %2983 = vmatmul.mubr.f32.gmra.mrb[0].mxu0 %v2822
        %v2984 = vpop.f32.mrb[0].mxu0
        %v2985 = vadd.f32 %v2862, %v2984
        %v2986 = vpop.f32.mrb[0].mxu0
        %2987 = vmatprep.mubr.f32.mxu0 0.0
        %2988 = vmatmul.mubr.f32.gmra.mrb[0].mxu0 %v2823
        %v2989 = vpop.f32.mrb[0].mxu0
        %v2990 = vadd.f32 %v2862, %v2989
        %v2991 = vpop.f32.mrb[0].mxu0
        %2992 = vmatprep.mubr.f32.mxu0 0.0
        %2993 = vmatmul.mubr.f32.gmra.mrb[0].mxu0 %v2824
        %v2994 = vpop.f32.mrb[0].mxu0
        %v2995 = vadd.f32 %v2862, %v2994
        %v2996 = vpop.f32.mrb[0].mxu0
        %2997 = vmatprep.mubr.f32.mxu0 0.0
        %2998 = vmatmul.mubr.f32.gmra.mrb[0].mxu0 %v2825
        %v2999 = vpop.f32.mrb[0].mxu0
        %v3000 = vadd.f32 %v2862, %v2999
        %v3001 = vpop.f32.mrb[0].mxu0
        %3002 = vmatprep.mubr.f32.mxu0 0.0
        %3003 = vmatmul.mubr.f32.gmra.mrb[0].mxu0 %v2826
        %v3004 = vpop.f32.mrb[0].mxu0
        %v3005 = vadd.f32 %v2862, %v3004
        %v3006 = vpop.f32.mrb[0].mxu0
        %3007 = vmatprep.mubr.f32.mxu0 0.0
        %3008 = vmatmul.mubr.f32.gmra.mrb[0].mxu0 %v2827
        %v3009 = vpop.f32.mrb[0].mxu0
        %v3010 = vadd.f32 %v2862, %v3009
        %v3011 = vpop.f32.mrb[0].mxu0
        %3012 = vmatprep.mubr.f32.mxu0 0.0
        %3013 = vmatmul.mubr.f32.gmra.mrb[0].mxu0 %v2828
        %v3014 = vpop.f32.mrb[0].mxu0
        %v3015 = vadd.f32 %v2862, %v3014
        %v3016 = vpop.f32.mrb[0].mxu0
        %3017 = vmatprep.mubr.f32.mxu0 0.0
        %3018 = vmatmul.mubr.f32.gmra.mrb[0].mxu0 %v2829
        %v3019 = vpop.f32.mrb[0].mxu0
        %v3020 = vadd.f32 %v2862, %v3019
        %v3021 = vpop.f32.mrb[0].mxu0
        %3022 = vmatprep.mubr.f32.mxu0 0.0
        %3023 = vmatmul.mubr.f32.gmra.mrb[0].mxu0 %v2830
        %v3024 = vpop.f32.mrb[0].mxu0
        %v3025 = vadd.f32 %v2862, %v3024
        %v3026 = vpop.f32.mrb[0].mxu0
        %3027 = vmatprep.mubr.f32.mxu0 0.0
        %3028 = vmatmul.mubr.f32.gmra.mrb[0].mxu0 %v2831
        %v3029 = vpop.f32.mrb[0].mxu0
        %v3030 = vadd.f32 %v2862, %v3029
        %v3031 = vpop.f32.mrb[0].mxu0
        %3032 = vmatprep.mubr.f32.mxu0 0.0
        %3033 = vmatmul.mubr.f32.gmra.mrb[0].mxu0 %v2832
        %v3034 = vpop.f32.mrb[0].mxu0
        %v3035 = vadd.f32 %v2862, %v3034
        %v3036 = vpop.f32.mrb[0].mxu0
        %3037 = vmatprep.mubr.f32.mxu0 0.0
        %3038 = vmatmul.mubr.f32.gmra.mrb[0].mxu0 %v2833
        %v3039 = vpop.f32.mrb[0].mxu0
        %v3040 = vadd.f32 %v2862, %v3039
        %v3041 = vpop.f32.mrb[0].mxu0
        %3042 = vmatprep.mubr.f32.mxu0 0.0
        %3043 = vmatmul.mubr.f32.gmra.mrb[0].mxu0 %v2834
        %v3044 = vpop.f32.mrb[0].mxu0
        %v3045 = vadd.f32 %v2862, %v3044
        %v3046 = vpop.f32.mrb[0].mxu0
        %3047 = vmatprep.mubr.f32.mxu0 0.0
        %3048 = vmatmul.mubr.f32.gmra.mrb[0].mxu0 %v2835
        %v3049 = vpop.f32.mrb[0].mxu0
        %v3050 = vadd.f32 %v2862, %v3049
        %v3051 = vpop.f32.mrb[0].mxu0
        %3052 = vmatprep.mubr.f32.mxu0 0.0
        %3053 = vmatmul.mubr.f32.gmra.mrb[0].mxu0 %v2836
        %v3054 = vpop.f32.mrb[0].mxu0
        %v3055 = vadd.f32 %v2862, %v3054
        %v3056 = vpop.f32.mrb[0].mxu0
        %3057 = vmatprep.mubr.f32.mxu0 0.0
        %3058 = vmatmul.mubr.f32.gmra.mrb[0].mxu0 %v2837
        %v3059 = vpop.f32.mrb[0].mxu0
        %v3060 = vadd.f32 %v2862, %v3059
        %v3061 = vpop.f32.mrb[0].mxu0
        %3062 = vmatprep.mubr.f32.mxu0 0.0
        %3063 = vmatmul.mubr.f32.gmra.mrb[0].mxu0 %v2838
        %v3064 = vpop.f32.mrb[0].mxu0
        %v3065 = vadd.f32 %v2862, %v3064
        %v3066 = vpop.f32.mrb[0].mxu0
        %3067 = vmatprep.mubr.f32.mxu0 0.0
        %3068 = vmatmul.mubr.f32.gmra.mrb[0].mxu0 %v2839
        %v3069 = vpop.f32.mrb[0].mxu0
        %v3070 = vadd.f32 %v2862, %v3069
        %v3071 = vpop.f32.mrb[0].mxu0
        %3072 = vmatprep.mubr.f32.mxu0 0.0
        %3073 = vmatmul.mubr.f32.gmra.mrb[0].mxu0 %v2840
        %v3074 = vpop.f32.mrb[0].mxu0
        %v3075 = vadd.f32 %v2862, %v3074
        %v3076 = vpop.f32.mrb[0].mxu0
        %3077 = vmatprep.mubr.f32.mxu0 0.0
        %3078 = vmatmul.mubr.f32.gmra.mrb[0].mxu0 %v2841
        %v3079 = vpop.f32.mrb[0].mxu0
        %v3080 = vadd.f32 %v2862, %v3079
        %v3081 = vpop.f32.mrb[0].mxu0
        %3082 = vmatprep.mubr.f32.mxu0 0.0
        %3083 = vmatmul.mubr.f32.gmra.mrb[0].mxu0 %v2842
        %v3084 = vpop.f32.mrb[0].mxu0
        %v3085 = vadd.f32 %v2862, %v3084
        %v3086 = vpop.f32.mrb[0].mxu0
        %3087 = vdwg.mxu0
        %v3088 = vmax.f32 %v2930, 0.0
        %v3089 = vmax.f32 %v2935, 0.0
        %v3090 = vmax.f32 %v2940, 0.0
        %v3091 = vmax.f32 %v2945, 0.0
        %v3092 = vmax.f32 %v2950, 0.0
        %v3093 = vmax.f32 %v2955, 0.0
        %v3094 = vmax.f32 %v2960, 0.0
        %v3095 = vmax.f32 %v2965, 0.0
        %v3096 = vmax.f32 %v2970, 0.0
        %v3097 = vmax.f32 %v2975, 0.0
        %v3098 = vmax.f32 %v2980, 0.0
        %v3099 = vmax.f32 %v2985, 0.0
        %v3100 = vmax.f32 %v2990, 0.0
        %v3101 = vmax.f32 %v2995, 0.0
        %v3102 = vmax.f32 %v3000, 0.0
        %v3103 = vmax.f32 %v3005, 0.0
        %v3104 = vmax.f32 %v3010, 0.0
        %v3105 = vmax.f32 %v3015, 0.0
        %v3106 = vmax.f32 %v3020, 0.0
        %v3107 = vmax.f32 %v3025, 0.0
        %v3108 = vmax.f32 %v3030, 0.0
        %v3109 = vmax.f32 %v3035, 0.0
        %v3110 = vmax.f32 %v3040, 0.0
        %v3111 = vmax.f32 %v3045, 0.0
        %v3112 = vmax.f32 %v3050, 0.0
        %v3113 = vmax.f32 %v3055, 0.0
        %v3114 = vmax.f32 %v3060, 0.0
        %v3115 = vmax.f32 %v3065, 0.0
        %v3116 = vmax.f32 %v3070, 0.0
        %v3117 = vmax.f32 %v3075, 0.0
        %v3118 = vmax.f32 %v3080, 0.0
        %v3119 = vmax.f32 %v3085, 0.0
        %3120 = vadd.xlane.f32.xlu0 %v3088
        %v3121 = vpop.xlane.xlu0 %3120
        %3122 = vadd.xlane.f32.xlu0 %v3089
        %v3123 = vpop.xlane.xlu0 %3122
        %3124 = vadd.xlane.f32.xlu0 %v3090
        %v3125 = vpop.xlane.xlu0 %3124
        %3126 = vadd.xlane.f32.xlu0 %v3091
        %v3127 = vpop.xlane.xlu0 %3126
        %3128 = vadd.xlane.f32.xlu0 %v3092
        %v3129 = vpop.xlane.xlu0 %3128
        %3130 = vadd.xlane.f32.xlu0 %v3093
        %v3131 = vpop.xlane.xlu0 %3130
        %3132 = vadd.xlane.f32.xlu0 %v3094
        %v3133 = vpop.xlane.xlu0 %3132
        %3134 = vadd.xlane.f32.xlu0 %v3095
        %v3135 = vpop.xlane.xlu0 %3134
        %3136 = vadd.xlane.f32.xlu0 %v3096
        %v3137 = vpop.xlane.xlu0 %3136
        %3138 = vadd.xlane.f32.xlu0 %v3097
        %v3139 = vpop.xlane.xlu0 %3138
        %3140 = vadd.xlane.f32.xlu0 %v3098
        %v3141 = vpop.xlane.xlu0 %3140
        %3142 = vadd.xlane.f32.xlu0 %v3099
        %v3143 = vpop.xlane.xlu0 %3142
        %3144 = vadd.xlane.f32.xlu0 %v3100
        %v3145 = vpop.xlane.xlu0 %3144
        %3146 = vadd.xlane.f32.xlu0 %v3101
        %v3147 = vpop.xlane.xlu0 %3146
        %3148 = vadd.xlane.f32.xlu0 %v3102
        %v3149 = vpop.xlane.xlu0 %3148
        %3150 = vadd.xlane.f32.xlu0 %v3103
        %v3151 = vpop.xlane.xlu0 %3150
        %3152 = vadd.xlane.f32.xlu0 %v3104
        %v3153 = vpop.xlane.xlu0 %3152
        %3154 = vadd.xlane.f32.xlu0 %v3105
        %v3155 = vpop.xlane.xlu0 %3154
        %3156 = vadd.xlane.f32.xlu0 %v3106
        %v3157 = vpop.xlane.xlu0 %3156
        %3158 = vadd.xlane.f32.xlu0 %v3107
        %v3159 = vpop.xlane.xlu0 %3158
        %3160 = vadd.xlane.f32.xlu0 %v3108
        %v3161 = vpop.xlane.xlu0 %3160
        %3162 = vadd.xlane.f32.xlu0 %v3109
        %v3163 = vpop.xlane.xlu0 %3162
        %3164 = vadd.xlane.f32.xlu0 %v3110
        %v3165 = vpop.xlane.xlu0 %3164
        %3166 = vadd.xlane.f32.xlu0 %v3111
        %v3167 = vpop.xlane.xlu0 %3166
        %3168 = vadd.xlane.f32.xlu0 %v3112
        %v3169 = vpop.xlane.xlu0 %3168
        %3170 = vadd.xlane.f32.xlu0 %v3113
        %v3171 = vpop.xlane.xlu0 %3170
        %3172 = vadd.xlane.f32.xlu0 %v3114
        %v3173 = vpop.xlane.xlu0 %3172
        %3174 = vadd.xlane.f32.xlu0 %v3115
        %v3175 = vpop.xlane.xlu0 %3174
        %3176 = vadd.xlane.f32.xlu0 %v3116
        %v3177 = vpop.xlane.xlu0 %3176
        %3178 = vadd.xlane.f32.xlu0 %v3117
        %v3179 = vpop.xlane.xlu0 %3178
        %3180 = vadd.xlane.f32.xlu0 %v3118
        %v3181 = vpop.xlane.xlu0 %3180
        %3182 = vadd.xlane.f32.xlu0 %v3119
        %v3183 = vpop.xlane.xlu0 %3182
        %v3184 = vmul.f32 %v3121, %v2482
        %v3185 = vmul.f32 %v3123, %v2482
        %v3186 = vmul.f32 %v3125, %v2482
        %v3187 = vmul.f32 %v3127, %v2482
        %v3188 = vmul.f32 %v3129, %v2482
        %v3189 = vmul.f32 %v3131, %v2482
        %v3190 = vmul.f32 %v3133, %v2482
        %v3191 = vmul.f32 %v3135, %v2482
        %v3192 = vmul.f32 %v3137, %v2482
        %v3193 = vmul.f32 %v3139, %v2482
        %v3194 = vmul.f32 %v3141, %v2482
        %v3195 = vmul.f32 %v3143, %v2482
        %v3196 = vmul.f32 %v3145, %v2482
        %v3197 = vmul.f32 %v3147, %v2482
        %v3198 = vmul.f32 %v3149, %v2482
        %v3199 = vmul.f32 %v3151, %v2482
        %v3200 = vmul.f32 %v3153, %v2482
        %v3201 = vmul.f32 %v3155, %v2482
        %v3202 = vmul.f32 %v3157, %v2482
        %v3203 = vmul.f32 %v3159, %v2482
        %v3204 = vmul.f32 %v3161, %v2482
        %v3205 = vmul.f32 %v3163, %v2482
        %v3206 = vmul.f32 %v3165, %v2482
        %v3207 = vmul.f32 %v3167, %v2482
        %v3208 = vmul.f32 %v3169, %v2482
        %v3209 = vmul.f32 %v3171, %v2482
        %v3210 = vmul.f32 %v3173, %v2482
        %v3211 = vmul.f32 %v3175, %v2482
        %v3212 = vmul.f32 %v3177, %v2482
        %v3213 = vmul.f32 %v3179, %v2482
        %v3214 = vmul.f32 %v3181, %v2482
        %v3215 = vmul.f32 %v3183, %v2482
        %v3216 = vsub.f32 %v3088, %v3184
        %v3217 = vsub.f32 %v3089, %v3185
        %v3218 = vsub.f32 %v3090, %v3186
        %v3219 = vsub.f32 %v3091, %v3187
        %v3220 = vsub.f32 %v3092, %v3188
        %v3221 = vsub.f32 %v3093, %v3189
        %v3222 = vsub.f32 %v3094, %v3190
        %v3223 = vsub.f32 %v3095, %v3191
        %v3224 = vsub.f32 %v3096, %v3192
        %v3225 = vsub.f32 %v3097, %v3193
        %v3226 = vsub.f32 %v3098, %v3194
        %v3227 = vsub.f32 %v3099, %v3195
        %v3228 = vsub.f32 %v3100, %v3196
        %v3229 = vsub.f32 %v3101, %v3197
        %v3230 = vsub.f32 %v3102, %v3198
        %v3231 = vsub.f32 %v3103, %v3199
        %v3232 = vsub.f32 %v3104, %v3200
        %v3233 = vsub.f32 %v3105, %v3201
        %v3234 = vsub.f32 %v3106, %v3202
        %v3235 = vsub.f32 %v3107, %v3203
        %v3236 = vsub.f32 %v3108, %v3204
        %v3237 = vsub.f32 %v3109, %v3205
        %v3238 = vsub.f32 %v3110, %v3206
        %v3239 = vsub.f32 %v3111, %v3207
        %v3240 = vsub.f32 %v3112, %v3208
        %v3241 = vsub.f32 %v3113, %v3209
        %v3242 = vsub.f32 %v3114, %v3210
        %v3243 = vsub.f32 %v3115, %v3211
        %v3244 = vsub.f32 %v3116, %v3212
        %v3245 = vsub.f32 %v3117, %v3213
        %v3246 = vsub.f32 %v3118, %v3214
        %v3247 = vsub.f32 %v3119, %v3215
        %v3248 = vmul.f32 %v3216, %v3216
        %v3249 = vmul.f32 %v3217, %v3217
        %v3250 = vmul.f32 %v3218, %v3218
        %v3251 = vmul.f32 %v3219, %v3219
        %v3252 = vmul.f32 %v3220, %v3220
        %v3253 = vmul.f32 %v3221, %v3221
        %v3254 = vmul.f32 %v3222, %v3222
        %v3255 = vmul.f32 %v3223, %v3223
        %v3256 = vmul.f32 %v3224, %v3224
        %v3257 = vmul.f32 %v3225, %v3225
        %v3258 = vmul.f32 %v3226, %v3226
        %v3259 = vmul.f32 %v3227, %v3227
        %v3260 = vmul.f32 %v3228, %v3228
        %v3261 = vmul.f32 %v3229, %v3229
        %v3262 = vmul.f32 %v3230, %v3230
        %v3263 = vmul.f32 %v3231, %v3231
        %v3264 = vmul.f32 %v3232, %v3232
        %v3265 = vmul.f32 %v3233, %v3233
        %v3266 = vmul.f32 %v3234, %v3234
        %v3267 = vmul.f32 %v3235, %v3235
        %v3268 = vmul.f32 %v3236, %v3236
        %v3269 = vmul.f32 %v3237, %v3237
        %v3270 = vmul.f32 %v3238, %v3238
        %v3271 = vmul.f32 %v3239, %v3239
        %v3272 = vmul.f32 %v3240, %v3240
        %v3273 = vmul.f32 %v3241, %v3241
        %v3274 = vmul.f32 %v3242, %v3242
        %v3275 = vmul.f32 %v3243, %v3243
        %v3276 = vmul.f32 %v3244, %v3244
        %v3277 = vmul.f32 %v3245, %v3245
        %v3278 = vmul.f32 %v3246, %v3246
        %v3279 = vmul.f32 %v3247, %v3247
        %3280 = vadd.xlane.f32.xlu0 %v3248
        %v3281 = vpop.xlane.xlu0 %3280
        %3282 = vadd.xlane.f32.xlu0 %v3249
        %v3283 = vpop.xlane.xlu0 %3282
        %3284 = vadd.xlane.f32.xlu0 %v3250
        %v3285 = vpop.xlane.xlu0 %3284
        %3286 = vadd.xlane.f32.xlu0 %v3251
        %v3287 = vpop.xlane.xlu0 %3286
        %3288 = vadd.xlane.f32.xlu0 %v3252
        %v3289 = vpop.xlane.xlu0 %3288
        %3290 = vadd.xlane.f32.xlu0 %v3253
        %v3291 = vpop.xlane.xlu0 %3290
        %3292 = vadd.xlane.f32.xlu0 %v3254
        %v3293 = vpop.xlane.xlu0 %3292
        %3294 = vadd.xlane.f32.xlu0 %v3255
        %v3295 = vpop.xlane.xlu0 %3294
        %3296 = vadd.xlane.f32.xlu0 %v3256
        %v3297 = vpop.xlane.xlu0 %3296
        %3298 = vadd.xlane.f32.xlu0 %v3257
        %v3299 = vpop.xlane.xlu0 %3298
        %3300 = vadd.xlane.f32.xlu0 %v3258
        %v3301 = vpop.xlane.xlu0 %3300
        %3302 = vadd.xlane.f32.xlu0 %v3259
        %v3303 = vpop.xlane.xlu0 %3302
        %3304 = vadd.xlane.f32.xlu0 %v3260
        %v3305 = vpop.xlane.xlu0 %3304
        %3306 = vadd.xlane.f32.xlu0 %v3261
        %v3307 = vpop.xlane.xlu0 %3306
        %3308 = vadd.xlane.f32.xlu0 %v3262
        %v3309 = vpop.xlane.xlu0 %3308
        %3310 = vadd.xlane.f32.xlu0 %v3263
        %v3311 = vpop.xlane.xlu0 %3310
        %3312 = vadd.xlane.f32.xlu0 %v3264
        %v3313 = vpop.xlane.xlu0 %3312
        %3314 = vadd.xlane.f32.xlu0 %v3265
        %v3315 = vpop.xlane.xlu0 %3314
        %3316 = vadd.xlane.f32.xlu0 %v3266
        %v3317 = vpop.xlane.xlu0 %3316
        %3318 = vadd.xlane.f32.xlu0 %v3267
        %v3319 = vpop.xlane.xlu0 %3318
        %3320 = vadd.xlane.f32.xlu0 %v3268
        %v3321 = vpop.xlane.xlu0 %3320
        %3322 = vadd.xlane.f32.xlu0 %v3269
        %v3323 = vpop.xlane.xlu0 %3322
        %3324 = vadd.xlane.f32.xlu0 %v3270
        %v3325 = vpop.xlane.xlu0 %3324
        %3326 = vadd.xlane.f32.xlu0 %v3271
        %v3327 = vpop.xlane.xlu0 %3326
        %3328 = vadd.xlane.f32.xlu0 %v3272
        %v3329 = vpop.xlane.xlu0 %3328
        %3330 = vadd.xlane.f32.xlu0 %v3273
        %v3331 = vpop.xlane.xlu0 %3330
        %3332 = vadd.xlane.f32.xlu0 %v3274
        %v3333 = vpop.xlane.xlu0 %3332
        %3334 = vadd.xlane.f32.xlu0 %v3275
        %v3335 = vpop.xlane.xlu0 %3334
        %3336 = vadd.xlane.f32.xlu0 %v3276
        %v3337 = vpop.xlane.xlu0 %3336
        %3338 = vadd.xlane.f32.xlu0 %v3277
        %v3339 = vpop.xlane.xlu0 %3338
        %3340 = vadd.xlane.f32.xlu0 %v3278
        %v3341 = vpop.xlane.xlu0 %3340
        %3342 = vadd.xlane.f32.xlu0 %v3279
        %v3343 = vpop.xlane.xlu0 %3342
        %v3344 = vmul.f32 %v3281, %v2482
        %v3345 = vmul.f32 %v3283, %v2482
        %v3346 = vmul.f32 %v3285, %v2482
        %v3347 = vmul.f32 %v3287, %v2482
        %v3348 = vmul.f32 %v3289, %v2482
        %v3349 = vmul.f32 %v3291, %v2482
        %v3350 = vmul.f32 %v3293, %v2482
        %v3351 = vmul.f32 %v3295, %v2482
        %v3352 = vmul.f32 %v3297, %v2482
        %v3353 = vmul.f32 %v3299, %v2482
        %v3354 = vmul.f32 %v3301, %v2482
        %v3355 = vmul.f32 %v3303, %v2482
        %v3356 = vmul.f32 %v3305, %v2482
        %v3357 = vmul.f32 %v3307, %v2482
        %v3358 = vmul.f32 %v3309, %v2482
        %v3359 = vmul.f32 %v3311, %v2482
        %v3360 = vmul.f32 %v3313, %v2482
        %v3361 = vmul.f32 %v3315, %v2482
        %v3362 = vmul.f32 %v3317, %v2482
        %v3363 = vmul.f32 %v3319, %v2482
        %v3364 = vmul.f32 %v3321, %v2482
        %v3365 = vmul.f32 %v3323, %v2482
        %v3366 = vmul.f32 %v3325, %v2482
        %v3367 = vmul.f32 %v3327, %v2482
        %v3368 = vmul.f32 %v3329, %v2482
        %v3369 = vmul.f32 %v3331, %v2482
        %v3370 = vmul.f32 %v3333, %v2482
        %v3371 = vmul.f32 %v3335, %v2482
        %v3372 = vmul.f32 %v3337, %v2482
        %v3373 = vmul.f32 %v3339, %v2482
        %v3374 = vmul.f32 %v3341, %v2482
        %v3375 = vmul.f32 %v3343, %v2482
        %v3376 = vadd.f32 %v3344, 1e-05
        %v3377 = vadd.f32 %v3345, 1e-05
        %v3378 = vadd.f32 %v3346, 1e-05
        %v3379 = vadd.f32 %v3347, 1e-05
        %v3380 = vadd.f32 %v3348, 1e-05
        %v3381 = vadd.f32 %v3349, 1e-05
        %v3382 = vadd.f32 %v3350, 1e-05
        %v3383 = vadd.f32 %v3351, 1e-05
        %v3384 = vadd.f32 %v3352, 1e-05
        %v3385 = vadd.f32 %v3353, 1e-05
        %v3386 = vadd.f32 %v3354, 1e-05
        %v3387 = vadd.f32 %v3355, 1e-05
        %v3388 = vadd.f32 %v3356, 1e-05
        %v3389 = vadd.f32 %v3357, 1e-05
        %v3390 = vadd.f32 %v3358, 1e-05
        %v3391 = vadd.f32 %v3359, 1e-05
        %v3392 = vadd.f32 %v3360, 1e-05
        %v3393 = vadd.f32 %v3361, 1e-05
        %v3394 = vadd.f32 %v3362, 1e-05
        %v3395 = vadd.f32 %v3363, 1e-05
        %v3396 = vadd.f32 %v3364, 1e-05
        %v3397 = vadd.f32 %v3365, 1e-05
        %v3398 = vadd.f32 %v3366, 1e-05
        %v3399 = vadd.f32 %v3367, 1e-05
        %v3400 = vadd.f32 %v3368, 1e-05
        %v3401 = vadd.f32 %v3369, 1e-05
        %v3402 = vadd.f32 %v3370, 1e-05
        %v3403 = vadd.f32 %v3371, 1e-05
        %v3404 = vadd.f32 %v3372, 1e-05
        %v3405 = vadd.f32 %v3373, 1e-05
        %v3406 = vadd.f32 %v3374, 1e-05
        %v3407 = vadd.f32 %v3375, 1e-05
        %v3408 = vrsqrt.pop %v3376
        %v3409 = vrsqrt.pop %v3377
        %v3410 = vrsqrt.pop %v3378
        %v3411 = vrsqrt.pop %v3379
        %v3412 = vrsqrt.pop %v3380
        %v3413 = vrsqrt.pop %v3381
        %v3414 = vrsqrt.pop %v3382
        %v3415 = vrsqrt.pop %v3383
        %v3416 = vrsqrt.pop %v3384
        %v3417 = vrsqrt.pop %v3385
        %v3418 = vrsqrt.pop %v3386
        %v3419 = vrsqrt.pop %v3387
        %v3420 = vrsqrt.pop %v3388
        %v3421 = vrsqrt.pop %v3389
        %v3422 = vrsqrt.pop %v3390
        %v3423 = vrsqrt.pop %v3391
        %v3424 = vrsqrt.pop %v3392
        %v3425 = vrsqrt.pop %v3393
        %v3426 = vrsqrt.pop %v3394
        %v3427 = vrsqrt.pop %v3395
        %v3428 = vrsqrt.pop %v3396
        %v3429 = vrsqrt.pop %v3397
        %v3430 = vrsqrt.pop %v3398
        %v3431 = vrsqrt.pop %v3399
        %v3432 = vrsqrt.pop %v3400
        %v3433 = vrsqrt.pop %v3401
        %v3434 = vrsqrt.pop %v3402
        %v3435 = vrsqrt.pop %v3403
        %v3436 = vrsqrt.pop %v3404
        %v3437 = vrsqrt.pop %v3405
        %v3438 = vrsqrt.pop %v3406
        %v3439 = vrsqrt.pop %v3407
        %v3440 = vmul.f32 %v3216, %v3408
        %v3441 = vmul.f32 %v3217, %v3409
        %v3442 = vmul.f32 %v3218, %v3410
        %v3443 = vmul.f32 %v3219, %v3411
        %v3444 = vmul.f32 %v3220, %v3412
        %v3445 = vmul.f32 %v3221, %v3413
        %v3446 = vmul.f32 %v3222, %v3414
        %v3447 = vmul.f32 %v3223, %v3415
        %v3448 = vmul.f32 %v3224, %v3416
        %v3449 = vmul.f32 %v3225, %v3417
        %v3450 = vmul.f32 %v3226, %v3418
        %v3451 = vmul.f32 %v3227, %v3419
        %v3452 = vmul.f32 %v3228, %v3420
        %v3453 = vmul.f32 %v3229, %v3421
        %v3454 = vmul.f32 %v3230, %v3422
        %v3455 = vmul.f32 %v3231, %v3423
        %v3456 = vmul.f32 %v3232, %v3424
        %v3457 = vmul.f32 %v3233, %v3425
        %v3458 = vmul.f32 %v3234, %v3426
        %v3459 = vmul.f32 %v3235, %v3427
        %v3460 = vmul.f32 %v3236, %v3428
        %v3461 = vmul.f32 %v3237, %v3429
        %v3462 = vmul.f32 %v3238, %v3430
        %v3463 = vmul.f32 %v3239, %v3431
        %v3464 = vmul.f32 %v3240, %v3432
        %v3465 = vmul.f32 %v3241, %v3433
        %v3466 = vmul.f32 %v3242, %v3434
        %v3467 = vmul.f32 %v3243, %v3435
        %v3468 = vmul.f32 %v3244, %v3436
        %v3469 = vmul.f32 %v3245, %v3437
        %v3470 = vmul.f32 %v3246, %v3438
        %v3471 = vmul.f32 %v3247, %v3439
        %v3472 = vlaneseq
        %v3473 = vshrl.u32 %v3472, 7
        %v3474 = vsub.s32 0, %v3473
        %v3475 = vrot.slane %v275, %v3474
        %v3476 = vmul.f32 %v3440, %v3475
        %v3477 = vmul.f32 %v3441, %v3475
        %v3478 = vmul.f32 %v3442, %v3475
        %v3479 = vmul.f32 %v3443, %v3475
        %v3480 = vmul.f32 %v3444, %v3475
        %v3481 = vmul.f32 %v3445, %v3475
        %v3482 = vmul.f32 %v3446, %v3475
        %v3483 = vmul.f32 %v3447, %v3475
        %v3484 = vmul.f32 %v3448, %v3475
        %v3485 = vmul.f32 %v3449, %v3475
        %v3486 = vmul.f32 %v3450, %v3475
        %v3487 = vmul.f32 %v3451, %v3475
        %v3488 = vmul.f32 %v3452, %v3475
        %v3489 = vmul.f32 %v3453, %v3475
        %v3490 = vmul.f32 %v3454, %v3475
        %v3491 = vmul.f32 %v3455, %v3475
        %v3492 = vmul.f32 %v3456, %v3475
        %v3493 = vmul.f32 %v3457, %v3475
        %v3494 = vmul.f32 %v3458, %v3475
        %v3495 = vmul.f32 %v3459, %v3475
        %v3496 = vmul.f32 %v3460, %v3475
        %v3497 = vmul.f32 %v3461, %v3475
        %v3498 = vmul.f32 %v3462, %v3475
        %v3499 = vmul.f32 %v3463, %v3475
        %v3500 = vmul.f32 %v3464, %v3475
        %v3501 = vmul.f32 %v3465, %v3475
        %v3502 = vmul.f32 %v3466, %v3475
        %v3503 = vmul.f32 %v3467, %v3475
        %v3504 = vmul.f32 %v3468, %v3475
        %v3505 = vmul.f32 %v3469, %v3475
        %v3506 = vmul.f32 %v3470, %v3475
        %v3507 = vmul.f32 %v3471, %v3475
        %v3508 = vlaneseq
        %v3509 = vshrl.u32 %v3508, 7
        %v3510 = vsub.s32 0, %v3509
        %v3511 = vrot.slane %v276, %v3510
        %v3512 = vadd.f32 %v3476, %v3511
        %v3513 = vadd.f32 %v3477, %v3511
        %v3514 = vadd.f32 %v3478, %v3511
        %v3515 = vadd.f32 %v3479, %v3511
        %v3516 = vadd.f32 %v3480, %v3511
        %v3517 = vadd.f32 %v3481, %v3511
        %v3518 = vadd.f32 %v3482, %v3511
        %v3519 = vadd.f32 %v3483, %v3511
        %v3520 = vadd.f32 %v3484, %v3511
        %v3521 = vadd.f32 %v3485, %v3511
        %v3522 = vadd.f32 %v3486, %v3511
        %v3523 = vadd.f32 %v3487, %v3511
        %v3524 = vadd.f32 %v3488, %v3511
        %v3525 = vadd.f32 %v3489, %v3511
        %v3526 = vadd.f32 %v3490, %v3511
        %v3527 = vadd.f32 %v3491, %v3511
        %v3528 = vadd.f32 %v3492, %v3511
        %v3529 = vadd.f32 %v3493, %v3511
        %v3530 = vadd.f32 %v3494, %v3511
        %v3531 = vadd.f32 %v3495, %v3511
        %v3532 = vadd.f32 %v3496, %v3511
        %v3533 = vadd.f32 %v3497, %v3511
        %v3534 = vadd.f32 %v3498, %v3511
        %v3535 = vadd.f32 %v3499, %v3511
        %v3536 = vadd.f32 %v3500, %v3511
        %v3537 = vadd.f32 %v3501, %v3511
        %v3538 = vadd.f32 %v3502, %v3511
        %v3539 = vadd.f32 %v3503, %v3511
        %v3540 = vadd.f32 %v3504, %v3511
        %v3541 = vadd.f32 %v3505, %v3511
        %v3542 = vadd.f32 %v3506, %v3511
        %v3543 = vadd.f32 %v3507, %v3511
        %v3544 = vadd.f32 %v3512, %v2811
        %v3545 = vadd.f32 %v3513, %v2812
        %v3546 = vadd.f32 %v3514, %v2813
        %v3547 = vadd.f32 %v3515, %v2814
        %v3548 = vadd.f32 %v3516, %v2815
        %v3549 = vadd.f32 %v3517, %v2816
        %v3550 = vadd.f32 %v3518, %v2817
        %v3551 = vadd.f32 %v3519, %v2818
        %v3552 = vadd.f32 %v3520, %v2819
        %v3553 = vadd.f32 %v3521, %v2820
        %v3554 = vadd.f32 %v3522, %v2821
        %v3555 = vadd.f32 %v3523, %v2822
        %v3556 = vadd.f32 %v3524, %v2823
        %v3557 = vadd.f32 %v3525, %v2824
        %v3558 = vadd.f32 %v3526, %v2825
        %v3559 = vadd.f32 %v3527, %v2826
        %v3560 = vadd.f32 %v3528, %v2827
        %v3561 = vadd.f32 %v3529, %v2828
        %v3562 = vadd.f32 %v3530, %v2829
        %v3563 = vadd.f32 %v3531, %v2830
        %v3564 = vadd.f32 %v3532, %v2831
        %v3565 = vadd.f32 %v3533, %v2832
        %v3566 = vadd.f32 %v3534, %v2833
        %v3567 = vadd.f32 %v3535, %v2834
        %v3568 = vadd.f32 %v3536, %v2835
        %v3569 = vadd.f32 %v3537, %v2836
        %v3570 = vadd.f32 %v3538, %v2837
        %v3571 = vadd.f32 %v3539, %v2838
        %v3572 = vadd.f32 %v3540, %v2839
        %v3573 = vadd.f32 %v3541, %v2840
        %v3574 = vadd.f32 %v3542, %v2841
        %v3575 = vadd.f32 %v3543, %v2842
        %3576 = vst [vmem:[%s260] sm:$0xff] %v3544
        %3577 = vst [vmem:[%s260 + $0x8] sm:$0xff] %v3545
        %3578 = vst [vmem:[%s260 + $0x10] sm:$0xff] %v3546
        %3579 = vst [vmem:[%s260 + $0x18] sm:$0xff] %v3547
        %3580 = vst [vmem:[%s260 + $0x20] sm:$0xff] %v3548
        %3581 = vst [vmem:[%s260 + $0x28] sm:$0xff] %v3549
        %3582 = vst [vmem:[%s260 + $0x30] sm:$0xff] %v3550
        %3583 = vst [vmem:[%s260 + $0x38] sm:$0xff] %v3551
        %3584 = vst [vmem:[%s260 + $0x40] sm:$0xff] %v3552
        %3585 = vst [vmem:[%s260 + $0x48] sm:$0xff] %v3553
        %3586 = vst [vmem:[%s260 + $0x50] sm:$0xff] %v3554
        %3587 = vst [vmem:[%s260 + $0x58] sm:$0xff] %v3555
        %3588 = vst [vmem:[%s260 + $0x60] sm:$0xff] %v3556
        %3589 = vst [vmem:[%s260 + $0x68] sm:$0xff] %v3557
        %3590 = vst [vmem:[%s260 + $0x70] sm:$0xff] %v3558
        %3591 = vst [vmem:[%s260 + $0x78] sm:$0xff] %v3559
        %3592 = vst [vmem:[%s260 + $0x80] sm:$0xff] %v3560
        %3593 = vst [vmem:[%s260 + $0x88] sm:$0xff] %v3561
        %3594 = vst [vmem:[%s260 + $0x90] sm:$0xff] %v3562
        %3595 = vst [vmem:[%s260 + $0x98] sm:$0xff] %v3563
        %3596 = vst [vmem:[%s260 + $0xa0] sm:$0xff] %v3564
        %3597 = vst [vmem:[%s260 + $0xa8] sm:$0xff] %v3565
        %3598 = vst [vmem:[%s260 + $0xb0] sm:$0xff] %v3566
        %3599 = vst [vmem:[%s260 + $0xb8] sm:$0xff] %v3567
        %3600 = vst [vmem:[%s260 + $0xc0] sm:$0xff] %v3568
        %3601 = vst [vmem:[%s260 + $0xc8] sm:$0xff] %v3569
        %3602 = vst [vmem:[%s260 + $0xd0] sm:$0xff] %v3570
        %3603 = vst [vmem:[%s260 + $0xd8] sm:$0xff] %v3571
        %3604 = vst [vmem:[%s260 + $0xe0] sm:$0xff] %v3572
        %3605 = vst [vmem:[%s260 + $0xe8] sm:$0xff] %v3573
        %3606 = vst [vmem:[%s260 + $0xf0] sm:$0xff] %v3574
        %3607 = vst [vmem:[%s260 + $0xf8] sm:$0xff] %v3575
        %s3608 = sand.u32 %s160, 1
        %s3609 = scalar_lea.sflag [#allocation4], %s3608
        %s3610 = sand.u32 %s160, 1
        %s3611 = smul.addr %s3610, 256
        %s3612 = scalar_lea.vmem [#allocation5], %s3611
        // Predicated region
        $region49: #{tpu_custom_call.1} parent=43 // pred_check
          %p3613 = pneg %p170
        $region50: #{tpu_custom_call.1} parent=43 // pred_check_branch
          %3615 = sbr.rel (%p3613) target = $region52
        $region51: #{tpu_custom_call.1} parent=43 // pred_region
          %s3616 = smul.u32 32, %s21
          %s3618 = ssub.s32 4096, 4096
          %3619 = vsyncadd %s3609, %s3618
          %s3620 = smul.addr %s3616, 128
          %s3621 = scalar_lea.hbm %s6, %s3620
          %s3622 = sshll.u32 %s3612, 4
          %s3623 = int_to_ptr.vmem [resolvable:$true] %s3622
          %3628 = dma.vmem_to_hbm [thread:$0]  %s3623, 4096, %s3621, %s3609, 128, 128, 8
        $region52: #{tpu_custom_call.1} parent=43 // pred_fallthru
          _
      $region44: #{tpu_custom_call.1} parent=5 // pred_fallthru
        _
      %p3629 = scmp.le.s32.totalorder 2, %s16
      // Predicated region
      $region53: #{tpu_custom_call.1} parent=5 // pred_check
        %p3630 = pneg %p3629
      $region54: #{tpu_custom_call.1} parent=5 // pred_check_branch
        %3632 = sbr.rel (%p3630) target = $region56
      $region55: #{tpu_custom_call.1} parent=5 // pred_region
        %s3633 = ssub.s32 %s16, 2
        // Predicated region
        $region57: #{tpu_custom_call.1} parent=55 // pred_check
          %p3634 = pneg %p176
        $region58: #{tpu_custom_call.1} parent=55 // pred_check_branch
          %3636 = sbr.rel (%p3634) target = $region60
        $region59: #{tpu_custom_call.1} parent=55 // pred_region
          %s3637 = sand.u32 %s161, 1
          %s3638 = scalar_lea.sflag [#allocation4], %s3637
          %s3639 = sand.u32 %s161, 1
          %s3640 = smul.addr %s3639, 256
          %s3641 = scalar_lea.vmem [#allocation5], %s3640
          %3642 = dma.done %s3638, 4096
        $region60: #{tpu_custom_call.1} parent=55 // pred_fallthru
          _
      $region56: #{tpu_custom_call.1} parent=5 // pred_fallthru
        _
    $region6: #{tpu_custom_call.1} parent=1 // loop_footer
      %s20 = sadd.s32 1, %s16
    $region7: #{tpu_custom_call.1} parent=1 // loop_footer_branch
      %15 = sbr.rel target = $region3
    $region8: #{tpu_custom_call.1} parent=1 // loop_exit
      _
    %3643 = vsyncpa [#allocation3], 1
    %s3644 = scalar_lea.sflag [#allocation3], 1
    %3645 = vsyncpa %s3644, 1
    %3646 = vsyncpa [#allocation4], 1
    %s3647 = scalar_lea.sflag [#allocation4], 1
    %3648 = vsyncpa %s3647, 1

</llo_original>
